<compile_context>
chip_gen: v7x
topology: tpu7x:2x2x1
jax: 0.10.0
libtpu: 0.0.40
codegen_flags: <defaults>
</compile_context>

<pallas_src>
import math
from functools import partial

import numpy as np
import jax
import jax.numpy as jnp
from jax.experimental import pallas as pl
from jax.experimental.pallas import tpu as pltpu

EPS = 1e-6          # TODO(synk): RMSNorm eps assumed 1e-6 (RMSNorm class body not shown).
_MASK_NEG = -1e30   # additive bias for masked condition tokens

# x:(M,K) . w:(OUT,K) -> (M,OUT); consumes torch (out_features, in_features) layout as-is.
_CONTRACT_LAST = (((1,), (1,)), ((), ()))


def _pick_tile(dim, pref, align):
    """Largest tile <= pref that divides dim and respects alignment, else the full dim."""
    if dim <= pref:
        return dim
    t = (pref // align) * align
    while t >= align:
        if dim % t == 0:
            return t
        t -= align
    # TODO(synk): non-divisible dims fall back to the full dim (correct but VMEM-heavy
    #             for awkward sequence lengths); ragged blocks would need in-kernel masks.
    return dim


def _compiler_params(semantics, need_bytes):
    # Scoped-VMEM request derived from double-buffered block sizes + scratch, clamped to
    # the 64 MiB physical budget of v7x (v5e/v6e default scoped limits are 16/32 MiB).
    limit = int(min(max(2 * int(need_bytes) + (2 << 20), 32 << 20), 64 << 20))
    return pltpu.CompilerParams(dimension_semantics=semantics, vmem_limit_bytes=limit)


def _erf(x):
    # Abramowitz & Stegun 7.1.26 rational approximation (|err| <= 1.5e-7); uses only ops
    # with guaranteed Mosaic lowering (exp / mul / add / where).
    a1, a2, a3, a4, a5 = 0.254829592, -0.284496736, 1.421413741, -1.453152027, 1.061405429
    p = 0.3275911
    z = jnp.abs(x)
    t = 1.0 / (1.0 + p * z)
    poly = ((((a5 * t + a4) * t + a3) * t + a2) * t + a1) * t
    y = 1.0 - poly * jnp.exp(-z * z)
    return jnp.where(x >= 0, y, -y)


def _gelu_exact(x):
    # nn.GELU() default (erf form). TODO(synk): erf via A&S polynomial (<=1.5e-7 error).
    return 0.5 * x * (1.0 + _erf(x * 0.7071067811865476))


# --------------------------- Pallas kernels ---------------------------------

def rmsnorm_proj_kernel(x_ref, g_ref, w_ref, o_ref, xn_sc):
    # Fused RMSNorm + Linear(bias=False).  Normalized rows are computed once per row
    # tile (j == 0), cached in VMEM, and reused across all output-feature tiles.
    @pl.when(pl.program_id(1) == 0)
    def _():
        x = x_ref[...]
        ms = jnp.mean(x * x, axis=-1, keepdims=True)
        xn_sc[...] = ((x * jax.lax.rsqrt(ms + EPS)) * g_ref[...]).astype(jnp.bfloat16)

    o_ref[...] = jax.lax.dot_general(
        xn_sc[...], w_ref[...], _CONTRACT_LAST,
        preferred_element_type=jnp.float32).astype(o_ref.dtype)


def proj_kernel(x_ref, w_ref, o_ref):
    # Linear, bias=False.  Activation cast to bf16 just before the MXU dot.
    o_ref[...] = jax.lax.dot_general(
        x_ref[...].astype(jnp.bfloat16), w_ref[...], _CONTRACT_LAST,
        preferred_element_type=jnp.float32).astype(o_ref.dtype)


def dense_residual_kernel(x_ref, w_ref, b_ref, res_ref, o_ref):
    # o = residual + x @ w^T + b  (dense output projection, residual add fused).
    y = jax.lax.dot_general(x_ref[...], w_ref[...], _CONTRACT_LAST,
                            preferred_element_type=jnp.float32)
    o_ref[...] = (res_ref[...] + y + b_ref[...]).astype(o_ref.dtype)


def mlp_residual_kernel(x_ref, g_ref, w0_ref, b0_ref, w1_ref, b1_ref,
                        w2_ref, b2_ref, res_ref, o_ref, xn_sc, acc_sc):
    # Fused RMSNorm + gated MLP, tiled over the hidden dim (grid axis 1, 'arbitrary')
    # with an f32 accumulator: o = residual + w2( gelu(w0 xn + b0) * (w1 xn + b1) ) + b2
    j = pl.program_id(1)

    @pl.when(j == 0)
    def _():
        x = x_ref[...]
        ms = jnp.mean(x * x, axis=-1, keepdims=True)
        xn_sc[...] = ((x * jax.lax.rsqrt(ms + EPS)) * g_ref[...]).astype(jnp.bfloat16)
        acc_sc[...] = jnp.zeros_like(acc_sc)

    xn = xn_sc[...]
    h0 = jax.lax.dot_general(xn, w0_ref[...], _CONTRACT_LAST,
                             preferred_element_type=jnp.float32) + b0_ref[...]
    h1 = jax.lax.dot_general(xn, w1_ref[...], _CONTRACT_LAST,
                             preferred_element_type=jnp.float32) + b1_ref[...]
    h = (_gelu_exact(h0) * h1).astype(jnp.bfloat16)     # elementwise in f32, bf16 only for MXU
    acc_sc[...] += jax.lax.dot_general(h, w2_ref[...], _CONTRACT_LAST,
                                       preferred_element_type=jnp.float32)

    @pl.when(j == pl.num_programs(1) - 1)
    def _():
        # TODO(synk): for very large C on v7x also tile the output C dim.
        o_ref[...] = (res_ref[...] + acc_sc[...] + b2_ref[...]).astype(o_ref.dtype)


def flash_attn_kernel(q_ref, k_ref, v_ref, kc_ref, vc_ref, bias_ref, o_ref,
                      m_sc, l_sc, acc_sc, *, num_heads, head_dim, scale,
                      k_off, v_off, vc_off):
    # Streaming (flash) attention over self K/V tiles (last grid axis, 'arbitrary').
    # The small condition K/V block and its (1, L) additive mask bias are folded in at
    # the final step, so the (B,S,C) K/V concat and (B,1,S) mask never touch HBM.
    # Scratch is lane-dense: acc (tq, C), m/l (tq, H); every scratch / output store is
    # a single dense store.  Output is written directly in (B, N, C) layout.
    s_idx = pl.program_id(2)
    hd = head_dim

    @pl.when(s_idx == 0)
    def _():
        m_sc[...] = jnp.full(m_sc.shape, -jnp.inf, m_sc.dtype)
        l_sc[...] = jnp.zeros(l_sc.shape, l_sc.dtype)
        acc_sc[...] = jnp.zeros(acc_sc.shape, acc_sc.dtype)

    q = q_ref[0]                      # (tq, C or 3C) bf16, q channels start at 0
    k = k_ref[0]                      # (tk, C or 3C) bf16
    v = v_ref[0]

    m_prev = m_sc[...]                # (tq, H)
    l_prev = l_sc[...]                # (tq, H)
    acc_prev = acc_sc[...]            # (tq, C)

    new_m, new_l, new_acc = [], [], []
    # TODO(synk): static per-head unroll (H=4 here).  For H >= 8 with lane-aligned
    #             head_dim (>=128) switch to lax.fori_loop over heads with dynamic
    #             pl.ds lane slices to bound live ranges.
    for h in range(num_heads):
        qs = q[:, h * hd:(h + 1) * hd]
        ks = k[:, k_off + h * hd:k_off + (h + 1) * hd]
        vs = v[:, v_off + h * hd:v_off + (h + 1) * hd]
        s = jax.lax.dot_general(qs, ks, _CONTRACT_LAST,
                                preferred_element_type=jnp.float32) * scale
        m_h = m_prev[:, h:h + 1]
        m_n = jnp.maximum(m_h, jnp.max(s, axis=-1, keepdims=True))
        alpha = jnp.exp(m_h - m_n)
        p = jnp.exp(s - m_n)                                   # (tq, tk) f32
        new_l.append(alpha * l_prev[:, h:h + 1] + jnp.sum(p, axis=-1, keepdims=True))
        new_acc.append(alpha * acc_prev[:, h * hd:(h + 1) * hd]
                       + jnp.dot(p.astype(jnp.bfloat16), vs,
                                 preferred_element_type=jnp.float32))
        new_m.append(m_n)

    m_sc[...] = jnp.concatenate(new_m, axis=-1)                # dense (tq, H) store
    l_sc[...] = jnp.concatenate(new_l, axis=-1)
    acc_sc[...] = jnp.concatenate(new_acc, axis=-1)            # dense (tq, C) store

    @pl.when(s_idx == pl.num_programs(2) - 1)
    def _():
        kc = kc_ref[0]                 # (L, C or 2C) bf16, kc channels start at 0
        vc = vc_ref[0]
        bias = bias_ref[0]             # (1, L) f32 additive mask bias
        valid = bias > jnp.float32(-1e29)   # guard: safe even for a fully-masked block
        m_all = m_sc[...]
        l_all = l_sc[...]
        acc_all = acc_sc[...]
        outs = []
        for h in range(num_heads):
            qs = q[:, h * hd:(h + 1) * hd]
            kcs = kc[:, h * hd:(h + 1) * hd]
            vcs = vc[:, vc_off + h * hd:vc_off + (h + 1) * hd]
            s_c = jax.lax.dot_general(qs, kcs, _CONTRACT_LAST,
                                      preferred_element_type=jnp.float32) * scale + bias
            m_h = m_all[:, h:h + 1]
            m_n = jnp.maximum(m_h, jnp.max(s_c, axis=-1, keepdims=True))
            alpha = jnp.exp(m_h - m_n)
            p_c = jnp.where(valid, jnp.exp(s_c - m_n), 0.0)    # (tq, L) f32
            l_n = alpha * l_all[:, h:h + 1] + jnp.sum(p_c, axis=-1, keepdims=True)
            acc_n = alpha * acc_all[:, h * hd:(h + 1) * hd] + jnp.dot(
                p_c.astype(jnp.bfloat16), vcs, preferred_element_type=jnp.float32)
            outs.append(acc_n * pl.reciprocal(l_n, approx=True))
        o_ref[0] = jnp.concatenate(outs, axis=-1).astype(o_ref.dtype)   # one dense store


# --------------------------- pallas_call wrappers -----------------------------

def rmsnorm_linear(x2d, g, w_bf16, *, out_dtype):
    M, C = x2d.shape
    OUT = w_bf16.shape[0]
    tm = _pick_tile(M, 256, 16)
    tn = _pick_tile(OUT, 512, 128)
    need = tm * C * 4 + C * 4 + tn * C * 2 + tm * tn * 4 + tm * C * 2
    return pl.pallas_call(
        rmsnorm_proj_kernel,
        out_shape=jax.ShapeDtypeStruct((M, OUT), out_dtype),
        grid=(M // tm, OUT // tn),
        in_specs=[
            pl.BlockSpec((tm, C), lambda i, j: (i, 0)),
            pl.BlockSpec((1, C), lambda i, j: (0, 0)),
            pl.BlockSpec((tn, C), lambda i, j: (j, 0)),
        ],
        out_specs=pl.BlockSpec((tm, tn), lambda i, j: (i, j)),
        scratch_shapes=[pltpu.VMEM((tm, C), jnp.bfloat16)],
        # j axis 'arbitrary' so the cached RMSNorm row tile is valid under megacore.
        compiler_params=_compiler_params(("parallel", "arbitrary"), need),
    )(x2d, g, w_bf16)


def linear_nobias(x2d, w_bf16, *, out_dtype):
    M, K = x2d.shape
    OUT = w_bf16.shape[0]
    tm = _pick_tile(M, 256, 16)
    tn = _pick_tile(OUT, 512, 128)
    need = tm * K * 4 + tn * K * 2 + tm * tn * 4
    return pl.pallas_call(
        proj_kernel,
        out_shape=jax.ShapeDtypeStruct((M, OUT), out_dtype),
        grid=(M // tm, OUT // tn),
        in_specs=[
            pl.BlockSpec((tm, K), lambda i, j: (i, 0)),
            pl.BlockSpec((tn, K), lambda i, j: (j, 0)),
        ],
        out_specs=pl.BlockSpec((tm, tn), lambda i, j: (i, j)),
        compiler_params=_compiler_params(("parallel", "parallel"), need),
    )(x2d, w_bf16)


def linear_bias_residual(x2d, w_bf16, b, res2d, *, out_dtype):
    M, K = x2d.shape
    OUT = w_bf16.shape[0]
    tm = _pick_tile(M, 256, 16)
    tn = _pick_tile(OUT, 512, 128)
    need = tm * K * 2 + tn * K * 2 + tn * 4 + 2 * tm * tn * 4
    # TODO(synk): could alias res2d to the output via input_output_aliases; skipped
    #             because the residual buffer is also consumed elsewhere in this graph.
    return pl.pallas_call(
        dense_residual_kernel,
        out_shape=jax.ShapeDtypeStruct((M, OUT), out_dtype),
        grid=(M // tm, OUT // tn),
        in_specs=[
            pl.BlockSpec((tm, K), lambda i, j: (i, 0)),
            pl.BlockSpec((tn, K), lambda i, j: (j, 0)),
            pl.BlockSpec((1, tn), lambda i, j: (0, j)),
            pl.BlockSpec((tm, tn), lambda i, j: (i, j)),
        ],
        out_specs=pl.BlockSpec((tm, tn), lambda i, j: (i, j)),
        compiler_params=_compiler_params(("parallel", "parallel"), need),
    )(x2d, w_bf16, b, res2d)


def mlp_residual(x2d, g, w0, b0, w1, b1, w2, b2, res2d, *, out_dtype):
    M, C = x2d.shape
    HID = w0.shape[0]
    tm = _pick_tile(M, 256, 16)
    th = _pick_tile(HID, 512, 128)
    need = (2 * tm * C * 4 + C * 4 + 2 * th * C * 2 + 2 * th * 4 + C * th * 2 + C * 4
            + tm * C * 4 + tm * C * 2 + tm * C * 4)
    ce = pl.CostEstimate(
        flops=int(6 * M * C * HID),
        transcendentals=int(M * HID),
        bytes_accessed=int(2 * M * C * 4 + M * C * 4 + 2 * HID * C * 2 + C * HID * 2))
    return pl.pallas_call(
        mlp_residual_kernel,
        out_shape=jax.ShapeDtypeStruct((M, C), out_dtype),
        grid=(M // tm, HID // th),
        in_specs=[
            pl.BlockSpec((tm, C), lambda i, j: (i, 0)),
            pl.BlockSpec((1, C), lambda i, j: (0, 0)),
            pl.BlockSpec((th, C), lambda i, j: (j, 0)),
            pl.BlockSpec((1, th), lambda i, j: (0, j)),
            pl.BlockSpec((th, C), lambda i, j: (j, 0)),
            pl.BlockSpec((1, th), lambda i, j: (0, j)),
            pl.BlockSpec((C, th), lambda i, j: (0, j)),
            pl.BlockSpec((1, C), lambda i, j: (0, 0)),
            pl.BlockSpec((tm, C), lambda i, j: (i, 0)),
        ],
        out_specs=pl.BlockSpec((tm, C), lambda i, j: (i, 0)),
        scratch_shapes=[pltpu.VMEM((tm, C), jnp.bfloat16),
                        pltpu.VMEM((tm, C), jnp.float32)],
        compiler_params=_compiler_params(("parallel", "arbitrary"), need),
        cost_estimate=ce,
    )(x2d, g, w0, b0, w1, b1, w2, b2, res2d)


def flash_attention(qkv, kcvc, cond_bias, *, num_heads, out_dtype):
    B, N, C3 = qkv.shape
    C = C3 // 3
    L = kcvc.shape[1]
    hd = C // num_heads
    scale = 1.0 / math.sqrt(hd)
    tq = _pick_tile(N, 256, 16)
    tk = _pick_tile(N, 512, 128)

    if C % 128 == 0:
        # Production path: exact channel-blocked views of qkv / kcvc (no extra reads).
        cw_qkv, cw_c = C, C
        k_blk, v_blk, vc_blk = 1, 2, 1
        k_off = v_off = vc_off = 0
    else:
        # Small-C fallback (lane width < 128): full-width channel blocks, static slices
        # in-kernel.  Still avoids any HBM slicing / concat copies.
        cw_qkv, cw_c = 3 * C, 2 * C
        k_blk, v_blk, vc_blk = 0, 0, 0
        k_off, v_off, vc_off = C, 2 * C, C

    S = N + L
    need = (tq * cw_qkv * 2 + 2 * tk * cw_qkv * 2 + 2 * L * cw_c * 2 + L * 4
            + tq * C * 2 + 2 * tq * num_heads * 4 + tq * C * 4)
    ce = pl.CostEstimate(
        flops=int(4 * B * N * S * C),
        transcendentals=int(B * num_heads * N * S),
        bytes_accessed=int(qkv.size * 2 + kcvc.size * 2 + cond_bias.size * 4 + B * N * C * 2))

    kernel = partial(flash_attn_kernel, num_heads=num_heads, head_dim=hd, scale=scale,
                     k_off=k_off, v_off=v_off, vc_off=vc_off)
    # TODO(synk): for tiny B on v7x, flatten B into the row-tile axis for better 2-TC balance.
    return pl.pallas_call(
        kernel,
        out_shape=jax.ShapeDtypeStruct((B, N, C), out_dtype),
        grid=(B, N // tq, N // tk),
        in_specs=[
            pl.BlockSpec((1, tq, cw_qkv), lambda b, i, s: (b, i, 0)),
            pl.BlockSpec((1, tk, cw_qkv), lambda b, i, s, kb=k_blk: (b, s, kb)),
            pl.BlockSpec((1, tk, cw_qkv), lambda b, i, s, vb=v_blk: (b, s, vb)),
            pl.BlockSpec((1, L, cw_c), lambda b, i, s: (b, 0, 0)),
            pl.BlockSpec((1, L, cw_c), lambda b, i, s, cb=vc_blk: (b, 0, cb)),
            pl.BlockSpec((1, 1, L), lambda b, i, s: (b, 0, 0)),
        ],
        out_specs=pl.BlockSpec((1, tq, C), lambda b, i, s: (b, i, 0)),
        scratch_shapes=[
            pltpu.VMEM((tq, num_heads), jnp.float32),   # running max m (lane-dense)
            pltpu.VMEM((tq, num_heads), jnp.float32),   # running sum l
            pltpu.VMEM((tq, C), jnp.float32),           # output accumulator (lane-dense)
        ],
        compiler_params=_compiler_params(("parallel", "parallel", "arbitrary"), need),
        cost_estimate=ce,
    )(qkv, qkv, qkv, kcvc, kcvc, cond_bias)


# --------------------------- module forward -----------------------------------

def prepare_params(params):
    """Cast matmul weights to bf16 once so no per-call weight casts happen under jit."""
    out = dict(params)
    for k in ('W_qkv', 'W_cond', 'W_dense', 'W0', 'W1', 'W2'):
        out[k] = params[k].astype(jnp.bfloat16)
    return out


def attention_residual_block(x, cond, cond_bias, p, *, num_heads):
    """x + SelfAttention(x, condition_embeds, condition_masks); dropout = identity."""
    B, N, C = x.shape
    L, Dc = cond.shape[1], cond.shape[2]

    # Fused RMSNorm + QKV projection; channel layout [q heads | k heads | v heads]
    # (head-major), consumed directly by the attention kernel (no permutes / slices).
    qkv = rmsnorm_linear(x.reshape(B * N, C), p['attn_norm_g'], p['W_qkv'],
                         out_dtype=jnp.bfloat16).reshape(B, N, 3 * C)
    # Condition key/value projection (bias=False), layout [kc heads | vc heads].
    kcvc = linear_nobias(cond.reshape(B * L, Dc), p['W_cond'],
                         out_dtype=jnp.bfloat16).reshape(B, L, 2 * C)

    attn = flash_attention(qkv, kcvc, cond_bias, num_heads=num_heads,
                           out_dtype=jnp.bfloat16)                       # (B, N, C)

    out = linear_bias_residual(attn.reshape(B * N, C), p['W_dense'],
                               p['b_dense'].reshape(1, C), x.reshape(B * N, C),
                               out_dtype=jnp.float32)
    return out.reshape(B, N, C)


def transformer_block_forward(x, cond, cond_mask, params, *, num_heads):
    # TODO(synk): nn.Dropout treated as identity (eval); torch.utils.checkpoint is a
    #             training-memory optimization and does not change forward math.
    B, N, C = x.shape
    L = cond.shape[1]
    # Only the (B,1,L) condition part of the mask is ever materialized (self tokens are
    # always unmasked); it is folded into the attention kernel as an additive bias.
    cond_bias = jnp.where(cond_mask, 0.0, _MASK_NEG).astype(jnp.float32).reshape(B, 1, L)

    h = attention_residual_block(x, cond, cond_bias, params, num_heads=num_heads)
    h2d = h.reshape(B * N, C)
    out = mlp_residual(h2d, params['mlp_norm_g'],
                       params['W0'], params['b0'].reshape(1, -1),
                       params['W1'], params['b1'].reshape(1, -1),
                       params['W2'], params['b2'].reshape(1, -1),
                       h2d, out_dtype=jnp.float32)
    return out.reshape(B, N, C)


# --------------------------- pure-JAX reference --------------------------------

def reference_transformer_block(x, cond, cond_mask, p, num_heads):
    B, N, C = x.shape
    H = num_heads
    hd = C // H
    L = cond.shape[1]

    def rms(v, g):
        ms = jnp.mean(v * v, axis=-1, keepdims=True)
        return v * jax.lax.rsqrt(ms + EPS) * g.reshape(-1)

    # SelfAttention
    qkv = rms(x, p['attn_norm_g']) @ p['W_qkv'].T
    qkv = qkv.reshape(B, N, 3 * H, hd).transpose(0, 2, 1, 3)
    q, k, v = qkv[:, :H], qkv[:, H:2 * H], qkv[:, 2 * H:]
    kcvc = (cond @ p['W_cond'].T).reshape(B, L, 2 * H, hd).transpose(0, 2, 1, 3)
    kc, vc = kcvc[:, :H], kcvc[:, H:]
    k = jnp.concatenate([k, kc], axis=2)
    v = jnp.concatenate([v, vc], axis=2)
    mask = jnp.concatenate([jnp.ones((B, N), dtype=bool), cond_mask], axis=-1)[:, None, None, :]
    s = jnp.einsum('bhnd,bhsd->bhns', q, k) / math.sqrt(hd)
    s = jnp.where(mask, s, -1e30)
    a = jax.nn.softmax(s, axis=-1)
    o = jnp.einsum('bhns,bhsd->bhnd', a, v).transpose(0, 2, 1, 3).reshape(B, N, C)
    h = x + (o @ p['W_dense'].T + p['b_dense'])

    # MLPBlock
    hn = rms(h, p['mlp_norm_g'])
    g0 = hn @ p['W0'].T + p['b0']
    g1 = hn @ p['W1'].T + p['b1']
    m = jax.nn.gelu(g0, approximate=False) * g1
    return h + (m @ p['W2'].T + p['b2'])


# --------------------------- main -----------------------------------------------

if __name__ == "__main__":
    B, N, C = 2, 8, 32      # batch, tokens, dim
    H = 4                   # num_attention_heads -> head_dim = 8
    L, Dc = 4, 16           # condition tokens, condition_dim
    HID = 64                # hidden_dim

    key = jax.random.PRNGKey(0)
    ks = jax.random.split(key, 13)

    x = jax.random.normal(ks[0], (B, N, C), jnp.float32)
    condition_embeds = jax.random.normal(ks[1], (B, L, Dc), jnp.float32)
    condition_masks = jax.random.bernoulli(ks[2], 0.7, (B, L))

    # torch Linear weights are (out_features, in_features); consumed directly (no .T).
    params = dict(
        attn_norm_g=jnp.ones((1, C), jnp.float32),
        W_qkv=0.02 * jax.random.normal(ks[3], (3 * C, C), jnp.float32),
        W_cond=0.02 * jax.random.normal(ks[4], (2 * C, Dc), jnp.float32),
        W_dense=0.02 * jax.random.normal(ks[5], (C, C), jnp.float32),
        b_dense=0.02 * jax.random.normal(ks[6], (C,), jnp.float32),
        mlp_norm_g=jnp.ones((1, C), jnp.float32),
        W0=0.02 * jax.random.normal(ks[7], (HID, C), jnp.float32),
        b0=0.02 * jax.random.normal(ks[8], (HID,), jnp.float32),
        W1=0.02 * jax.random.normal(ks[9], (HID, C), jnp.float32),
        b1=0.02 * jax.random.normal(ks[10], (HID,), jnp.float32),
        W2=0.02 * jax.random.normal(ks[11], (C, HID), jnp.float32),
        b2=0.02 * jax.random.normal(ks[12], (C,), jnp.float32),
    )

    # Weights cast to bf16 once (no per-forward casts / HBM weight copies).
    kernel_params = prepare_params(params)

    fwd = jax.jit(partial(transformer_block_forward, num_heads=H))
    out = jax.block_until_ready(fwd(x, condition_embeds, condition_masks, kernel_params))

    ref = reference_transformer_block(x, condition_embeds, condition_masks, params, H)
    # bf16 MXU inputs (f32 accumulation) + approx reciprocal => loosened tolerance.
    np.testing.assert_allclose(np.asarray(out), np.asarray(ref), atol=2e-2, rtol=2e-2)

    print("KERNEL_OK")
</pallas_src>

<mosaic_0001>
module attributes {stable_mosaic.version = 11 : i64} {
  func.func @proj_kernel(%arg0: i32, %arg1: i32, %arg2: memref<8x16xf32, #tpu.memory_space<vmem>>, %arg3: memref<64x16xbf16, #tpu.memory_space<vmem>>, %arg4: memref<8x64xbf16, #tpu.memory_space<vmem>>) attributes {dimension_semantics = [#tpu.dimension_semantics<parallel>, #tpu.dimension_semantics<parallel>], iteration_bounds = array<i64: 1, 1>, scalar_prefetch = 0 : i64, scratch_operands = 0 : i64, tpu.core_type = #tpu.core_type<tc>, window_params = [{transform_indices = @transform_0, window_bounds = array<i64: 8, 16>}, {transform_indices = @transform_1, window_bounds = array<i64: 64, 16>}, {transform_indices = @transform_2, window_bounds = array<i64: 8, 64>}]} {
    %c0 = arith.constant 0 : index
    %c0_0 = arith.constant 0 : index
    %0 = vector.load %arg2[%c0, %c0_0] : memref<8x16xf32, #tpu.memory_space<vmem>>, vector<8x16xf32>
    %1 = arith.truncf %0 : vector<8x16xf32> to vector<8x16xbf16>
    %c0_1 = arith.constant 0 : index
    %c0_2 = arith.constant 0 : index
    %2 = vector.load %arg3[%c0_1, %c0_2] : memref<64x16xbf16, #tpu.memory_space<vmem>>, vector<64x16xbf16>
    %cst = arith.constant dense<0.000000e+00> : vector<8x64xf32>
    %3 = tpu.matmul %1, %2, %cst {dimension_numbers = #tpu.dot_dimension_numbers<[1], [1], [0], [0], [0, 0, 1, 0], [], []>} : vector<8x16xbf16>, vector<64x16xbf16>, vector<8x64xf32> -> vector<8x64xf32>
    %4 = arith.truncf %3 : vector<8x64xf32> to vector<8x64xbf16>
    %c0_3 = arith.constant 0 : index
    %c0_4 = arith.constant 0 : index
    %5 = vector.load %arg4[%c0_3, %c0_4] : memref<8x64xbf16, #tpu.memory_space<vmem>>, vector<8x64xbf16>
    tpu.vector_store %arg4[%c0_3, %c0_4], %4 {strides = array<i32>} : memref<8x64xbf16, #tpu.memory_space<vmem>>, vector<8x64xbf16>,
    return
  }
  func.func @transform_0(%arg0: i32, %arg1: i32) -> (i32, i32) {
    %c0_i32 = arith.constant 0 : i32
    %c0_i32_0 = arith.constant 0 : i32
    return %arg0, %c0_i32 : i32, i32
  }
  func.func @transform_1(%arg0: i32, %arg1: i32) -> (i32, i32) {
    %c0_i32 = arith.constant 0 : i32
    %c0_i32_0 = arith.constant 0 : i32
    return %arg1, %c0_i32 : i32, i32
  }
  func.func @transform_2(%arg0: i32, %arg1: i32) -> (i32, i32) {
    %c0_i32 = arith.constant 0 : i32
    return %arg0, %arg1 : i32, i32
  }
}

module attributes {stable_mosaic.version = 11 : i64} {
  func.func @rmsnorm_proj_kernel(%arg0: i32, %arg1: i32, %arg2: memref<16x32xf32, #tpu.memory_space<vmem>>, %arg3: memref<1x32xf32, #tpu.memory_space<vmem>>, %arg4: memref<96x32xbf16, #tpu.memory_space<vmem>>, %arg5: memref<16x96xbf16, #tpu.memory_space<vmem>>, %arg6: memref<16x32xbf16, #tpu.memory_space<vmem>>) attributes {dimension_semantics = [#tpu.dimension_semantics<parallel>, #tpu.dimension_semantics<arbitrary>], iteration_bounds = array<i64: 1, 1>, scalar_prefetch = 0 : i64, scratch_operands = 1 : i64, tpu.core_type = #tpu.core_type<tc>, window_params = [{transform_indices = @transform_0, window_bounds = array<i64: 16, 32>}, {pipeline_mode = #tpu.pipeline_mode<synchronous>, transform_indices = @transform_1, window_bounds = array<i64: 1, 32>}, {transform_indices = @transform_2, window_bounds = array<i64: 96, 32>}, {transform_indices = @transform_3, window_bounds = array<i64: 16, 96>}]} {
    %c0_i32 = arith.constant 0 : i32
    %0 = arith.cmpi eq, %arg1, %c0_i32 : i32
    %1 = arith.extui %0 : i1 to i32
    %c0_i32_0 = arith.constant 0 : i32
    %2 = arith.cmpi ne, %1, %c0_i32_0 : i32
    scf.if %2 {
      %c0_6 = arith.constant 0 : index
      %c0_7 = arith.constant 0 : index
      %8 = vector.load %arg2[%c0_6, %c0_7] : memref<16x32xf32, #tpu.memory_space<vmem>>, vector<16x32xf32>
      %9 = arith.mulf %8, %8 : vector<16x32xf32>
      %cst_8 = arith.constant dense<0.000000e+00> : vector<16xf32>
      %10 = vector.multi_reduction <add>, %9, %cst_8 [1] : vector<16x32xf32> to vector<16xf32>
      %11 = vector.shape_cast %10 : vector<16xf32> to vector<16x1xf32>
      %cst_9 = arith.constant 3.200000e+01 : f32
      %12 = vector.broadcast %cst_9 : f32 to vector<16x1xf32>
      %13 = arith.divf %11, %12 : vector<16x1xf32>
      %cst_10 = arith.constant 9.99999997E-7 : f32
      %14 = vector.broadcast %cst_10 : f32 to vector<16x1xf32>
      %15 = arith.addf %13, %14 : vector<16x1xf32>
      %16 = math.rsqrt %15 : vector<16x1xf32>
      %17 = vector.broadcast %16 : vector<16x1xf32> to vector<16x32xf32>
      %18 = arith.mulf %8, %17 : vector<16x32xf32>
      %c0_11 = arith.constant 0 : index
      %c0_12 = arith.constant 0 : index
      %19 = vector.load %arg3[%c0_11, %c0_12] : memref<1x32xf32, #tpu.memory_space<vmem>>, vector<1x32xf32>
      %20 = vector.broadcast %19 : vector<1x32xf32> to vector<16x32xf32>
      %21 = arith.mulf %18, %20 : vector<16x32xf32>
      %22 = arith.truncf %21 : vector<16x32xf32> to vector<16x32xbf16>
      %c0_13 = arith.constant 0 : index
      %c0_14 = arith.constant 0 : index
      %23 = vector.load %arg6[%c0_13, %c0_14] : memref<16x32xbf16, #tpu.memory_space<vmem>>, vector<16x32xbf16>
      tpu.vector_store %arg6[%c0_13, %c0_14], %22 {strides = array<i32>} : memref<16x32xbf16, #tpu.memory_space<vmem>>, vector<16x32xbf16>,
    } else {
    }
    %c0 = arith.constant 0 : index
    %c0_1 = arith.constant 0 : index
    %3 = vector.load %arg6[%c0, %c0_1] : memref<16x32xbf16, #tpu.memory_space<vmem>>, vector<16x32xbf16>
    %c0_2 = arith.constant 0 : index
    %c0_3 = arith.constant 0 : index
    %4 = vector.load %arg4[%c0_2, %c0_3] : memref<96x32xbf16, #tpu.memory_space<vmem>>, vector<96x32xbf16>
    %cst = arith.constant dense<0.000000e+00> : vector<16x96xf32>
    %5 = tpu.matmul %3, %4, %cst {dimension_numbers = #tpu.dot_dimension_numbers<[1], [1], [0], [0], [0, 0, 1, 0], [], []>} : vector<16x32xbf16>, vector<96x32xbf16>, vector<16x96xf32> -> vector<16x96xf32>
    %6 = arith.truncf %5 : vector<16x96xf32> to vector<16x96xbf16>
    %c0_4 = arith.constant 0 : index
    %c0_5 = arith.constant 0 : index
    %7 = vector.load %arg5[%c0_4, %c0_5] : memref<16x96xbf16, #tpu.memory_space<vmem>>, vector<16x96xbf16>
    tpu.vector_store %arg5[%c0_4, %c0_5], %6 {strides = array<i32>} : memref<16x96xbf16, #tpu.memory_space<vmem>>, vector<16x96xbf16>,
    return
  }
  func.func @transform_0(%arg0: i32, %arg1: i32) -> (i32, i32) {
    %c0_i32 = arith.constant 0 : i32
    %c0_i32_0 = arith.constant 0 : i32
    return %arg0, %c0_i32 : i32, i32
  }
  func.func @transform_1(%arg0: i32, %arg1: i32) -> (i32, i32) {
    %c0_i32 = arith.constant 0 : i32
    %c0_i32_0 = arith.constant 0 : i32
    %c0_i32_1 = arith.constant 0 : i32
    return %c0_i32, %c0_i32_0 : i32, i32
  }
  func.func @transform_2(%arg0: i32, %arg1: i32) -> (i32, i32) {
    %c0_i32 = arith.constant 0 : i32
    %c0_i32_0 = arith.constant 0 : i32
    return %arg1, %c0_i32 : i32, i32
  }
  func.func @transform_3(%arg0: i32, %arg1: i32) -> (i32, i32) {
    %c0_i32 = arith.constant 0 : i32
    return %arg0, %arg1 : i32, i32
  }
}

module attributes {stable_mosaic.version = 11 : i64} {
  func.func @dense_residual_kernel(%arg0: i32, %arg1: i32, %arg2: memref<16x32xbf16, #tpu.memory_space<vmem>>, %arg3: memref<32x32xbf16, #tpu.memory_space<vmem>>, %arg4: memref<1x32xf32, #tpu.memory_space<vmem>>, %arg5: memref<16x32xf32, #tpu.memory_space<vmem>>, %arg6: memref<16x32xf32, #tpu.memory_space<vmem>>) attributes {dimension_semantics = [#tpu.dimension_semantics<parallel>, #tpu.dimension_semantics<parallel>], iteration_bounds = array<i64: 1, 1>, scalar_prefetch = 0 : i64, scratch_operands = 0 : i64, tpu.core_type = #tpu.core_type<tc>, window_params = [{transform_indices = @transform_0, window_bounds = array<i64: 16, 32>}, {transform_indices = @transform_1, window_bounds = array<i64: 32, 32>}, {transform_indices = @transform_2, window_bounds = array<i64: 1, 32>}, {transform_indices = @transform_3, window_bounds = array<i64: 16, 32>}, {transform_indices = @transform_4, window_bounds = array<i64: 16, 32>}]} {
    %c0 = arith.constant 0 : index
    %c0_0 = arith.constant 0 : index
    %0 = vector.load %arg2[%c0, %c0_0] : memref<16x32xbf16, #tpu.memory_space<vmem>>, vector<16x32xbf16>
    %c0_1 = arith.constant 0 : index
    %c0_2 = arith.constant 0 : index
    %1 = vector.load %arg3[%c0_1, %c0_2] : memref<32x32xbf16, #tpu.memory_space<vmem>>, vector<32x32xbf16>
    %cst = arith.constant dense<0.000000e+00> : vector<16x32xf32>
    %2 = tpu.matmul %0, %1, %cst {dimension_numbers = #tpu.dot_dimension_numbers<[1], [1], [0], [0], [0, 0, 1, 0], [], []>} : vector<16x32xbf16>, vector<32x32xbf16>, vector<16x32xf32> -> vector<16x32xf32>
    %c0_3 = arith.constant 0 : index
    %c0_4 = arith.constant 0 : index
    %3 = vector.load %arg5[%c0_3, %c0_4] : memref<16x32xf32, #tpu.memory_space<vmem>>, vector<16x32xf32>
    %4 = arith.addf %3, %2 : vector<16x32xf32>
    %c0_5 = arith.constant 0 : index
    %c0_6 = arith.constant 0 : index
    %5 = vector.load %arg4[%c0_5, %c0_6] : memref<1x32xf32, #tpu.memory_space<vmem>>, vector<1x32xf32>
    %6 = vector.broadcast %5 : vector<1x32xf32> to vector<16x32xf32>
    %7 = arith.addf %4, %6 : vector<16x32xf32>
    %c0_7 = arith.constant 0 : index
    %c0_8 = arith.constant 0 : index
    %8 = vector.load %arg6[%c0_7, %c0_8] : memref<16x32xf32, #tpu.memory_space<vmem>>, vector<16x32xf32>
    tpu.vector_store %arg6[%c0_7, %c0_8], %7 {strides = array<i32>} : memref<16x32xf32, #tpu.memory_space<vmem>>, vector<16x32xf32>,
    return
  }
  func.func @transform_0(%arg0: i32, %arg1: i32) -> (i32, i32) {
    %c0_i32 = arith.constant 0 : i32
    %c0_i32_0 = arith.constant 0 : i32
    return %arg0, %c0_i32 : i32, i32
  }
  func.func @transform_1(%arg0: i32, %arg1: i32) -> (i32, i32) {
    %c0_i32 = arith.constant 0 : i32
    %c0_i32_0 = arith.constant 0 : i32
    return %arg1, %c0_i32 : i32, i32
  }
  func.func @transform_2(%arg0: i32, %arg1: i32) -> (i32, i32) {
    %c0_i32 = arith.constant 0 : i32
    %c0_i32_0 = arith.constant 0 : i32
    return %c0_i32, %arg1 : i32, i32
  }
  func.func @transform_3(%arg0: i32, %arg1: i32) -> (i32, i32) {
    %c0_i32 = arith.constant 0 : i32
    return %arg0, %arg1 : i32, i32
  }
  func.func @transform_4(%arg0: i32, %arg1: i32) -> (i32, i32) {
    %c0_i32 = arith.constant 0 : i32
    return %arg0, %arg1 : i32, i32
  }
}

module attributes {stable_mosaic.version = 11 : i64} {
  func.func @flash_attn_kernel(%arg0: i32, %arg1: i32, %arg2: i32, %arg3: memref<1x8x96xbf16, #tpu.memory_space<vmem>>, %arg4: memref<1x8x96xbf16, #tpu.memory_space<vmem>>, %arg5: memref<1x8x96xbf16, #tpu.memory_space<vmem>>, %arg6: memref<1x4x64xbf16, #tpu.memory_space<vmem>>, %arg7: memref<1x4x64xbf16, #tpu.memory_space<vmem>>, %arg8: memref<1x1x4xf32, #tpu.memory_space<vmem>>, %arg9: memref<1x8x32xbf16, #tpu.memory_space<vmem>>, %arg10: memref<8x4xf32, #tpu.memory_space<vmem>>, %arg11: memref<8x4xf32, #tpu.memory_space<vmem>>, %arg12: memref<8x32xf32, #tpu.memory_space<vmem>>) attributes {dimension_semantics = [#tpu.dimension_semantics<parallel>, #tpu.dimension_semantics<parallel>, #tpu.dimension_semantics<arbitrary>], iteration_bounds = array<i64: 2, 1, 1>, scalar_prefetch = 0 : i64, scratch_operands = 3 : i64, tpu.core_type = #tpu.core_type<tc>, window_params = [{transform_indices = @transform_0, window_bounds = array<i64: 1, 8, 96>}, {transform_indices = @transform_1, window_bounds = array<i64: 1, 8, 96>}, {transform_indices = @transform_2, window_bounds = array<i64: 1, 8, 96>}, {transform_indices = @transform_3, window_bounds = array<i64: 1, 4, 64>}, {transform_indices = @transform_4, window_bounds = array<i64: 1, 4, 64>}, {transform_indices = @transform_5, window_bounds = array<i64: 1, 1, 4>}, {transform_indices = @transform_6, window_bounds = array<i64: 1, 8, 32>}]} {
    %c0_i32 = arith.constant 0 : i32
    %0 = arith.cmpi eq, %arg2, %c0_i32 : i32
    %1 = arith.extui %0 : i1 to i32
    %c0_i32_0 = arith.constant 0 : i32
    %2 = arith.cmpi ne, %1, %c0_i32_0 : i32
    scf.if %2 {
      %cst_42 = arith.constant 0xFF800000 : f32
      %125 = vector.broadcast %cst_42 : f32 to vector<8x4xf32>
      %c0_43 = arith.constant 0 : index
      %c0_44 = arith.constant 0 : index
      %126 = vector.load %arg10[%c0_43, %c0_44] : memref<8x4xf32, #tpu.memory_space<vmem>>, vector<8x4xf32>
      tpu.vector_store %arg10[%c0_43, %c0_44], %125 {strides = array<i32>} : memref<8x4xf32, #tpu.memory_space<vmem>>, vector<8x4xf32>,
      %cst_45 = arith.constant 0.000000e+00 : f32
      %127 = vector.broadcast %cst_45 : f32 to vector<8x4xf32>
      %c0_46 = arith.constant 0 : index
      %c0_47 = arith.constant 0 : index
      %128 = vector.load %arg11[%c0_46, %c0_47] : memref<8x4xf32, #tpu.memory_space<vmem>>, vector<8x4xf32>
      tpu.vector_store %arg11[%c0_46, %c0_47], %127 {strides = array<i32>} : memref<8x4xf32, #tpu.memory_space<vmem>>, vector<8x4xf32>,
      %cst_48 = arith.constant 0.000000e+00 : f32
      %129 = vector.broadcast %cst_48 : f32 to vector<8x32xf32>
      %c0_49 = arith.constant 0 : index
      %c0_50 = arith.constant 0 : index
      %130 = vector.load %arg12[%c0_49, %c0_50] : memref<8x32xf32, #tpu.memory_space<vmem>>, vector<8x32xf32>
      tpu.vector_store %arg12[%c0_49, %c0_50], %129 {strides = array<i32>} : memref<8x32xf32, #tpu.memory_space<vmem>>, vector<8x32xf32>,
    } else {
    }
    %c0 = arith.constant 0 : index
    %c0_1 = arith.constant 0 : index
    %c0_2 = arith.constant 0 : index
    %3 = vector.load %arg3[%c0, %c0_1, %c0_2] : memref<1x8x96xbf16, #tpu.memory_space<vmem>>, vector<1x8x96xbf16>
    %4 = vector.shape_cast %3 : vector<1x8x96xbf16> to vector<8x96xbf16>
    %c0_3 = arith.constant 0 : index
    %c0_4 = arith.constant 0 : index
    %c0_5 = arith.constant 0 : index
    %5 = vector.load %arg4[%c0_3, %c0_4, %c0_5] : memref<1x8x96xbf16, #tpu.memory_space<vmem>>, vector<1x8x96xbf16>
    %6 = vector.shape_cast %5 : vector<1x8x96xbf16> to vector<8x96xbf16>
    %c0_6 = arith.constant 0 : index
    %c0_7 = arith.constant 0 : index
    %c0_8 = arith.constant 0 : index
    %7 = vector.load %arg5[%c0_6, %c0_7, %c0_8] : memref<1x8x96xbf16, #tpu.memory_space<vmem>>, vector<1x8x96xbf16>
    %8 = vector.shape_cast %7 : vector<1x8x96xbf16> to vector<8x96xbf16>
    %c0_9 = arith.constant 0 : index
    %c0_10 = arith.constant 0 : index
    %9 = vector.load %arg10[%c0_9, %c0_10] : memref<8x4xf32, #tpu.memory_space<vmem>>, vector<8x4xf32>
    %c0_11 = arith.constant 0 : index
    %c0_12 = arith.constant 0 : index
    %10 = vector.load %arg11[%c0_11, %c0_12] : memref<8x4xf32, #tpu.memory_space<vmem>>, vector<8x4xf32>
    %c0_13 = arith.constant 0 : index
    %c0_14 = arith.constant 0 : index
    %11 = vector.load %arg12[%c0_13, %c0_14] : memref<8x32xf32, #tpu.memory_space<vmem>>, vector<8x32xf32>
    %12 = vector.extract_strided_slice %4 {offsets = [0, 0], sizes = [8, 8], strides = [1, 1]} : vector<8x96xbf16> to vector<8x8xbf16>
    %13 = vector.extract_strided_slice %6 {offsets = [0, 32], sizes = [8, 8], strides = [1, 1]} : vector<8x96xbf16> to vector<8x8xbf16>
    %14 = vector.extract_strided_slice %8 {offsets = [0, 64], sizes = [8, 8], strides = [1, 1]} : vector<8x96xbf16> to vector<8x8xbf16>
    %cst = arith.constant dense<0.000000e+00> : vector<8x8xf32>
    %15 = tpu.matmul %12, %13, %cst {dimension_numbers = #tpu.dot_dimension_numbers<[1], [1], [0], [0], [0, 0, 1, 0], [], []>} : vector<8x8xbf16>, vector<8x8xbf16>, vector<8x8xf32> -> vector<8x8xf32>
    %cst_15 = arith.constant 0.353553385 : f32
    %16 = vector.broadcast %cst_15 : f32 to vector<8x8xf32>
    %17 = arith.mulf %15, %16 : vector<8x8xf32>
    %18 = vector.extract_strided_slice %9 {offsets = [0, 0], sizes = [8, 1], strides = [1, 1]} : vector<8x4xf32> to vector<8x1xf32>
    %cst_16 = arith.constant dense<0xFF800000> : vector<8xf32>
    %19 = vector.multi_reduction <maximumf>, %17, %cst_16 [1] : vector<8x8xf32> to vector<8xf32>
    %20 = vector.shape_cast %19 : vector<8xf32> to vector<8x1xf32>
    %21 = arith.maximumf %18, %20 : vector<8x1xf32>
    %22 = arith.subf %18, %21 : vector<8x1xf32>
    %23 = math.exp %22 : vector<8x1xf32>
    %24 = vector.broadcast %21 : vector<8x1xf32> to vector<8x8xf32>
    %25 = arith.subf %17, %24 : vector<8x8xf32>
    %26 = math.exp %25 : vector<8x8xf32>
    %27 = vector.extract_strided_slice %10 {offsets = [0, 0], sizes = [8, 1], strides = [1, 1]} : vector<8x4xf32> to vector<8x1xf32>
    %28 = arith.mulf %23, %27 : vector<8x1xf32>
    %cst_17 = arith.constant dense<0.000000e+00> : vector<8xf32>
    %29 = vector.multi_reduction <add>, %26, %cst_17 [1] : vector<8x8xf32> to vector<8xf32>
    %30 = vector.shape_cast %29 : vector<8xf32> to vector<8x1xf32>
    %31 = arith.addf %28, %30 : vector<8x1xf32>
    %32 = vector.extract_strided_slice %11 {offsets = [0, 0], sizes = [8, 8], strides = [1, 1]} : vector<8x32xf32> to vector<8x8xf32>
    %33 = vector.broadcast %23 : vector<8x1xf32> to vector<8x8xf32>
    %34 = arith.mulf %33, %32 : vector<8x8xf32>
    %35 = arith.truncf %26 : vector<8x8xf32> to vector<8x8xbf16>
    %cst_18 = arith.constant dense<0.000000e+00> : vector<8x8xf32>
    %36 = tpu.matmul %35, %14, %cst_18 {dimension_numbers = #tpu.dot_dimension_numbers<[1], [0], [0], [1], [0, 0, 1, 1], [], []>} : vector<8x8xbf16>, vector<8x8xbf16>, vector<8x8xf32> -> vector<8x8xf32>
    %37 = arith.addf %34, %36 : vector<8x8xf32>
    %38 = vector.extract_strided_slice %4 {offsets = [0, 8], sizes = [8, 8], strides = [1, 1]} : vector<8x96xbf16> to vector<8x8xbf16>
    %39 = vector.extract_strided_slice %6 {offsets = [0, 40], sizes = [8, 8], strides = [1, 1]} : vector<8x96xbf16> to vector<8x8xbf16>
    %40 = vector.extract_strided_slice %8 {offsets = [0, 72], sizes = [8, 8], strides = [1, 1]} : vector<8x96xbf16> to vector<8x8xbf16>
    %cst_19 = arith.constant dense<0.000000e+00> : vector<8x8xf32>
    %41 = tpu.matmul %38, %39, %cst_19 {dimension_numbers = #tpu.dot_dimension_numbers<[1], [1], [0], [0], [0, 0, 1, 0], [], []>} : vector<8x8xbf16>, vector<8x8xbf16>, vector<8x8xf32> -> vector<8x8xf32>
    %cst_20 = arith.constant 0.353553385 : f32
    %42 = vector.broadcast %cst_20 : f32 to vector<8x8xf32>
    %43 = arith.mulf %41, %42 : vector<8x8xf32>
    %44 = vector.extract_strided_slice %9 {offsets = [0, 1], sizes = [8, 1], strides = [1, 1]} : vector<8x4xf32> to vector<8x1xf32>
    %cst_21 = arith.constant dense<0xFF800000> : vector<8xf32>
    %45 = vector.multi_reduction <maximumf>, %43, %cst_21 [1] : vector<8x8xf32> to vector<8xf32>
    %46 = vector.shape_cast %45 : vector<8xf32> to vector<8x1xf32>
    %47 = arith.maximumf %44, %46 : vector<8x1xf32>
    %48 = arith.subf %44, %47 : vector<8x1xf32>
    %49 = math.exp %48 : vector<8x1xf32>
    %50 = vector.broadcast %47 : vector<8x1xf32> to vector<8x8xf32>
    %51 = arith.subf %43, %50 : vector<8x8xf32>
    %52 = math.exp %51 : vector<8x8xf32>
    %53 = vector.extract_strided_slice %10 {offsets = [0, 1], sizes = [8, 1], strides = [1, 1]} : vector<8x4xf32> to vector<8x1xf32>
    %54 = arith.mulf %49, %53 : vector<8x1xf32>
    %cst_22 = arith.constant dense<0.000000e+00> : vector<8xf32>
    %55 = vector.multi_reduction <add>, %52, %cst_22 [1] : vector<8x8xf32> to vector<8xf32>
    %56 = vector.shape_cast %55 : vector<8xf32> to vector<8x1xf32>
    %57 = arith.addf %54, %56 : vector<8x1xf32>
    %58 = vector.extract_strided_slice %11 {offsets = [0, 8], sizes = [8, 8], strides = [1, 1]} : vector<8x32xf32> to vector<8x8xf32>
    %59 = vector.broadcast %49 : vector<8x1xf32> to vector<8x8xf32>
    %60 = arith.mulf %59, %58 : vector<8x8xf32>
    %61 = arith.truncf %52 : vector<8x8xf32> to vector<8x8xbf16>
    %cst_23 = arith.constant dense<0.000000e+00> : vector<8x8xf32>
    %62 = tpu.matmul %61, %40, %cst_23 {dimension_numbers = #tpu.dot_dimension_numbers<[1], [0], [0], [1], [0, 0, 1, 1], [], []>} : vector<8x8xbf16>, vector<8x8xbf16>, vector<8x8xf32> -> vector<8x8xf32>
    %63 = arith.addf %60, %62 : vector<8x8xf32>
    %64 = vector.extract_strided_slice %4 {offsets = [0, 16], sizes = [8, 8], strides = [1, 1]} : vector<8x96xbf16> to vector<8x8xbf16>
    %65 = vector.extract_strided_slice %6 {offsets = [0, 48], sizes = [8, 8], strides = [1, 1]} : vector<8x96xbf16> to vector<8x8xbf16>
    %66 = vector.extract_strided_slice %8 {offsets = [0, 80], sizes = [8, 8], strides = [1, 1]} : vector<8x96xbf16> to vector<8x8xbf16>
    %cst_24 = arith.constant dense<0.000000e+00> : vector<8x8xf32>
    %67 = tpu.matmul %64, %65, %cst_24 {dimension_numbers = #tpu.dot_dimension_numbers<[1], [1], [0], [0], [0, 0, 1, 0], [], []>} : vector<8x8xbf16>, vector<8x8xbf16>, vector<8x8xf32> -> vector<8x8xf32>
    %cst_25 = arith.constant 0.353553385 : f32
    %68 = vector.broadcast %cst_25 : f32 to vector<8x8xf32>
    %69 = arith.mulf %67, %68 : vector<8x8xf32>
    %70 = vector.extract_strided_slice %9 {offsets = [0, 2], sizes = [8, 1], strides = [1, 1]} : vector<8x4xf32> to vector<8x1xf32>
    %cst_26 = arith.constant dense<0xFF800000> : vector<8xf32>
    %71 = vector.multi_reduction <maximumf>, %69, %cst_26 [1] : vector<8x8xf32> to vector<8xf32>
    %72 = vector.shape_cast %71 : vector<8xf32> to vector<8x1xf32>
    %73 = arith.maximumf %70, %72 : vector<8x1xf32>
    %74 = arith.subf %70, %73 : vector<8x1xf32>
    %75 = math.exp %74 : vector<8x1xf32>
    %76 = vector.broadcast %73 : vector<8x1xf32> to vector<8x8xf32>
    %77 = arith.subf %69, %76 : vector<8x8xf32>
    %78 = math.exp %77 : vector<8x8xf32>
    %79 = vector.extract_strided_slice %10 {offsets = [0, 2], sizes = [8, 1], strides = [1, 1]} : vector<8x4xf32> to vector<8x1xf32>
    %80 = arith.mulf %75, %79 : vector<8x1xf32>
    %cst_27 = arith.constant dense<0.000000e+00> : vector<8xf32>
    %81 = vector.multi_reduction <add>, %78, %cst_27 [1] : vector<8x8xf32> to vector<8xf32>
    %82 = vector.shape_cast %81 : vector<8xf32> to vector<8x1xf32>
    %83 = arith.addf %80, %82 : vector<8x1xf32>
    %84 = vector.extract_strided_slice %11 {offsets = [0, 16], sizes = [8, 8], strides = [1, 1]} : vector<8x32xf32> to vector<8x8xf32>
    %85 = vector.broadcast %75 : vector<8x1xf32> to vector<8x8xf32>
    %86 = arith.mulf %85, %84 : vector<8x8xf32>
    %87 = arith.truncf %78 : vector<8x8xf32> to vector<8x8xbf16>
    %cst_28 = arith.constant dense<0.000000e+00> : vector<8x8xf32>
    %88 = tpu.matmul %87, %66, %cst_28 {dimension_numbers = #tpu.dot_dimension_numbers<[1], [0], [0], [1], [0, 0, 1, 1], [], []>} : vector<8x8xbf16>, vector<8x8xbf16>, vector<8x8xf32> -> vector<8x8xf32>
    %89 = arith.addf %86, %88 : vector<8x8xf32>
    %90 = vector.extract_strided_slice %4 {offsets = [0, 24], sizes = [8, 8], strides = [1, 1]} : vector<8x96xbf16> to vector<8x8xbf16>
    %91 = vector.extract_strided_slice %6 {offsets = [0, 56], sizes = [8, 8], strides = [1, 1]} : vector<8x96xbf16> to vector<8x8xbf16>
    %92 = vector.extract_strided_slice %8 {offsets = [0, 88], sizes = [8, 8], strides = [1, 1]} : vector<8x96xbf16> to vector<8x8xbf16>
    %cst_29 = arith.constant dense<0.000000e+00> : vector<8x8xf32>
    %93 = tpu.matmul %90, %91, %cst_29 {dimension_numbers = #tpu.dot_dimension_numbers<[1], [1], [0], [0], [0, 0, 1, 0], [], []>} : vector<8x8xbf16>, vector<8x8xbf16>, vector<8x8xf32> -> vector<8x8xf32>
    %cst_30 = arith.constant 0.353553385 : f32
    %94 = vector.broadcast %cst_30 : f32 to vector<8x8xf32>
    %95 = arith.mulf %93, %94 : vector<8x8xf32>
    %96 = vector.extract_strided_slice %9 {offsets = [0, 3], sizes = [8, 1], strides = [1, 1]} : vector<8x4xf32> to vector<8x1xf32>
    %cst_31 = arith.constant dense<0xFF800000> : vector<8xf32>
    %97 = vector.multi_reduction <maximumf>, %95, %cst_31 [1] : vector<8x8xf32> to vector<8xf32>
    %98 = vector.shape_cast %97 : vector<8xf32> to vector<8x1xf32>
    %99 = arith.maximumf %96, %98 : vector<8x1xf32>
    %100 = arith.subf %96, %99 : vector<8x1xf32>
    %101 = math.exp %100 : vector<8x1xf32>
    %102 = vector.broadcast %99 : vector<8x1xf32> to vector<8x8xf32>
    %103 = arith.subf %95, %102 : vector<8x8xf32>
    %104 = math.exp %103 : vector<8x8xf32>
    %105 = vector.extract_strided_slice %10 {offsets = [0, 3], sizes = [8, 1], strides = [1, 1]} : vector<8x4xf32> to vector<8x1xf32>
    %106 = arith.mulf %101, %105 : vector<8x1xf32>
    %cst_32 = arith.constant dense<0.000000e+00> : vector<8xf32>
    %107 = vector.multi_reduction <add>, %104, %cst_32 [1] : vector<8x8xf32> to vector<8xf32>
    %108 = vector.shape_cast %107 : vector<8xf32> to vector<8x1xf32>
    %109 = arith.addf %106, %108 : vector<8x1xf32>
    %110 = vector.extract_strided_slice %11 {offsets = [0, 24], sizes = [8, 8], strides = [1, 1]} : vector<8x32xf32> to vector<8x8xf32>
    %111 = vector.broadcast %101 : vector<8x1xf32> to vector<8x8xf32>
    %112 = arith.mulf %111, %110 : vector<8x8xf32>
    %113 = arith.truncf %104 : vector<8x8xf32> to vector<8x8xbf16>
    %cst_33 = arith.constant dense<0.000000e+00> : vector<8x8xf32>
    %114 = tpu.matmul %113, %92, %cst_33 {dimension_numbers = #tpu.dot_dimension_numbers<[1], [0], [0], [1], [0, 0, 1, 1], [], []>} : vector<8x8xbf16>, vector<8x8xbf16>, vector<8x8xf32> -> vector<8x8xf32>
    %115 = arith.addf %112, %114 : vector<8x8xf32>
    %116 = tpu.concatenate %21, %47, %73, %99 in 1 : vector<8x1xf32>, vector<8x1xf32>, vector<8x1xf32>, vector<8x1xf32> -> vector<8x4xf32>
    %c0_34 = arith.constant 0 : index
    %c0_35 = arith.constant 0 : index
    %117 = vector.load %arg10[%c0_34, %c0_35] : memref<8x4xf32, #tpu.memory_space<vmem>>, vector<8x4xf32>
    tpu.vector_store %arg10[%c0_34, %c0_35], %116 {strides = array<i32>} : memref<8x4xf32, #tpu.memory_space<vmem>>, vector<8x4xf32>,
    %118 = tpu.concatenate %31, %57, %83, %109 in 1 : vector<8x1xf32>, vector<8x1xf32>, vector<8x1xf32>, vector<8x1xf32> -> vector<8x4xf32>
    %c0_36 = arith.constant 0 : index
    %c0_37 = arith.constant 0 : index
    %119 = vector.load %arg11[%c0_36, %c0_37] : memref<8x4xf32, #tpu.memory_space<vmem>>, vector<8x4xf32>
    tpu.vector_store %arg11[%c0_36, %c0_37], %118 {strides = array<i32>} : memref<8x4xf32, #tpu.memory_space<vmem>>, vector<8x4xf32>,
    %120 = tpu.concatenate %37, %63, %89, %115 in 1 : vector<8x8xf32>, vector<8x8xf32>, vector<8x8xf32>, vector<8x8xf32> -> vector<8x32xf32>
    %c0_38 = arith.constant 0 : index
    %c0_39 = arith.constant 0 : index
    %121 = vector.load %arg12[%c0_38, %c0_39] : memref<8x32xf32, #tpu.memory_space<vmem>>, vector<8x32xf32>
    tpu.vector_store %arg12[%c0_38, %c0_39], %120 {strides = array<i32>} : memref<8x32xf32, #tpu.memory_space<vmem>>, vector<8x32xf32>,
    %c0_i32_40 = arith.constant 0 : i32
    %122 = arith.cmpi eq, %arg2, %c0_i32_40 : i32
    %123 = arith.extui %122 : i1 to i32
    %c0_i32_41 = arith.constant 0 : i32
    %124 = arith.cmpi ne, %123, %c0_i32_41 : i32
    scf.if %124 {
      %c0_42 = arith.constant 0 : index
      %c0_43 = arith.constant 0 : index
      %c0_44 = arith.constant 0 : index
      %125 = vector.load %arg6[%c0_42, %c0_43, %c0_44] : memref<1x4x64xbf16, #tpu.memory_space<vmem>>, vector<1x4x64xbf16>
      %126 = vector.shape_cast %125 : vector<1x4x64xbf16> to vector<4x64xbf16>
      %c0_45 = arith.constant 0 : index
      %c0_46 = arith.constant 0 : index
      %c0_47 = arith.constant 0 : index
      %127 = vector.load %arg7[%c0_45, %c0_46, %c0_47] : memref<1x4x64xbf16, #tpu.memory_space<vmem>>, vector<1x4x64xbf16>
      %128 = vector.shape_cast %127 : vector<1x4x64xbf16> to vector<4x64xbf16>
      %c0_48 = arith.constant 0 : index
      %c0_49 = arith.constant 0 : index
      %c0_50 = arith.constant 0 : index
      %129 = vector.load %arg8[%c0_48, %c0_49, %c0_50] : memref<1x1x4xf32, #tpu.memory_space<vmem>>, vector<1x1x4xf32>
      %130 = vector.shape_cast %129 : vector<1x1x4xf32> to vector<1x4xf32>
      %cst_51 = arith.constant -1.000000e+29 : f32
      %131 = vector.broadcast %cst_51 : f32 to vector<1x4xf32>
      %132 = arith.cmpf ogt, %130, %131 : vector<1x4xf32>
      %c0_52 = arith.constant 0 : index
      %c0_53 = arith.constant 0 : index
      %133 = vector.load %arg10[%c0_52, %c0_53] : memref<8x4xf32, #tpu.memory_space<vmem>>, vector<8x4xf32>
      %c0_54 = arith.constant 0 : index
      %c0_55 = arith.constant 0 : index
      %134 = vector.load %arg11[%c0_54, %c0_55] : memref<8x4xf32, #tpu.memory_space<vmem>>, vector<8x4xf32>
      %c0_56 = arith.constant 0 : index
      %c0_57 = arith.constant 0 : index
      %135 = vector.load %arg12[%c0_56, %c0_57] : memref<8x32xf32, #tpu.memory_space<vmem>>, vector<8x32xf32>
      %136 = vector.extract_strided_slice %4 {offsets = [0, 0], sizes = [8, 8], strides = [1, 1]} : vector<8x96xbf16> to vector<8x8xbf16>
      %137 = vector.extract_strided_slice %126 {offsets = [0, 0], sizes = [4, 8], strides = [1, 1]} : vector<4x64xbf16> to vector<4x8xbf16>
      %138 = vector.extract_strided_slice %128 {offsets = [0, 32], sizes = [4, 8], strides = [1, 1]} : vector<4x64xbf16> to vector<4x8xbf16>
      %cst_58 = arith.constant dense<0.000000e+00> : vector<8x4xf32>
      %139 = tpu.matmul %136, %137, %cst_58 {dimension_numbers = #tpu.dot_dimension_numbers<[1], [1], [0], [0], [0, 0, 1, 0], [], []>} : vector<8x8xbf16>, vector<4x8xbf16>, vector<8x4xf32> -> vector<8x4xf32>
      %cst_59 = arith.constant 0.353553385 : f32
      %140 = vector.broadcast %cst_59 : f32 to vector<8x4xf32>
      %141 = arith.mulf %139, %140 : vector<8x4xf32>
      %142 = vector.broadcast %130 : vector<1x4xf32> to vector<8x4xf32>
      %143 = arith.addf %141, %142 : vector<8x4xf32>
      %144 = vector.extract_strided_slice %133 {offsets = [0, 0], sizes = [8, 1], strides = [1, 1]} : vector<8x4xf32> to vector<8x1xf32>
      %cst_60 = arith.constant dense<0xFF800000> : vector<8xf32>
      %145 = vector.multi_reduction <maximumf>, %143, %cst_60 [1] : vector<8x4xf32> to vector<8xf32>
      %146 = vector.shape_cast %145 : vector<8xf32> to vector<8x1xf32>
      %147 = arith.maximumf %144, %146 : vector<8x1xf32>
      %148 = arith.subf %144, %147 : vector<8x1xf32>
      %149 = math.exp %148 : vector<8x1xf32>
      %150 = vector.broadcast %147 : vector<8x1xf32> to vector<8x4xf32>
      %151 = arith.subf %143, %150 : vector<8x4xf32>
      %152 = math.exp %151 : vector<8x4xf32>
      %cst_61 = arith.constant 0.000000e+00 : f32
      %153 = vector.shape_cast %132 : vector<1x4xi1> to vector<1x4xi1>
      %154 = vector.broadcast %153 : vector<1x4xi1> to vector<8x4xi1>
      %155 = vector.broadcast %cst_61 : f32 to vector<8x4xf32>
      %156 = arith.select %154, %152, %155 : vector<8x4xi1>, vector<8x4xf32>
      %157 = vector.extract_strided_slice %134 {offsets = [0, 0], sizes = [8, 1], strides = [1, 1]} : vector<8x4xf32> to vector<8x1xf32>
      %158 = arith.mulf %149, %157 : vector<8x1xf32>
      %cst_62 = arith.constant dense<0.000000e+00> : vector<8xf32>
      %159 = vector.multi_reduction <add>, %156, %cst_62 [1] : vector<8x4xf32> to vector<8xf32>
      %160 = vector.shape_cast %159 : vector<8xf32> to vector<8x1xf32>
      %161 = arith.addf %158, %160 : vector<8x1xf32>
      %162 = vector.extract_strided_slice %135 {offsets = [0, 0], sizes = [8, 8], strides = [1, 1]} : vector<8x32xf32> to vector<8x8xf32>
      %163 = vector.broadcast %149 : vector<8x1xf32> to vector<8x8xf32>
      %164 = arith.mulf %163, %162 : vector<8x8xf32>
      %165 = arith.truncf %156 : vector<8x4xf32> to vector<8x4xbf16>
      %cst_63 = arith.constant dense<0.000000e+00> : vector<8x8xf32>
      %166 = tpu.matmul %165, %138, %cst_63 {dimension_numbers = #tpu.dot_dimension_numbers<[1], [0], [0], [1], [0, 0, 1, 1], [], []>} : vector<8x4xbf16>, vector<4x8xbf16>, vector<8x8xf32> -> vector<8x8xf32>
      %167 = arith.addf %164, %166 : vector<8x8xf32>
      %168 = tpu.reciprocal %161 {approx = true} : vector<8x1xf32> -> vector<8x1xf32>
      %169 = vector.broadcast %168 : vector<8x1xf32> to vector<8x8xf32>
      %170 = arith.mulf %167, %169 : vector<8x8xf32>
      %171 = vector.extract_strided_slice %4 {offsets = [0, 8], sizes = [8, 8], strides = [1, 1]} : vector<8x96xbf16> to vector<8x8xbf16>
      %172 = vector.extract_strided_slice %126 {offsets = [0, 8], sizes = [4, 8], strides = [1, 1]} : vector<4x64xbf16> to vector<4x8xbf16>
      %173 = vector.extract_strided_slice %128 {offsets = [0, 40], sizes = [4, 8], strides = [1, 1]} : vector<4x64xbf16> to vector<4x8xbf16>
      %cst_64 = arith.constant dense<0.000000e+00> : vector<8x4xf32>
      %174 = tpu.matmul %171, %172, %cst_64 {dimension_numbers = #tpu.dot_dimension_numbers<[1], [1], [0], [0], [0, 0, 1, 0], [], []>} : vector<8x8xbf16>, vector<4x8xbf16>, vector<8x4xf32> -> vector<8x4xf32>
      %cst_65 = arith.constant 0.353553385 : f32
      %175 = vector.broadcast %cst_65 : f32 to vector<8x4xf32>
      %176 = arith.mulf %174, %175 : vector<8x4xf32>
      %177 = vector.broadcast %130 : vector<1x4xf32> to vector<8x4xf32>
      %178 = arith.addf %176, %177 : vector<8x4xf32>
      %179 = vector.extract_strided_slice %133 {offsets = [0, 1], sizes = [8, 1], strides = [1, 1]} : vector<8x4xf32> to vector<8x1xf32>
      %cst_66 = arith.constant dense<0xFF800000> : vector<8xf32>
      %180 = vector.multi_reduction <maximumf>, %178, %cst_66 [1] : vector<8x4xf32> to vector<8xf32>
      %181 = vector.shape_cast %180 : vector<8xf32> to vector<8x1xf32>
      %182 = arith.maximumf %179, %181 : vector<8x1xf32>
      %183 = arith.subf %179, %182 : vector<8x1xf32>
      %184 = math.exp %183 : vector<8x1xf32>
      %185 = vector.broadcast %182 : vector<8x1xf32> to vector<8x4xf32>
      %186 = arith.subf %178, %185 : vector<8x4xf32>
      %187 = math.exp %186 : vector<8x4xf32>
      %cst_67 = arith.constant 0.000000e+00 : f32
      %188 = vector.shape_cast %132 : vector<1x4xi1> to vector<1x4xi1>
      %189 = vector.broadcast %188 : vector<1x4xi1> to vector<8x4xi1>
      %190 = vector.broadcast %cst_67 : f32 to vector<8x4xf32>
      %191 = arith.select %189, %187, %190 : vector<8x4xi1>, vector<8x4xf32>
      %192 = vector.extract_strided_slice %134 {offsets = [0, 1], sizes = [8, 1], strides = [1, 1]} : vector<8x4xf32> to vector<8x1xf32>
      %193 = arith.mulf %184, %192 : vector<8x1xf32>
      %cst_68 = arith.constant dense<0.000000e+00> : vector<8xf32>
      %194 = vector.multi_reduction <add>, %191, %cst_68 [1] : vector<8x4xf32> to vector<8xf32>
      %195 = vector.shape_cast %194 : vector<8xf32> to vector<8x1xf32>
      %196 = arith.addf %193, %195 : vector<8x1xf32>
      %197 = vector.extract_strided_slice %135 {offsets = [0, 8], sizes = [8, 8], strides = [1, 1]} : vector<8x32xf32> to vector<8x8xf32>
      %198 = vector.broadcast %184 : vector<8x1xf32> to vector<8x8xf32>
      %199 = arith.mulf %198, %197 : vector<8x8xf32>
      %200 = arith.truncf %191 : vector<8x4xf32> to vector<8x4xbf16>
      %cst_69 = arith.constant dense<0.000000e+00> : vector<8x8xf32>
      %201 = tpu.matmul %200, %173, %cst_69 {dimension_numbers = #tpu.dot_dimension_numbers<[1], [0], [0], [1], [0, 0, 1, 1], [], []>} : vector<8x4xbf16>, vector<4x8xbf16>, vector<8x8xf32> -> vector<8x8xf32>
      %202 = arith.addf %199, %201 : vector<8x8xf32>
      %203 = tpu.reciprocal %196 {approx = true} : vector<8x1xf32> -> vector<8x1xf32>
      %204 = vector.broadcast %203 : vector<8x1xf32> to vector<8x8xf32>
      %205 = arith.mulf %202, %204 : vector<8x8xf32>
      %206 = vector.extract_strided_slice %4 {offsets = [0, 16], sizes = [8, 8], strides = [1, 1]} : vector<8x96xbf16> to vector<8x8xbf16>
      %207 = vector.extract_strided_slice %126 {offsets = [0, 16], sizes = [4, 8], strides = [1, 1]} : vector<4x64xbf16> to vector<4x8xbf16>
      %208 = vector.extract_strided_slice %128 {offsets = [0, 48], sizes = [4, 8], strides = [1, 1]} : vector<4x64xbf16> to vector<4x8xbf16>
      %cst_70 = arith.constant dense<0.000000e+00> : vector<8x4xf32>
      %209 = tpu.matmul %206, %207, %cst_70 {dimension_numbers = #tpu.dot_dimension_numbers<[1], [1], [0], [0], [0, 0, 1, 0], [], []>} : vector<8x8xbf16>, vector<4x8xbf16>, vector<8x4xf32> -> vector<8x4xf32>
      %cst_71 = arith.constant 0.353553385 : f32
      %210 = vector.broadcast %cst_71 : f32 to vector<8x4xf32>
      %211 = arith.mulf %209, %210 : vector<8x4xf32>
      %212 = vector.broadcast %130 : vector<1x4xf32> to vector<8x4xf32>
      %213 = arith.addf %211, %212 : vector<8x4xf32>
      %214 = vector.extract_strided_slice %133 {offsets = [0, 2], sizes = [8, 1], strides = [1, 1]} : vector<8x4xf32> to vector<8x1xf32>
      %cst_72 = arith.constant dense<0xFF800000> : vector<8xf32>
      %215 = vector.multi_reduction <maximumf>, %213, %cst_72 [1] : vector<8x4xf32> to vector<8xf32>
      %216 = vector.shape_cast %215 : vector<8xf32> to vector<8x1xf32>
      %217 = arith.maximumf %214, %216 : vector<8x1xf32>
      %218 = arith.subf %214, %217 : vector<8x1xf32>
      %219 = math.exp %218 : vector<8x1xf32>
      %220 = vector.broadcast %217 : vector<8x1xf32> to vector<8x4xf32>
      %221 = arith.subf %213, %220 : vector<8x4xf32>
      %222 = math.exp %221 : vector<8x4xf32>
      %cst_73 = arith.constant 0.000000e+00 : f32
      %223 = vector.shape_cast %132 : vector<1x4xi1> to vector<1x4xi1>
      %224 = vector.broadcast %223 : vector<1x4xi1> to vector<8x4xi1>
      %225 = vector.broadcast %cst_73 : f32 to vector<8x4xf32>
      %226 = arith.select %224, %222, %225 : vector<8x4xi1>, vector<8x4xf32>
      %227 = vector.extract_strided_slice %134 {offsets = [0, 2], sizes = [8, 1], strides = [1, 1]} : vector<8x4xf32> to vector<8x1xf32>
      %228 = arith.mulf %219, %227 : vector<8x1xf32>
      %cst_74 = arith.constant dense<0.000000e+00> : vector<8xf32>
      %229 = vector.multi_reduction <add>, %226, %cst_74 [1] : vector<8x4xf32> to vector<8xf32>
      %230 = vector.shape_cast %229 : vector<8xf32> to vector<8x1xf32>
      %231 = arith.addf %228, %230 : vector<8x1xf32>
      %232 = vector.extract_strided_slice %135 {offsets = [0, 16], sizes = [8, 8], strides = [1, 1]} : vector<8x32xf32> to vector<8x8xf32>
      %233 = vector.broadcast %219 : vector<8x1xf32> to vector<8x8xf32>
      %234 = arith.mulf %233, %232 : vector<8x8xf32>
      %235 = arith.truncf %226 : vector<8x4xf32> to vector<8x4xbf16>
      %cst_75 = arith.constant dense<0.000000e+00> : vector<8x8xf32>
      %236 = tpu.matmul %235, %208, %cst_75 {dimension_numbers = #tpu.dot_dimension_numbers<[1], [0], [0], [1], [0, 0, 1, 1], [], []>} : vector<8x4xbf16>, vector<4x8xbf16>, vector<8x8xf32> -> vector<8x8xf32>
      %237 = arith.addf %234, %236 : vector<8x8xf32>
      %238 = tpu.reciprocal %231 {approx = true} : vector<8x1xf32> -> vector<8x1xf32>
      %239 = vector.broadcast %238 : vector<8x1xf32> to vector<8x8xf32>
      %240 = arith.mulf %237, %239 : vector<8x8xf32>
      %241 = vector.extract_strided_slice %4 {offsets = [0, 24], sizes = [8, 8], strides = [1, 1]} : vector<8x96xbf16> to vector<8x8xbf16>
      %242 = vector.extract_strided_slice %126 {offsets = [0, 24], sizes = [4, 8], strides = [1, 1]} : vector<4x64xbf16> to vector<4x8xbf16>
      %243 = vector.extract_strided_slice %128 {offsets = [0, 56], sizes = [4, 8], strides = [1, 1]} : vector<4x64xbf16> to vector<4x8xbf16>
      %cst_76 = arith.constant dense<0.000000e+00> : vector<8x4xf32>
      %244 = tpu.matmul %241, %242, %cst_76 {dimension_numbers = #tpu.dot_dimension_numbers<[1], [1], [0], [0], [0, 0, 1, 0], [], []>} : vector<8x8xbf16>, vector<4x8xbf16>, vector<8x4xf32> -> vector<8x4xf32>
      %cst_77 = arith.constant 0.353553385 : f32
      %245 = vector.broadcast %cst_77 : f32 to vector<8x4xf32>
      %246 = arith.mulf %244, %245 : vector<8x4xf32>
      %247 = vector.broadcast %130 : vector<1x4xf32> to vector<8x4xf32>
      %248 = arith.addf %246, %247 : vector<8x4xf32>
      %249 = vector.extract_strided_slice %133 {offsets = [0, 3], sizes = [8, 1], strides = [1, 1]} : vector<8x4xf32> to vector<8x1xf32>
      %cst_78 = arith.constant dense<0xFF800000> : vector<8xf32>
      %250 = vector.multi_reduction <maximumf>, %248, %cst_78 [1] : vector<8x4xf32> to vector<8xf32>
      %251 = vector.shape_cast %250 : vector<8xf32> to vector<8x1xf32>
      %252 = arith.maximumf %249, %251 : vector<8x1xf32>
      %253 = arith.subf %249, %252 : vector<8x1xf32>
      %254 = math.exp %253 : vector<8x1xf32>
      %255 = vector.broadcast %252 : vector<8x1xf32> to vector<8x4xf32>
      %256 = arith.subf %248, %255 : vector<8x4xf32>
      %257 = math.exp %256 : vector<8x4xf32>
      %cst_79 = arith.constant 0.000000e+00 : f32
      %258 = vector.shape_cast %132 : vector<1x4xi1> to vector<1x4xi1>
      %259 = vector.broadcast %258 : vector<1x4xi1> to vector<8x4xi1>
      %260 = vector.broadcast %cst_79 : f32 to vector<8x4xf32>
      %261 = arith.select %259, %257, %260 : vector<8x4xi1>, vector<8x4xf32>
      %262 = vector.extract_strided_slice %134 {offsets = [0, 3], sizes = [8, 1], strides = [1, 1]} : vector<8x4xf32> to vector<8x1xf32>
      %263 = arith.mulf %254, %262 : vector<8x1xf32>
      %cst_80 = arith.constant dense<0.000000e+00> : vector<8xf32>
      %264 = vector.multi_reduction <add>, %261, %cst_80 [1] : vector<8x4xf32> to vector<8xf32>
      %265 = vector.shape_cast %264 : vector<8xf32> to vector<8x1xf32>
      %266 = arith.addf %263, %265 : vector<8x1xf32>
      %267 = vector.extract_strided_slice %135 {offsets = [0, 24], sizes = [8, 8], strides = [1, 1]} : vector<8x32xf32> to vector<8x8xf32>
      %268 = vector.broadcast %254 : vector<8x1xf32> to vector<8x8xf32>
      %269 = arith.mulf %268, %267 : vector<8x8xf32>
      %270 = arith.truncf %261 : vector<8x4xf32> to vector<8x4xbf16>
      %cst_81 = arith.constant dense<0.000000e+00> : vector<8x8xf32>
      %271 = tpu.matmul %270, %243, %cst_81 {dimension_numbers = #tpu.dot_dimension_numbers<[1], [0], [0], [1], [0, 0, 1, 1], [], []>} : vector<8x4xbf16>, vector<4x8xbf16>, vector<8x8xf32> -> vector<8x8xf32>
      %272 = arith.addf %269, %271 : vector<8x8xf32>
      %273 = tpu.reciprocal %266 {approx = true} : vector<8x1xf32> -> vector<8x1xf32>
      %274 = vector.broadcast %273 : vector<8x1xf32> to vector<8x8xf32>
      %275 = arith.mulf %272, %274 : vector<8x8xf32>
      %276 = tpu.concatenate %170, %205, %240, %275 in 1 : vector<8x8xf32>, vector<8x8xf32>, vector<8x8xf32>, vector<8x8xf32> -> vector<8x32xf32>
      %277 = arith.truncf %276 : vector<8x32xf32> to vector<8x32xbf16>
      %c0_82 = arith.constant 0 : index
      %c0_83 = arith.constant 0 : index
      %c0_84 = arith.constant 0 : index
      %278 = vector.load %arg9[%c0_82, %c0_83, %c0_84] : memref<1x8x32xbf16, #tpu.memory_space<vmem>>, vector<1x8x32xbf16>
      %279 = vector.shape_cast %278 : vector<1x8x32xbf16> to vector<8x32xbf16>
      %280 = vector.shape_cast %277 : vector<8x32xbf16> to vector<1x8x32xbf16>
      tpu.vector_store %arg9[%c0_82, %c0_83, %c0_84], %280 {strides = array<i32>} : memref<1x8x32xbf16, #tpu.memory_space<vmem>>, vector<1x8x32xbf16>,
    } else {
    }
    return
  }
  func.func @transform_0(%arg0: i32, %arg1: i32, %arg2: i32) -> (i32, i32, i32) {
    %c0_i32 = arith.constant 0 : i32
    %c0_i32_0 = arith.constant 0 : i32
    return %arg0, %arg1, %c0_i32 : i32, i32, i32
  }
  func.func @transform_1(%arg0: i32, %arg1: i32, %arg2: i32) -> (i32, i32, i32) {
    %c0_i32 = arith.constant 0 : i32
    %c0_i32_0 = arith.constant 0 : i32
    return %arg0, %arg2, %c0_i32 : i32, i32, i32
  }
  func.func @transform_2(%arg0: i32, %arg1: i32, %arg2: i32) -> (i32, i32, i32) {
    %c0_i32 = arith.constant 0 : i32
    %c0_i32_0 = arith.constant 0 : i32
    return %arg0, %arg2, %c0_i32 : i32, i32, i32
  }
  func.func @transform_3(%arg0: i32, %arg1: i32, %arg2: i32) -> (i32, i32, i32) {
    %c0_i32 = arith.constant 0 : i32
    %c0_i32_0 = arith.constant 0 : i32
    %c0_i32_1 = arith.constant 0 : i32
    return %arg0, %c0_i32, %c0_i32_0 : i32, i32, i32
  }
  func.func @transform_4(%arg0: i32, %arg1: i32, %arg2: i32) -> (i32, i32, i32) {
    %c0_i32 = arith.constant 0 : i32
    %c0_i32_0 = arith.constant 0 : i32
    %c0_i32_1 = arith.constant 0 : i32
    return %arg0, %c0_i32, %c0_i32_0 : i32, i32, i32
  }
  func.func @transform_5(%arg0: i32, %arg1: i32, %arg2: i32) -> (i32, i32, i32) {
    %c0_i32 = arith.constant 0 : i32
    %c0_i32_0 = arith.constant 0 : i32
    %c0_i32_1 = arith.constant 0 : i32
    return %arg0, %c0_i32, %c0_i32_0 : i32, i32, i32
  }
  func.func @transform_6(%arg0: i32, %arg1: i32, %arg2: i32) -> (i32, i32, i32) {
    %c0_i32 = arith.constant 0 : i32
    %c0_i32_0 = arith.constant 0 : i32
    return %arg0, %arg1, %c0_i32 : i32, i32, i32
  }
}

module attributes {stable_mosaic.version = 11 : i64} {
  func.func @mlp_residual_kernel(%arg0: i32, %arg1: i32, %arg2: memref<16x32xf32, #tpu.memory_space<vmem>>, %arg3: memref<1x32xf32, #tpu.memory_space<vmem>>, %arg4: memref<64x32xbf16, #tpu.memory_space<vmem>>, %arg5: memref<1x64xf32, #tpu.memory_space<vmem>>, %arg6: memref<64x32xbf16, #tpu.memory_space<vmem>>, %arg7: memref<1x64xf32, #tpu.memory_space<vmem>>, %arg8: memref<32x64xbf16, #tpu.memory_space<vmem>>, %arg9: memref<1x32xf32, #tpu.memory_space<vmem>>, %arg10: memref<16x32xf32, #tpu.memory_space<vmem>>, %arg11: memref<16x32xf32, #tpu.memory_space<vmem>>, %arg12: memref<16x32xbf16, #tpu.memory_space<vmem>>, %arg13: memref<16x32xf32, #tpu.memory_space<vmem>>) attributes {dimension_semantics = [#tpu.dimension_semantics<parallel>, #tpu.dimension_semantics<arbitrary>], iteration_bounds = array<i64: 1, 1>, scalar_prefetch = 0 : i64, scratch_operands = 2 : i64, tpu.core_type = #tpu.core_type<tc>, window_params = [{transform_indices = @transform_0, window_bounds = array<i64: 16, 32>}, {pipeline_mode = #tpu.pipeline_mode<synchronous>, transform_indices = @transform_1, window_bounds = array<i64: 1, 32>}, {transform_indices = @transform_2, window_bounds = array<i64: 64, 32>}, {transform_indices = @transform_3, window_bounds = array<i64: 1, 64>}, {transform_indices = @transform_4, window_bounds = array<i64: 64, 32>}, {transform_indices = @transform_5, window_bounds = array<i64: 1, 64>}, {transform_indices = @transform_6, window_bounds = array<i64: 32, 64>}, {pipeline_mode = #tpu.pipeline_mode<synchronous>, transform_indices = @transform_7, window_bounds = array<i64: 1, 32>}, {transform_indices = @transform_8, window_bounds = array<i64: 16, 32>}, {transform_indices = @transform_9, window_bounds = array<i64: 16, 32>}]} {
    %c0_i32 = arith.constant 0 : i32
    %0 = arith.cmpi eq, %arg1, %c0_i32 : i32
    %1 = arith.extui %0 : i1 to i32
    %c0_i32_0 = arith.constant 0 : i32
    %2 = arith.cmpi ne, %1, %c0_i32_0 : i32
    scf.if %2 {
      %c0_35 = arith.constant 0 : index
      %c0_36 = arith.constant 0 : index
      %64 = vector.load %arg2[%c0_35, %c0_36] : memref<16x32xf32, #tpu.memory_space<vmem>>, vector<16x32xf32>
      %65 = arith.mulf %64, %64 : vector<16x32xf32>
      %cst_37 = arith.constant dense<0.000000e+00> : vector<16xf32>
      %66 = vector.multi_reduction <add>, %65, %cst_37 [1] : vector<16x32xf32> to vector<16xf32>
      %67 = vector.shape_cast %66 : vector<16xf32> to vector<16x1xf32>
      %cst_38 = arith.constant 3.200000e+01 : f32
      %68 = vector.broadcast %cst_38 : f32 to vector<16x1xf32>
      %69 = arith.divf %67, %68 : vector<16x1xf32>
      %cst_39 = arith.constant 9.99999997E-7 : f32
      %70 = vector.broadcast %cst_39 : f32 to vector<16x1xf32>
      %71 = arith.addf %69, %70 : vector<16x1xf32>
      %72 = math.rsqrt %71 : vector<16x1xf32>
      %73 = vector.broadcast %72 : vector<16x1xf32> to vector<16x32xf32>
      %74 = arith.mulf %64, %73 : vector<16x32xf32>
      %c0_40 = arith.constant 0 : index
      %c0_41 = arith.constant 0 : index
      %75 = vector.load %arg3[%c0_40, %c0_41] : memref<1x32xf32, #tpu.memory_space<vmem>>, vector<1x32xf32>
      %76 = vector.broadcast %75 : vector<1x32xf32> to vector<16x32xf32>
      %77 = arith.mulf %74, %76 : vector<16x32xf32>
      %78 = arith.truncf %77 : vector<16x32xf32> to vector<16x32xbf16>
      %c0_42 = arith.constant 0 : index
      %c0_43 = arith.constant 0 : index
      %79 = vector.load %arg12[%c0_42, %c0_43] : memref<16x32xbf16, #tpu.memory_space<vmem>>, vector<16x32xbf16>
      tpu.vector_store %arg12[%c0_42, %c0_43], %78 {strides = array<i32>} : memref<16x32xbf16, #tpu.memory_space<vmem>>, vector<16x32xbf16>,
      %cst_44 = arith.constant 0.000000e+00 : f32
      %80 = vector.broadcast %cst_44 : f32 to vector<16x32xf32>
      %c0_45 = arith.constant 0 : index
      %c0_46 = arith.constant 0 : index
      %81 = vector.load %arg13[%c0_45, %c0_46] : memref<16x32xf32, #tpu.memory_space<vmem>>, vector<16x32xf32>
      tpu.vector_store %arg13[%c0_45, %c0_46], %80 {strides = array<i32>} : memref<16x32xf32, #tpu.memory_space<vmem>>, vector<16x32xf32>,
    } else {
    }
    %c0 = arith.constant 0 : index
    %c0_1 = arith.constant 0 : index
    %3 = vector.load %arg12[%c0, %c0_1] : memref<16x32xbf16, #tpu.memory_space<vmem>>, vector<16x32xbf16>
    %c0_2 = arith.constant 0 : index
    %c0_3 = arith.constant 0 : index
    %4 = vector.load %arg4[%c0_2, %c0_3] : memref<64x32xbf16, #tpu.memory_space<vmem>>, vector<64x32xbf16>
    %cst = arith.constant dense<0.000000e+00> : vector<16x64xf32>
    %5 = tpu.matmul %3, %4, %cst {dimension_numbers = #tpu.dot_dimension_numbers<[1], [1], [0], [0], [0, 0, 1, 0], [], []>} : vector<16x32xbf16>, vector<64x32xbf16>, vector<16x64xf32> -> vector<16x64xf32>
    %c0_4 = arith.constant 0 : index
    %c0_5 = arith.constant 0 : index
    %6 = vector.load %arg5[%c0_4, %c0_5] : memref<1x64xf32, #tpu.memory_space<vmem>>, vector<1x64xf32>
    %7 = vector.broadcast %6 : vector<1x64xf32> to vector<16x64xf32>
    %8 = arith.addf %5, %7 : vector<16x64xf32>
    %c0_6 = arith.constant 0 : index
    %c0_7 = arith.constant 0 : index
    %9 = vector.load %arg6[%c0_6, %c0_7] : memref<64x32xbf16, #tpu.memory_space<vmem>>, vector<64x32xbf16>
    %cst_8 = arith.constant dense<0.000000e+00> : vector<16x64xf32>
    %10 = tpu.matmul %3, %9, %cst_8 {dimension_numbers = #tpu.dot_dimension_numbers<[1], [1], [0], [0], [0, 0, 1, 0], [], []>} : vector<16x32xbf16>, vector<64x32xbf16>, vector<16x64xf32> -> vector<16x64xf32>
    %c0_9 = arith.constant 0 : index
    %c0_10 = arith.constant 0 : index
    %11 = vector.load %arg7[%c0_9, %c0_10] : memref<1x64xf32, #tpu.memory_space<vmem>>, vector<1x64xf32>
    %12 = vector.broadcast %11 : vector<1x64xf32> to vector<16x64xf32>
    %13 = arith.addf %10, %12 : vector<16x64xf32>
    %cst_11 = arith.constant 5.000000e-01 : f32
    %14 = vector.broadcast %cst_11 : f32 to vector<16x64xf32>
    %15 = arith.mulf %14, %8 : vector<16x64xf32>
    %cst_12 = arith.constant 0.707106769 : f32
    %16 = vector.broadcast %cst_12 : f32 to vector<16x64xf32>
    %17 = arith.mulf %8, %16 : vector<16x64xf32>
    %18 = math.absf %17 : vector<16x64xf32>
    %cst_13 = arith.constant 0.327591091 : f32
    %19 = vector.broadcast %cst_13 : f32 to vector<16x64xf32>
    %20 = arith.mulf %19, %18 : vector<16x64xf32>
    %cst_14 = arith.constant 1.000000e+00 : f32
    %21 = vector.broadcast %cst_14 : f32 to vector<16x64xf32>
    %22 = arith.addf %21, %20 : vector<16x64xf32>
    %cst_15 = arith.constant 1.000000e+00 : f32
    %23 = vector.broadcast %cst_15 : f32 to vector<16x64xf32>
    %24 = arith.divf %23, %22 : vector<16x64xf32>
    %cst_16 = arith.constant 1.06140542 : f32
    %25 = vector.broadcast %cst_16 : f32 to vector<16x64xf32>
    %26 = arith.mulf %25, %24 : vector<16x64xf32>
    %cst_17 = arith.constant -1.45315206 : f32
    %27 = vector.broadcast %cst_17 : f32 to vector<16x64xf32>
    %28 = arith.addf %26, %27 : vector<16x64xf32>
    %29 = arith.mulf %28, %24 : vector<16x64xf32>
    %cst_18 = arith.constant 1.42141378 : f32
    %30 = vector.broadcast %cst_18 : f32 to vector<16x64xf32>
    %31 = arith.addf %29, %30 : vector<16x64xf32>
    %32 = arith.mulf %31, %24 : vector<16x64xf32>
    %cst_19 = arith.constant -0.284496725 : f32
    %33 = vector.broadcast %cst_19 : f32 to vector<16x64xf32>
    %34 = arith.addf %32, %33 : vector<16x64xf32>
    %35 = arith.mulf %34, %24 : vector<16x64xf32>
    %cst_20 = arith.constant 0.254829586 : f32
    %36 = vector.broadcast %cst_20 : f32 to vector<16x64xf32>
    %37 = arith.addf %35, %36 : vector<16x64xf32>
    %38 = arith.mulf %37, %24 : vector<16x64xf32>
    %cst_21 = arith.constant 0.000000e+00 : f32
    %39 = vector.broadcast %cst_21 : f32 to vector<16x64xf32>
    %40 = arith.subf %39, %18 : vector<16x64xf32>
    %41 = arith.mulf %40, %18 : vector<16x64xf32>
    %42 = math.exp %41 : vector<16x64xf32>
    %43 = arith.mulf %38, %42 : vector<16x64xf32>
    %cst_22 = arith.constant 1.000000e+00 : f32
    %44 = vector.broadcast %cst_22 : f32 to vector<16x64xf32>
    %45 = arith.subf %44, %43 : vector<16x64xf32>
    %cst_23 = arith.constant 0.000000e+00 : f32
    %46 = vector.broadcast %cst_23 : f32 to vector<16x64xf32>
    %47 = arith.cmpf oge, %17, %46 : vector<16x64xf32>
    %cst_24 = arith.constant 0.000000e+00 : f32
    %48 = vector.broadcast %cst_24 : f32 to vector<16x64xf32>
    %49 = arith.subf %48, %45 : vector<16x64xf32>
    %50 = arith.select %47, %45, %49 : vector<16x64xi1>, vector<16x64xf32>
    %cst_25 = arith.constant 1.000000e+00 : f32
    %51 = vector.broadcast %cst_25 : f32 to vector<16x64xf32>
    %52 = arith.addf %51, %50 : vector<16x64xf32>
    %53 = arith.mulf %15, %52 : vector<16x64xf32>
    %54 = arith.mulf %53, %13 : vector<16x64xf32>
    %55 = arith.truncf %54 : vector<16x64xf32> to vector<16x64xbf16>
    %c0_26 = arith.constant 0 : index
    %c0_27 = arith.constant 0 : index
    %56 = vector.load %arg13[%c0_26, %c0_27] : memref<16x32xf32, #tpu.memory_space<vmem>>, vector<16x32xf32>
    %c0_28 = arith.constant 0 : index
    %c0_29 = arith.constant 0 : index
    %57 = vector.load %arg8[%c0_28, %c0_29] : memref<32x64xbf16, #tpu.memory_space<vmem>>, vector<32x64xbf16>
    %cst_30 = arith.constant dense<0.000000e+00> : vector<16x32xf32>
    %58 = tpu.matmul %55, %57, %cst_30 {dimension_numbers = #tpu.dot_dimension_numbers<[1], [1], [0], [0], [0, 0, 1, 0], [], []>} : vector<16x64xbf16>, vector<32x64xbf16>, vector<16x32xf32> -> vector<16x32xf32>
    %59 = arith.addf %56, %58 : vector<16x32xf32>
    %c0_31 = arith.constant 0 : index
    %c0_32 = arith.constant 0 : index
    %60 = vector.load %arg13[%c0_31, %c0_32] : memref<16x32xf32, #tpu.memory_space<vmem>>, vector<16x32xf32>
    tpu.vector_store %arg13[%c0_31, %c0_32], %59 {strides = array<i32>} : memref<16x32xf32, #tpu.memory_space<vmem>>, vector<16x32xf32>,
    %c0_i32_33 = arith.constant 0 : i32
    %61 = arith.cmpi eq, %arg1, %c0_i32_33 : i32
    %62 = arith.extui %61 : i1 to i32
    %c0_i32_34 = arith.constant 0 : i32
    %63 = arith.cmpi ne, %62, %c0_i32_34 : i32
    scf.if %63 {
      %c0_35 = arith.constant 0 : index
      %c0_36 = arith.constant 0 : index
      %64 = vector.load %arg10[%c0_35, %c0_36] : memref<16x32xf32, #tpu.memory_space<vmem>>, vector<16x32xf32>
      %c0_37 = arith.constant 0 : index
      %c0_38 = arith.constant 0 : index
      %65 = vector.load %arg13[%c0_37, %c0_38] : memref<16x32xf32, #tpu.memory_space<vmem>>, vector<16x32xf32>
      %66 = arith.addf %64, %65 : vector<16x32xf32>
      %c0_39 = arith.constant 0 : index
      %c0_40 = arith.constant 0 : index
      %67 = vector.load %arg9[%c0_39, %c0_40] : memref<1x32xf32, #tpu.memory_space<vmem>>, vector<1x32xf32>
      %68 = vector.broadcast %67 : vector<1x32xf32> to vector<16x32xf32>
      %69 = arith.addf %66, %68 : vector<16x32xf32>
      %c0_41 = arith.constant 0 : index
      %c0_42 = arith.constant 0 : index
      %70 = vector.load %arg11[%c0_41, %c0_42] : memref<16x32xf32, #tpu.memory_space<vmem>>, vector<16x32xf32>
      tpu.vector_store %arg11[%c0_41, %c0_42], %69 {strides = array<i32>} : memref<16x32xf32, #tpu.memory_space<vmem>>, vector<16x32xf32>,
    } else {
    }
    return
  }
  func.func @transform_0(%arg0: i32, %arg1: i32) -> (i32, i32) {
    %c0_i32 = arith.constant 0 : i32
    %c0_i32_0 = arith.constant 0 : i32
    return %arg0, %c0_i32 : i32, i32
  }
  func.func @transform_1(%arg0: i32, %arg1: i32) -> (i32, i32) {
    %c0_i32 = arith.constant 0 : i32
    %c0_i32_0 = arith.constant 0 : i32
    %c0_i32_1 = arith.constant 0 : i32
    return %c0_i32, %c0_i32_0 : i32, i32
  }
  func.func @transform_2(%arg0: i32, %arg1: i32) -> (i32, i32) {
    %c0_i32 = arith.constant 0 : i32
    %c0_i32_0 = arith.constant 0 : i32
    return %arg1, %c0_i32 : i32, i32
  }
  func.func @transform_3(%arg0: i32, %arg1: i32) -> (i32, i32) {
    %c0_i32 = arith.constant 0 : i32
    %c0_i32_0 = arith.constant 0 : i32
    return %c0_i32, %arg1 : i32, i32
  }
  func.func @transform_4(%arg0: i32, %arg1: i32) -> (i32, i32) {
    %c0_i32 = arith.constant 0 : i32
    %c0_i32_0 = arith.constant 0 : i32
    return %arg1, %c0_i32 : i32, i32
  }
  func.func @transform_5(%arg0: i32, %arg1: i32) -> (i32, i32) {
    %c0_i32 = arith.constant 0 : i32
    %c0_i32_0 = arith.constant 0 : i32
    return %c0_i32, %arg1 : i32, i32
  }
  func.func @transform_6(%arg0: i32, %arg1: i32) -> (i32, i32) {
    %c0_i32 = arith.constant 0 : i32
    %c0_i32_0 = arith.constant 0 : i32
    return %c0_i32, %arg1 : i32, i32
  }
  func.func @transform_7(%arg0: i32, %arg1: i32) -> (i32, i32) {
    %c0_i32 = arith.constant 0 : i32
    %c0_i32_0 = arith.constant 0 : i32
    %c0_i32_1 = arith.constant 0 : i32
    return %c0_i32, %c0_i32_0 : i32, i32
  }
  func.func @transform_8(%arg0: i32, %arg1: i32) -> (i32, i32) {
    %c0_i32 = arith.constant 0 : i32
    %c0_i32_0 = arith.constant 0 : i32
    return %arg0, %c0_i32 : i32, i32
  }
  func.func @transform_9(%arg0: i32, %arg1: i32) -> (i32, i32) {
    %c0_i32 = arith.constant 0 : i32
    %c0_i32_0 = arith.constant 0 : i32
    return %arg0, %c0_i32 : i32, i32
  }
}

</mosaic_0001>

<llo_original>
// kernel: transformer_block_forward.6
$region0: #{transformer_block_forward.6}
  #allocation0 [shape = 'u32[]', space=smem, size = 0x4, offset = 0x4, fixed_abs, tag = 'smem constant byte address 0x4 - core index']
  #allocation1 [shape = 'u32[144,128]{1,0:T(1,128)}', space=vmem, size = 0x12000, scoped, tag = 'internal scratch']
  %s0 = inlined_call_operand.vmem [shape: f32[8,16], index: 0, kind: input, shape index: {}]
  %s1 = inlined_call_operand.vmem [shape: bf16[64,16], index: 1, kind: input, shape index: {}]
  %s2 = inlined_call_operand.vmem [shape: bf16[8,64], index: 2, kind: output, shape index: {}]
  %s3 = sld [smem:[#allocation0]]
  $region18: #{transformer_block_forward.6} parent=0
    _
  %s5 = ssub.s32 1, %s3
  %s6 = scalar_select 0, %s5, %s3
  // Predicated region
  $region2: #{transformer_block_forward.6} parent=0 // pred_check
    _
  $region3: #{transformer_block_forward.6} parent=0 // pred_check_branch
    %8 = sbr.rel (0) target = $region5
  $region4: #{transformer_block_forward.6} parent=0 // pred_region
    _
  $region5: #{transformer_block_forward.6} parent=0 // pred_fallthru
    _
  // Predicated region
  $region6: #{transformer_block_forward.6} parent=0 // pred_check
    _
  $region7: #{transformer_block_forward.6} parent=0 // pred_check_branch
    %10 = sbr.rel (0) target = $region9
  $region8: #{transformer_block_forward.6} parent=0 // pred_region
    _
  $region9: #{transformer_block_forward.6} parent=0 // pred_fallthru
    _
  %v12 = vld [vmem:[%s0] sm:$0xff]
  %v13 = vpack.c.bf16 %v12, %v12
  %v14 = vld [vmem:[%s1] sm:$0xf]
  %v15 = vld [vmem:[%s1 + $0x4] sm:$0xf]
  %v16 = vld [vmem:[%s1 + $0x8] sm:$0xf]
  %v17 = vld [vmem:[%s1 + $0xc] sm:$0xf]
  %v18 = vld [vmem:[%s1 + $0x10] sm:$0xf]
  %v19 = vld [vmem:[%s1 + $0x14] sm:$0xf]
  %v20 = vld [vmem:[%s1 + $0x18] sm:$0xf]
  %v21 = vld [vmem:[%s1 + $0x1c] sm:$0xf]
  %v30 = vunpack.c.l.b16 %v14
  %v31 = vunpack.c.l.b16 %v15
  %v32 = vunpack.c.l.b16 %v16
  %v33 = vunpack.c.l.b16 %v17
  %v34 = vunpack.c.l.b16 %v18
  %v35 = vunpack.c.l.b16 %v19
  %v36 = vunpack.c.l.b16 %v20
  %v37 = vunpack.c.l.b16 %v21
  %v38 = vpack.c.b16 %v31, %v30
  %v39 = vpack.c.b16 %v33, %v32
  %v40 = vpack.c.b16 %v35, %v34
  %v41 = vpack.c.b16 %v37, %v36
  %vm42 = vcmask 130048
  %v44 = vsel %vm42, %v13, 0
  %v47 = vsel %vm42, %v38, 0
  %v50 = vsel %vm42, %v39, 0
  %v53 = vsel %vm42, %v40, 0
  %v56 = vsel %vm42, %v41, 0
  %58 = vmatprep.subr.bf16.mxu0 0
  %59 = vmatpush1.bf16.xpose.msra.mxu0 %v47
  %60 = vmatprep.subr.bf16.mxu0 0
  %61 = vmatpush1.bf16.xpose.msra.mxu0 %v50
  %62 = vmatprep.subr.bf16.mxu0 0
  %63 = vmatpush1.bf16.xpose.msra.mxu0 %v53
  %64 = vmatprep.subr.bf16.mxu0 0
  %65 = vmatpush1.bf16.xpose.msra.mxu0 %v56
  %66 = vmatprep.subr.bf16.mxu0 0
  %67 = vmatpush1.bf16.xpose.msra.mxu0 0
  %68 = vmatprep.subr.bf16.mxu0 0
  %69 = vmatpush1.bf16.xpose.msra.mxu0 0
  %70 = vmatprep.subr.bf16.mxu0 0
  %71 = vmatpush1.bf16.xpose.msra.mxu0 0
  %72 = vmatprep.subr.bf16.mxu0 0
  %73 = vmatpush1.bf16.xpose.msra.mxu0 0
  %74 = vmatprep.subr.bf16.mxu0 0
  %75 = vmatpush1.bf16.xpose.msra.mxu0 0
  %76 = vmatprep.subr.bf16.mxu0 0
  %77 = vmatpush1.bf16.xpose.msra.mxu0 0
  %78 = vmatprep.subr.bf16.mxu0 0
  %79 = vmatpush1.bf16.xpose.msra.mxu0 0
  %80 = vmatprep.subr.bf16.mxu0 0
  %81 = vmatpush1.bf16.xpose.msra.mxu0 0
  %82 = vmatprep.subr.bf16.mxu0 0
  %83 = vmatpush1.bf16.xpose.msra.mxu0 0
  %84 = vmatprep.subr.bf16.mxu0 0
  %85 = vmatpush1.bf16.xpose.msra.mxu0 0
  %86 = vmatprep.subr.bf16.mxu0 0
  %87 = vmatpush1.bf16.xpose.msra.mxu0 0
  %88 = vmatprep.subr.bf16.mxu0 0
  %89 = vmatpush1.bf16.xpose.msra.mxu0 0
  %90 = vmatprep.mubr.bf16.mxu0 0
  %91 = vmatmul.mubr.bf16.gmra.mrb[0].mxu0 %v44
  %v92 = vpop.f32.mrb[0].mxu0
  %v93 = vadd.f32 0.0, %v92
  %v94 = vpop.f32.mrb[0].mxu0
  %v95 = vpop.f32.mrb[0].mxu0
  %v96 = vpop.f32.mrb[0].mxu0
  %97 = vdwg.mxu0
  %v98 = vpack.c.bf16 %v93, %v93
  %vm99 = vcmask 519168
  %100 = vst.msk [vmem:[%s2] sm:$0xf] %vm99, %v98
  // Predicated region
  $region10: #{transformer_block_forward.6} parent=0 // pred_check
    _
  $region11: #{transformer_block_forward.6} parent=0 // pred_check_branch
    %102 = sbr.rel (0) target = $region13
  $region12: #{transformer_block_forward.6} parent=0 // pred_region
    _
  $region13: #{transformer_block_forward.6} parent=0 // pred_fallthru
    _
  // Predicated region
  $region14: #{transformer_block_forward.6} parent=0 // pred_check
    _
  $region15: #{transformer_block_forward.6} parent=0 // pred_check_branch
    %104 = sbr.rel (0) target = $region17
  $region16: #{transformer_block_forward.6} parent=0 // pred_region
    _
  $region17: #{transformer_block_forward.6} parent=0 // pred_fallthru
    _

// kernel: transformer_block_forward.5
$region0: #{transformer_block_forward.5}
  #allocation0 [shape = 'u32[]', space=smem, size = 0x4, offset = 0x4, fixed_abs, tag = 'smem constant byte address 0x4 - core index']
  #allocation1 [shape = 'u32[144,128]{1,0:T(1,128)}', space=vmem, size = 0x12000, scoped, tag = 'internal scratch']
  #allocation2 [shape = 'bf16[16,32]{1,0:T(16,128)(2,1)}', space=vmem, size = 0x1000, scoped, tag = 'scratch operand']
  %s0 = inlined_call_operand.vmem [shape: f32[16,32], index: 0, kind: input, shape index: {}]
  %s1 = inlined_call_operand.vmem [shape: f32[1,32], index: 1, kind: input, shape index: {}]
  %s2 = inlined_call_operand.vmem [shape: bf16[96,32], index: 2, kind: input, shape index: {}]
  %s3 = inlined_call_operand.vmem [shape: bf16[16,96], index: 3, kind: output, shape index: {}]
  %s4 = sld [smem:[#allocation0]]
  $region26: #{transformer_block_forward.5} parent=0
    _
  %s6 = ssub.s32 1, %s4
  %s7 = scalar_select 0, %s6, %s4
  // Predicated region
  $region2: #{transformer_block_forward.5} parent=0 // pred_check
    _
  $region3: #{transformer_block_forward.5} parent=0 // pred_check_branch
    %9 = sbr.rel (0) target = $region5
  $region4: #{transformer_block_forward.5} parent=0 // pred_region
    _
  $region5: #{transformer_block_forward.5} parent=0 // pred_fallthru
    _
  // Predicated region
  $region6: #{transformer_block_forward.5} parent=0 // pred_check
    _
  $region7: #{transformer_block_forward.5} parent=0 // pred_check_branch
    %11 = sbr.rel (0) target = $region9
  $region8: #{transformer_block_forward.5} parent=0 // pred_region
    _
  $region9: #{transformer_block_forward.5} parent=0 // pred_fallthru
    _
  // Predicated region
  $region10: #{transformer_block_forward.5} parent=0 // pred_check
    _
  $region11: #{transformer_block_forward.5} parent=0 // pred_check_branch
    %13 = sbr.rel (0) target = $region13
  $region12: #{transformer_block_forward.5} parent=0 // pred_region
    _
  $region13: #{transformer_block_forward.5} parent=0 // pred_fallthru
    _
  %p15 = scmp.eq.s32.totalorder 0, 0
  // Predicated region
  $region14: #{transformer_block_forward.5} parent=0 // pred_check
    %p16 = pneg %p15
  $region15: #{transformer_block_forward.5} parent=0 // pred_check_branch
    %18 = sbr.rel (%p16) target = $region17
  $region16: #{transformer_block_forward.5} parent=0 // pred_region
    %v19 = vld [vmem:[%s0] sm:$0xff]
    %v20 = vld [vmem:[%s0 + $0x8] sm:$0xff]
    %v21 = vmul.f32 %v19, %v19
    %v22 = vmul.f32 %v20, %v20
    %vm23 = vcmask 261120
    %v24 = vsel %vm23, %v21, 0.0
    %25 = vadd.xlane.f32.xlu0 %v24
    %v26 = vpop.xlane.xlu0 %25
    %v27 = vsel %vm23, %v22, 0.0
    %28 = vadd.xlane.f32.xlu0 %v27
    %v29 = vpop.xlane.xlu0 %28
    %v30 = vrcp.pop 32.0
    %v31 = vmul.f32 %v26, %v30
    %v32 = vmul.f32 %v29, %v30
    %v33 = vadd.f32 %v31, 1e-06
    %v34 = vadd.f32 %v32, 1e-06
    %v35 = vrsqrt.pop %v33
    %v36 = vrsqrt.pop %v34
    %v37 = vmul.f32 %v19, %v35
    %v38 = vmul.f32 %v20, %v36
    %v39 = vld [vmem:[%s1] sm:$0x1]
    %v41 = vlaneseq
    %v42 = vshrl.u32 %v41, 7
    %v43 = vsub.s32 0, %v42
    %v44 = vrot.slane %v39, %v43
    %v46 = vmul.f32 %v37, %v44
    %v47 = vmul.f32 %v38, %v44
    %v48 = vpack.c.bf16 %v47, %v46
    %49 = vst.msk [vmem:[#allocation2] sm:$0xff] %vm23, %v48
  $region17: #{transformer_block_forward.5} parent=0 // pred_fallthru
    _
  %v50 = vld [vmem:[#allocation2] sm:$0xff]
  %v51 = vld [vmem:[%s2] sm:$0xf]
  %v52 = vld [vmem:[%s2 + $0x4] sm:$0xf]
  %v53 = vld [vmem:[%s2 + $0x8] sm:$0xf]
  %v54 = vld [vmem:[%s2 + $0xc] sm:$0xf]
  %v55 = vld [vmem:[%s2 + $0x10] sm:$0xf]
  %v56 = vld [vmem:[%s2 + $0x14] sm:$0xf]
  %v57 = vld [vmem:[%s2 + $0x18] sm:$0xf]
  %v58 = vld [vmem:[%s2 + $0x1c] sm:$0xf]
  %v59 = vld [vmem:[%s2 + $0x20] sm:$0xf]
  %v60 = vld [vmem:[%s2 + $0x24] sm:$0xf]
  %v61 = vld [vmem:[%s2 + $0x28] sm:$0xf]
  %v62 = vld [vmem:[%s2 + $0x2c] sm:$0xf]
  %v75 = vunpack.c.l.b16 %v51
  %v76 = vunpack.c.l.b16 %v52
  %v77 = vunpack.c.l.b16 %v53
  %v78 = vunpack.c.l.b16 %v54
  %v79 = vunpack.c.l.b16 %v55
  %v80 = vunpack.c.l.b16 %v56
  %v81 = vunpack.c.l.b16 %v57
  %v82 = vunpack.c.l.b16 %v58
  %v83 = vunpack.c.l.b16 %v59
  %v84 = vunpack.c.l.b16 %v60
  %v85 = vunpack.c.l.b16 %v61
  %v86 = vunpack.c.l.b16 %v62
  %v87 = vpack.c.b16 %v76, %v75
  %v88 = vpack.c.b16 %v78, %v77
  %v89 = vpack.c.b16 %v80, %v79
  %v90 = vpack.c.b16 %v82, %v81
  %v91 = vpack.c.b16 %v84, %v83
  %v92 = vpack.c.b16 %v86, %v85
  %vm93 = vcmask 261120
  %v95 = vsel %vm93, %v50, 0
  %v98 = vsel %vm93, %v87, 0
  %v101 = vsel %vm93, %v88, 0
  %v104 = vsel %vm93, %v89, 0
  %v107 = vsel %vm93, %v90, 0
  %v110 = vsel %vm93, %v91, 0
  %v113 = vsel %vm93, %v92, 0
  %115 = vmatprep.subr.bf16.mxu0 0
  %116 = vmatpush1.bf16.xpose.msra.mxu0 %v98
  %117 = vmatprep.subr.bf16.mxu0 0
  %118 = vmatpush1.bf16.xpose.msra.mxu0 %v101
  %119 = vmatprep.subr.bf16.mxu0 0
  %120 = vmatpush1.bf16.xpose.msra.mxu0 %v104
  %121 = vmatprep.subr.bf16.mxu0 0
  %122 = vmatpush1.bf16.xpose.msra.mxu0 %v107
  %123 = vmatprep.subr.bf16.mxu0 0
  %124 = vmatpush1.bf16.xpose.msra.mxu0 %v110
  %125 = vmatprep.subr.bf16.mxu0 0
  %126 = vmatpush1.bf16.xpose.msra.mxu0 %v113
  %127 = vmatprep.subr.bf16.mxu0 0
  %128 = vmatpush1.bf16.xpose.msra.mxu0 0
  %129 = vmatprep.subr.bf16.mxu0 0
  %130 = vmatpush1.bf16.xpose.msra.mxu0 0
  %131 = vmatprep.subr.bf16.mxu0 0
  %132 = vmatpush1.bf16.xpose.msra.mxu0 0
  %133 = vmatprep.subr.bf16.mxu0 0
  %134 = vmatpush1.bf16.xpose.msra.mxu0 0
  %135 = vmatprep.subr.bf16.mxu0 0
  %136 = vmatpush1.bf16.xpose.msra.mxu0 0
  %137 = vmatprep.subr.bf16.mxu0 0
  %138 = vmatpush1.bf16.xpose.msra.mxu0 0
  %139 = vmatprep.subr.bf16.mxu0 0
  %140 = vmatpush1.bf16.xpose.msra.mxu0 0
  %141 = vmatprep.subr.bf16.mxu0 0
  %142 = vmatpush1.bf16.xpose.msra.mxu0 0
  %143 = vmatprep.subr.bf16.mxu0 0
  %144 = vmatpush1.bf16.xpose.msra.mxu0 0
  %145 = vmatprep.subr.bf16.mxu0 0
  %146 = vmatpush1.bf16.xpose.msra.mxu0 0
  %147 = vmatprep.mubr.bf16.mxu0 0
  %148 = vmatmul.mubr.bf16.gmra.mrb[0].mxu0 %v95
  %v149 = vpop.f32.mrb[0].mxu0
  %v150 = vadd.f32 0.0, %v149
  %v151 = vpop.f32.mrb[0].mxu0
  %v152 = vpop.f32.mrb[0].mxu0
  %v153 = vadd.f32 0.0, %v152
  %v154 = vpop.f32.mrb[0].mxu0
  %155 = vdwg.mxu0
  %v156 = vpack.c.bf16 %v153, %v150
  %v158 = vunpack.c.l.b16 %v156
  %v159 = vunpack.c.h.b16 %v156
  %v160 = vpack.c.b16 %v158, %v158
  %v161 = vpack.c.b16 %v159, %v159
  %vm164 = vcmask 781312
  %165 = vst.msk [vmem:[%s3] sm:$0xf] %vm164, %v160
  %166 = vst.msk [vmem:[%s3 + $0x4] sm:$0xf] %vm164, %v161
  // Predicated region
  $region18: #{transformer_block_forward.5} parent=0 // pred_check
    _
  $region19: #{transformer_block_forward.5} parent=0 // pred_check_branch
    %168 = sbr.rel (0) target = $region21
  $region20: #{transformer_block_forward.5} parent=0 // pred_region
    _
  $region21: #{transformer_block_forward.5} parent=0 // pred_fallthru
    _
  // Predicated region
  $region22: #{transformer_block_forward.5} parent=0 // pred_check
    _
  $region23: #{transformer_block_forward.5} parent=0 // pred_check_branch
    %170 = sbr.rel (0) target = $region25
  $region24: #{transformer_block_forward.5} parent=0 // pred_region
    _
  $region25: #{transformer_block_forward.5} parent=0 // pred_fallthru
    _

// kernel: transformer_block_forward.8
$region0: #{transformer_block_forward.8}
  #allocation0 [shape = 'u32[]', space=smem, size = 0x4, offset = 0x4, fixed_abs, tag = 'smem constant byte address 0x4 - core index']
  #allocation1 [shape = 'u32[144,128]{1,0:T(1,128)}', space=vmem, size = 0x12000, scoped, tag = 'internal scratch']
  %s0 = inlined_call_operand.vmem [shape: bf16[16,32], index: 0, kind: input, shape index: {}]
  %s1 = inlined_call_operand.vmem [shape: bf16[32,32], index: 1, kind: input, shape index: {}]
  %s2 = inlined_call_operand.vmem [shape: f32[1,32], index: 2, kind: input, shape index: {}]
  %s3 = inlined_call_operand.vmem [shape: f32[16,32], index: 3, kind: input, shape index: {}]
  %s4 = inlined_call_operand.vmem [shape: f32[16,32], index: 4, kind: output, shape index: {}]
  %s5 = sld [smem:[#allocation0]]
  $region26: #{transformer_block_forward.8} parent=0
    _
  %s7 = ssub.s32 1, %s5
  %s8 = scalar_select 0, %s7, %s5
  // Predicated region
  $region2: #{transformer_block_forward.8} parent=0 // pred_check
    _
  $region3: #{transformer_block_forward.8} parent=0 // pred_check_branch
    %10 = sbr.rel (0) target = $region5
  $region4: #{transformer_block_forward.8} parent=0 // pred_region
    _
  $region5: #{transformer_block_forward.8} parent=0 // pred_fallthru
    _
  // Predicated region
  $region6: #{transformer_block_forward.8} parent=0 // pred_check
    _
  $region7: #{transformer_block_forward.8} parent=0 // pred_check_branch
    %12 = sbr.rel (0) target = $region9
  $region8: #{transformer_block_forward.8} parent=0 // pred_region
    _
  $region9: #{transformer_block_forward.8} parent=0 // pred_fallthru
    _
  // Predicated region
  $region10: #{transformer_block_forward.8} parent=0 // pred_check
    _
  $region11: #{transformer_block_forward.8} parent=0 // pred_check_branch
    %14 = sbr.rel (0) target = $region13
  $region12: #{transformer_block_forward.8} parent=0 // pred_region
    _
  $region13: #{transformer_block_forward.8} parent=0 // pred_fallthru
    _
  // Predicated region
  $region14: #{transformer_block_forward.8} parent=0 // pred_check
    _
  $region15: #{transformer_block_forward.8} parent=0 // pred_check_branch
    %16 = sbr.rel (0) target = $region17
  $region16: #{transformer_block_forward.8} parent=0 // pred_region
    _
  $region17: #{transformer_block_forward.8} parent=0 // pred_fallthru
    _
  %v18 = vld [vmem:[%s0] sm:$0xf]
  %v19 = vld [vmem:[%s0 + $0x4] sm:$0xf]
  %v20 = vld [vmem:[%s1] sm:$0xf]
  %v21 = vld [vmem:[%s1 + $0x4] sm:$0xf]
  %v22 = vld [vmem:[%s1 + $0x8] sm:$0xf]
  %v23 = vld [vmem:[%s1 + $0xc] sm:$0xf]
  %v26 = vunpack.c.l.b16 %v18
  %v27 = vunpack.c.l.b16 %v19
  %v28 = vpack.c.b16 %v27, %v26
  %v33 = vunpack.c.l.b16 %v20
  %v34 = vunpack.c.l.b16 %v21
  %v35 = vunpack.c.l.b16 %v22
  %v36 = vunpack.c.l.b16 %v23
  %v37 = vpack.c.b16 %v34, %v33
  %v38 = vpack.c.b16 %v36, %v35
  %vm39 = vcmask 261120
  %v41 = vsel %vm39, %v28, 0
  %v44 = vsel %vm39, %v37, 0
  %v47 = vsel %vm39, %v38, 0
  %49 = vmatprep.subr.bf16.mxu0 0
  %50 = vmatpush1.bf16.xpose.msra.mxu0 %v44
  %51 = vmatprep.subr.bf16.mxu0 0
  %52 = vmatpush1.bf16.xpose.msra.mxu0 %v47
  %53 = vmatprep.subr.bf16.mxu0 0
  %54 = vmatpush1.bf16.xpose.msra.mxu0 0
  %55 = vmatprep.subr.bf16.mxu0 0
  %56 = vmatpush1.bf16.xpose.msra.mxu0 0
  %57 = vmatprep.subr.bf16.mxu0 0
  %58 = vmatpush1.bf16.xpose.msra.mxu0 0
  %59 = vmatprep.subr.bf16.mxu0 0
  %60 = vmatpush1.bf16.xpose.msra.mxu0 0
  %61 = vmatprep.subr.bf16.mxu0 0
  %62 = vmatpush1.bf16.xpose.msra.mxu0 0
  %63 = vmatprep.subr.bf16.mxu0 0
  %64 = vmatpush1.bf16.xpose.msra.mxu0 0
  %65 = vmatprep.subr.bf16.mxu0 0
  %66 = vmatpush1.bf16.xpose.msra.mxu0 0
  %67 = vmatprep.subr.bf16.mxu0 0
  %68 = vmatpush1.bf16.xpose.msra.mxu0 0
  %69 = vmatprep.subr.bf16.mxu0 0
  %70 = vmatpush1.bf16.xpose.msra.mxu0 0
  %71 = vmatprep.subr.bf16.mxu0 0
  %72 = vmatpush1.bf16.xpose.msra.mxu0 0
  %73 = vmatprep.subr.bf16.mxu0 0
  %74 = vmatpush1.bf16.xpose.msra.mxu0 0
  %75 = vmatprep.subr.bf16.mxu0 0
  %76 = vmatpush1.bf16.xpose.msra.mxu0 0
  %77 = vmatprep.subr.bf16.mxu0 0
  %78 = vmatpush1.bf16.xpose.msra.mxu0 0
  %79 = vmatprep.subr.bf16.mxu0 0
  %80 = vmatpush1.bf16.xpose.msra.mxu0 0
  %81 = vmatprep.mubr.bf16.mxu0 0
  %82 = vmatmul.mubr.bf16.gmra.mrb[0].mxu0 %v41
  %v83 = vpop.f32.mrb[0].mxu0
  %v84 = vadd.f32 0.0, %v83
  %v85 = vpop.f32.mrb[0].mxu0
  %v86 = vpop.f32.mrb[0].mxu0
  %v87 = vadd.f32 0.0, %v86
  %v88 = vpop.f32.mrb[0].mxu0
  %89 = vdwg.mxu0
  %v90 = vld [vmem:[%s3] sm:$0xff]
  %v91 = vld [vmem:[%s3 + $0x8] sm:$0xff]
  %v92 = vadd.f32 %v90, %v84
  %v93 = vadd.f32 %v91, %v87
  %v94 = vld [vmem:[%s2] sm:$0x1]
  %v96 = vlaneseq
  %v97 = vshrl.u32 %v96, 7
  %v98 = vsub.s32 0, %v97
  %v99 = vrot.slane %v94, %v98
  %v101 = vadd.f32 %v92, %v99
  %v102 = vadd.f32 %v93, %v99
  %103 = vst.msk [vmem:[%s4] sm:$0xff] %vm39, %v101
  %104 = vst.msk [vmem:[%s4 + $0x8] sm:$0xff] %vm39, %v102
  // Predicated region
  $region18: #{transformer_block_forward.8} parent=0 // pred_check
    _
  $region19: #{transformer_block_forward.8} parent=0 // pred_check_branch
    %106 = sbr.rel (0) target = $region21
  $region20: #{transformer_block_forward.8} parent=0 // pred_region
    _
  $region21: #{transformer_block_forward.8} parent=0 // pred_fallthru
    _
  // Predicated region
  $region22: #{transformer_block_forward.8} parent=0 // pred_check
    _
  $region23: #{transformer_block_forward.8} parent=0 // pred_check_branch
    %108 = sbr.rel (0) target = $region25
  $region24: #{transformer_block_forward.8} parent=0 // pred_region
    _
  $region25: #{transformer_block_forward.8} parent=0 // pred_fallthru
    _

// kernel: transformer_block_forward.9
$region0: #{transformer_block_forward.9}
  #allocation0 [shape = 'u32[]', space=smem, size = 0x4, offset = 0x4, fixed_abs, tag = 'smem constant byte address 0x4 - core index']
  #allocation1 [shape = 'u32[144,128]{1,0:T(1,128)}', space=vmem, size = 0x12000, scoped, tag = 'internal scratch']
  #allocation2 [shape = 'bf16[16,32]{1,0:T(16,128)(2,1)}', space=vmem, size = 0x1000, scoped, tag = 'scratch operand']
  #allocation3 [shape = 'f32[16,32]{1,0:T(8,128)}', space=vmem, size = 0x2000, scoped, tag = 'scratch operand']
  %s0 = inlined_call_operand.vmem [shape: f32[16,32], index: 0, kind: input, shape index: {}, may-alias: {0,8}]
  %s1 = inlined_call_operand.vmem [shape: f32[1,32], index: 1, kind: input, shape index: {}]
  %s2 = inlined_call_operand.vmem [shape: bf16[64,32], index: 2, kind: input, shape index: {}]
  %s3 = inlined_call_operand.vmem [shape: f32[1,64], index: 3, kind: input, shape index: {}]
  %s4 = inlined_call_operand.vmem [shape: bf16[64,32], index: 4, kind: input, shape index: {}]
  %s5 = inlined_call_operand.vmem [shape: f32[1,64], index: 5, kind: input, shape index: {}]
  %s6 = inlined_call_operand.vmem [shape: bf16[32,64], index: 6, kind: input, shape index: {}]
  %s7 = inlined_call_operand.vmem [shape: f32[1,32], index: 7, kind: input, shape index: {}]
  %s8 = inlined_call_operand.vmem [shape: f32[16,32], index: 8, kind: input, shape index: {}, may-alias: {0,8}]
  %s9 = inlined_call_operand.hbm [shape: f32[16,32], index: 9, kind: output, shape index: {}]
  %s10 = sld [smem:[#allocation0]]
  $region54: #{transformer_block_forward.9} parent=0
    _
  %s12 = ssub.s32 1, %s10
  %s13 = scalar_select 0, %s12, %s10
  $region1: #{transformer_block_forward.9} parent=0
    #allocation4 [shape = 'u8[8192]{0}', space=vmem, size = 0x2000, scoped, tag = 'output window, operand 0, single buffered']
    #allocation5 [shape = 's32[1]{0}', space=sflag, size = 0x4, scoped, tag = 'scoped memory for transformer_block_forward.9']
    %14 = vsyncpa [#allocation5], 0
    // Predicated region
    $region2: #{transformer_block_forward.9} parent=1 // pred_check
      _
    $region3: #{transformer_block_forward.9} parent=1 // pred_check_branch
      %16 = sbr.rel (0) target = $region5
    $region4: #{transformer_block_forward.9} parent=1 // pred_region
      _
    $region5: #{transformer_block_forward.9} parent=1 // pred_fallthru
      _
    // Predicated region
    $region6: #{transformer_block_forward.9} parent=1 // pred_check
      _
    $region7: #{transformer_block_forward.9} parent=1 // pred_check_branch
      %18 = sbr.rel (0) target = $region9
    $region8: #{transformer_block_forward.9} parent=1 // pred_region
      _
    $region9: #{transformer_block_forward.9} parent=1 // pred_fallthru
      _
    // Predicated region
    $region10: #{transformer_block_forward.9} parent=1 // pred_check
      _
    $region11: #{transformer_block_forward.9} parent=1 // pred_check_branch
      %20 = sbr.rel (0) target = $region13
    $region12: #{transformer_block_forward.9} parent=1 // pred_region
      _
    $region13: #{transformer_block_forward.9} parent=1 // pred_fallthru
      _
    // Predicated region
    $region14: #{transformer_block_forward.9} parent=1 // pred_check
      _
    $region15: #{transformer_block_forward.9} parent=1 // pred_check_branch
      %22 = sbr.rel (0) target = $region17
    $region16: #{transformer_block_forward.9} parent=1 // pred_region
      _
    $region17: #{transformer_block_forward.9} parent=1 // pred_fallthru
      _
    // Predicated region
    $region18: #{transformer_block_forward.9} parent=1 // pred_check
      _
    $region19: #{transformer_block_forward.9} parent=1 // pred_check_branch
      %24 = sbr.rel (0) target = $region21
    $region20: #{transformer_block_forward.9} parent=1 // pred_region
      _
    $region21: #{transformer_block_forward.9} parent=1 // pred_fallthru
      _
    // Predicated region
    $region22: #{transformer_block_forward.9} parent=1 // pred_check
      _
    $region23: #{transformer_block_forward.9} parent=1 // pred_check_branch
      %26 = sbr.rel (0) target = $region25
    $region24: #{transformer_block_forward.9} parent=1 // pred_region
      _
    $region25: #{transformer_block_forward.9} parent=1 // pred_fallthru
      _
    // Predicated region
    $region26: #{transformer_block_forward.9} parent=1 // pred_check
      _
    $region27: #{transformer_block_forward.9} parent=1 // pred_check_branch
      %28 = sbr.rel (0) target = $region29
    $region28: #{transformer_block_forward.9} parent=1 // pred_region
      _
    $region29: #{transformer_block_forward.9} parent=1 // pred_fallthru
      _
    // Predicated region
    $region30: #{transformer_block_forward.9} parent=1 // pred_check
      _
    $region31: #{transformer_block_forward.9} parent=1 // pred_check_branch
      %30 = sbr.rel (0) target = $region33
    $region32: #{transformer_block_forward.9} parent=1 // pred_region
      _
    $region33: #{transformer_block_forward.9} parent=1 // pred_fallthru
      _
    // Predicated region
    $region34: #{transformer_block_forward.9} parent=1 // pred_check
      _
    $region35: #{transformer_block_forward.9} parent=1 // pred_check_branch
      %32 = sbr.rel (0) target = $region37
    $region36: #{transformer_block_forward.9} parent=1 // pred_region
      _
    $region37: #{transformer_block_forward.9} parent=1 // pred_fallthru
      _
    %p34 = scmp.eq.s32.totalorder 0, 0
    // Predicated region
    $region38: #{transformer_block_forward.9} parent=1 // pred_check
      %p35 = pneg %p34
    $region39: #{transformer_block_forward.9} parent=1 // pred_check_branch
      %37 = sbr.rel (%p35) target = $region41
    $region40: #{transformer_block_forward.9} parent=1 // pred_region
      %v38 = vld [vmem:[%s0] sm:$0xff]
      %v39 = vld [vmem:[%s0 + $0x8] sm:$0xff]
      %v40 = vmul.f32 %v38, %v38
      %v41 = vmul.f32 %v39, %v39
      %vm42 = vcmask 261120
      %v43 = vsel %vm42, %v40, 0.0
      %44 = vadd.xlane.f32.xlu0 %v43
      %v45 = vpop.xlane.xlu0 %44
      %v46 = vsel %vm42, %v41, 0.0
      %47 = vadd.xlane.f32.xlu0 %v46
      %v48 = vpop.xlane.xlu0 %47
      %v49 = vrcp.pop 32.0
      %v50 = vmul.f32 %v45, %v49
      %v51 = vmul.f32 %v48, %v49
      %v52 = vadd.f32 %v50, 1e-06
      %v53 = vadd.f32 %v51, 1e-06
      %v54 = vrsqrt.pop %v52
      %v55 = vrsqrt.pop %v53
      %v56 = vmul.f32 %v38, %v54
      %v57 = vmul.f32 %v39, %v55
      %v58 = vld [vmem:[%s1] sm:$0x1]
      %v60 = vlaneseq
      %v61 = vshrl.u32 %v60, 7
      %v62 = vsub.s32 0, %v61
      %v63 = vrot.slane %v58, %v62
      %v65 = vmul.f32 %v56, %v63
      %v66 = vmul.f32 %v57, %v63
      %v67 = vpack.c.bf16 %v66, %v65
      %68 = vst.msk [vmem:[#allocation2] sm:$0xff] %vm42, %v67
      %69 = vst.msk [vmem:[#allocation3] sm:$0xff] %vm42, 0.0
      %70 = vst.msk [vmem:[#allocation3 + $0x8] sm:$0xff] %vm42, 0.0
    $region41: #{transformer_block_forward.9} parent=1 // pred_fallthru
      _
    %v71 = vld [vmem:[#allocation2] sm:$0xff]
    %v72 = vld [vmem:[%s2] sm:$0xf]
    %v73 = vld [vmem:[%s2 + $0x4] sm:$0xf]
    %v74 = vld [vmem:[%s2 + $0x8] sm:$0xf]
    %v75 = vld [vmem:[%s2 + $0xc] sm:$0xf]
    %v76 = vld [vmem:[%s2 + $0x10] sm:$0xf]
    %v77 = vld [vmem:[%s2 + $0x14] sm:$0xf]
    %v78 = vld [vmem:[%s2 + $0x18] sm:$0xf]
    %v79 = vld [vmem:[%s2 + $0x1c] sm:$0xf]
    %v80 = vld [vmem:[%s3] sm:$0x1]
    %v82 = vlaneseq
    %v83 = vshrl.u32 %v82, 7
    %v84 = vsub.s32 0, %v83
    %v85 = vrot.slane %v80, %v84
    %v95 = vunpack.c.l.b16 %v72
    %v96 = vunpack.c.l.b16 %v73
    %v97 = vunpack.c.l.b16 %v74
    %v98 = vunpack.c.l.b16 %v75
    %v99 = vunpack.c.l.b16 %v76
    %v100 = vunpack.c.l.b16 %v77
    %v101 = vunpack.c.l.b16 %v78
    %v102 = vunpack.c.l.b16 %v79
    %v103 = vpack.c.b16 %v96, %v95
    %v104 = vpack.c.b16 %v98, %v97
    %v105 = vpack.c.b16 %v100, %v99
    %v106 = vpack.c.b16 %v102, %v101
    %vm107 = vcmask 261120
    %v109 = vsel %vm107, %v71, 0
    %v112 = vsel %vm107, %v103, 0
    %v115 = vsel %vm107, %v104, 0
    %v118 = vsel %vm107, %v105, 0
    %v121 = vsel %vm107, %v106, 0
    %123 = vmatprep.subr.bf16.mxu0 0
    %124 = vmatpush1.bf16.xpose.msra.mxu0 %v112
    %125 = vmatprep.subr.bf16.mxu0 0
    %126 = vmatpush1.bf16.xpose.msra.mxu0 %v115
    %127 = vmatprep.subr.bf16.mxu0 0
    %128 = vmatpush1.bf16.xpose.msra.mxu0 %v118
    %129 = vmatprep.subr.bf16.mxu0 0
    %130 = vmatpush1.bf16.xpose.msra.mxu0 %v121
    %131 = vmatprep.subr.bf16.mxu0 0
    %132 = vmatpush1.bf16.xpose.msra.mxu0 0
    %133 = vmatprep.subr.bf16.mxu0 0
    %134 = vmatpush1.bf16.xpose.msra.mxu0 0
    %135 = vmatprep.subr.bf16.mxu0 0
    %136 = vmatpush1.bf16.xpose.msra.mxu0 0
    %137 = vmatprep.subr.bf16.mxu0 0
    %138 = vmatpush1.bf16.xpose.msra.mxu0 0
    %139 = vmatprep.subr.bf16.mxu0 0
    %140 = vmatpush1.bf16.xpose.msra.mxu0 0
    %141 = vmatprep.subr.bf16.mxu0 0
    %142 = vmatpush1.bf16.xpose.msra.mxu0 0
    %143 = vmatprep.subr.bf16.mxu0 0
    %144 = vmatpush1.bf16.xpose.msra.mxu0 0
    %145 = vmatprep.subr.bf16.mxu0 0
    %146 = vmatpush1.bf16.xpose.msra.mxu0 0
    %147 = vmatprep.subr.bf16.mxu0 0
    %148 = vmatpush1.bf16.xpose.msra.mxu0 0
    %149 = vmatprep.subr.bf16.mxu0 0
    %150 = vmatpush1.bf16.xpose.msra.mxu0 0
    %151 = vmatprep.subr.bf16.mxu0 0
    %152 = vmatpush1.bf16.xpose.msra.mxu0 0
    %153 = vmatprep.subr.bf16.mxu0 0
    %154 = vmatpush1.bf16.xpose.msra.mxu0 0
    %155 = vmatprep.mubr.bf16.mxu0 0
    %156 = vmatmul.mubr.bf16.gmra.mrb[0].mxu0 %v109
    %v157 = vpop.f32.mrb[0].mxu0
    %v158 = vadd.f32 %v85, %v157
    %v159 = vpop.f32.mrb[0].mxu0
    %v160 = vpop.f32.mrb[0].mxu0
    %v161 = vadd.f32 %v85, %v160
    %v162 = vpop.f32.mrb[0].mxu0
    %163 = vdwg.mxu0
    %v164 = vld [vmem:[%s4] sm:$0xf]
    %v165 = vld [vmem:[%s4 + $0x4] sm:$0xf]
    %v166 = vld [vmem:[%s4 + $0x8] sm:$0xf]
    %v167 = vld [vmem:[%s4 + $0xc] sm:$0xf]
    %v168 = vld [vmem:[%s4 + $0x10] sm:$0xf]
    %v169 = vld [vmem:[%s4 + $0x14] sm:$0xf]
    %v170 = vld [vmem:[%s4 + $0x18] sm:$0xf]
    %v171 = vld [vmem:[%s4 + $0x1c] sm:$0xf]
    %v172 = vld [vmem:[%s5] sm:$0x1]
    %v174 = vlaneseq
    %v175 = vshrl.u32 %v174, 7
    %v176 = vsub.s32 0, %v175
    %v177 = vrot.slane %v172, %v176
    %v187 = vunpack.c.l.b16 %v164
    %v188 = vunpack.c.l.b16 %v165
    %v189 = vunpack.c.l.b16 %v166
    %v190 = vunpack.c.l.b16 %v167
    %v191 = vunpack.c.l.b16 %v168
    %v192 = vunpack.c.l.b16 %v169
    %v193 = vunpack.c.l.b16 %v170
    %v194 = vunpack.c.l.b16 %v171
    %v195 = vpack.c.b16 %v188, %v187
    %v196 = vpack.c.b16 %v190, %v189
    %v197 = vpack.c.b16 %v192, %v191
    %v198 = vpack.c.b16 %v194, %v193
    %v200 = vsel %vm107, %v195, 0
    %v203 = vsel %vm107, %v196, 0
    %v206 = vsel %vm107, %v197, 0
    %v209 = vsel %vm107, %v198, 0
    %211 = vmatprep.subr.bf16.mxu0 0
    %212 = vmatpush1.bf16.xpose.msra.mxu0 %v200
    %213 = vmatprep.subr.bf16.mxu0 0
    %214 = vmatpush1.bf16.xpose.msra.mxu0 %v203
    %215 = vmatprep.subr.bf16.mxu0 0
    %216 = vmatpush1.bf16.xpose.msra.mxu0 %v206
    %217 = vmatprep.subr.bf16.mxu0 0
    %218 = vmatpush1.bf16.xpose.msra.mxu0 %v209
    %219 = vmatprep.subr.bf16.mxu0 0
    %220 = vmatpush1.bf16.xpose.msra.mxu0 0
    %221 = vmatprep.subr.bf16.mxu0 0
    %222 = vmatpush1.bf16.xpose.msra.mxu0 0
    %223 = vmatprep.subr.bf16.mxu0 0
    %224 = vmatpush1.bf16.xpose.msra.mxu0 0
    %225 = vmatprep.subr.bf16.mxu0 0
    %226 = vmatpush1.bf16.xpose.msra.mxu0 0
    %227 = vmatprep.subr.bf16.mxu0 0
    %228 = vmatpush1.bf16.xpose.msra.mxu0 0
    %229 = vmatprep.subr.bf16.mxu0 0
    %230 = vmatpush1.bf16.xpose.msra.mxu0 0
    %231 = vmatprep.subr.bf16.mxu0 0
    %232 = vmatpush1.bf16.xpose.msra.mxu0 0
    %233 = vmatprep.subr.bf16.mxu0 0
    %234 = vmatpush1.bf16.xpose.msra.mxu0 0
    %235 = vmatprep.subr.bf16.mxu0 0
    %236 = vmatpush1.bf16.xpose.msra.mxu0 0
    %237 = vmatprep.subr.bf16.mxu0 0
    %238 = vmatpush1.bf16.xpose.msra.mxu0 0
    %239 = vmatprep.subr.bf16.mxu0 0
    %240 = vmatpush1.bf16.xpose.msra.mxu0 0
    %241 = vmatprep.subr.bf16.mxu0 0
    %242 = vmatpush1.bf16.xpose.msra.mxu0 0
    %243 = vmatprep.mubr.bf16.mxu0 0
    %244 = vmatmul.mubr.bf16.gmra.mrb[0].mxu0 %v109
    %v245 = vpop.f32.mrb[0].mxu0
    %v246 = vadd.f32 %v177, %v245
    %v247 = vpop.f32.mrb[0].mxu0
    %v248 = vpop.f32.mrb[0].mxu0
    %v249 = vadd.f32 %v177, %v248
    %v250 = vpop.f32.mrb[0].mxu0
    %251 = vdwg.mxu0
    %v252 = vmul.f32 %v158, 0.5
    %v253 = vmul.f32 %v161, 0.5
    %v254 = vmul.f32 %v158, 0.70710677
    %v255 = vmul.f32 %v161, 0.70710677
    %v256 = vand.u32 2147483647, %v254
    %v257 = vand.u32 2147483647, %v255
    %v258 = vmul.f32 %v256, 0.3275911
    %v259 = vmul.f32 %v257, 0.3275911
    %v260 = vadd.f32 %v258, 1.0
    %v261 = vadd.f32 %v259, 1.0
    %v262 = vrcp.pop %v260
    %v263 = vmul.f32 1.0, %v262
    %v264 = vrcp.pop %v261
    %v265 = vmul.f32 1.0, %v264
    %v266 = vmul.f32 %v263, 1.0614054
    %v267 = vmul.f32 %v265, 1.0614054
    %v268 = vadd.f32 %v266, -1.4531521
    %v269 = vadd.f32 %v267, -1.4531521
    %v270 = vmul.f32 %v268, %v263
    %v271 = vmul.f32 %v269, %v265
    %v272 = vadd.f32 %v270, 1.4214138
    %v273 = vadd.f32 %v271, 1.4214138
    %v274 = vmul.f32 %v272, %v263
    %v275 = vmul.f32 %v273, %v265
    %v276 = vadd.f32 %v274, -0.28449672
    %v277 = vadd.f32 %v275, -0.28449672
    %v278 = vmul.f32 %v276, %v263
    %v279 = vmul.f32 %v277, %v265
    %v280 = vadd.f32 %v278, 0.2548296
    %v281 = vadd.f32 %v279, 0.2548296
    %v282 = vmul.f32 %v280, %v263
    %v283 = vmul.f32 %v281, %v265
    %v284 = vsub.f32 0.0, %v256
    %v285 = vsub.f32 0.0, %v257
    %v286 = vmul.f32 %v284, %v256
    %v287 = vmul.f32 %v285, %v257
    %v288 = vmul.f32 %v286, 1.442695
    %v289 = vpow.pop %v288
    %v290 = vmul.f32 %v287, 1.442695
    %v291 = vpow.pop %v290
    %v292 = vmul.f32 %v282, %v289
    %v293 = vmul.f32 %v283, %v291
    %v294 = vsub.f32 1.0, %v292
    %v295 = vsub.f32 1.0, %v293
    %vm296 = vcmp.ge.f32.partialorder %v254, 0.0
    %vm297 = vcmp.ge.f32.partialorder %v255, 0.0
    %v298 = vsub.f32 0.0, %v294
    %v299 = vsub.f32 0.0, %v295
    %v300 = vsel %vm296, %v294, %v298
    %v301 = vsel %vm297, %v295, %v299
    %v302 = vadd.f32 %v300, 1.0
    %v303 = vadd.f32 %v301, 1.0
    %v304 = vmul.f32 %v252, %v302
    %v305 = vmul.f32 %v253, %v303
    %v306 = vmul.f32 %v304, %v246
    %v307 = vmul.f32 %v305, %v249
    %v308 = vpack.c.bf16 %v307, %v306
    %v309 = vld [vmem:[#allocation3] sm:$0xff]
    %v310 = vld [vmem:[#allocation3 + $0x8] sm:$0xff]
    %v311 = vld [vmem:[%s6] sm:$0xf]
    %v312 = vld [vmem:[%s6 + $0x4] sm:$0xf]
    %v313 = vld [vmem:[%s6 + $0x8] sm:$0xf]
    %v314 = vld [vmem:[%s6 + $0xc] sm:$0xf]
    %v319 = vunpack.c.l.b16 %v311
    %v320 = vunpack.c.l.b16 %v312
    %v321 = vunpack.c.l.b16 %v313
    %v322 = vunpack.c.l.b16 %v314
    %v323 = vpack.c.b16 %v320, %v319
    %v324 = vpack.c.b16 %v322, %v321
    %vm325 = vcmask 523264
    %v327 = vsel %vm325, %v308, 0
    %v330 = vsel %vm325, %v323, 0
    %v333 = vsel %vm325, %v324, 0
    %335 = vmatprep.subr.bf16.mxu0 0
    %336 = vmatpush1.bf16.xpose.msra.mxu0 %v330
    %337 = vmatprep.subr.bf16.mxu0 0
    %338 = vmatpush1.bf16.xpose.msra.mxu0 %v333
    %339 = vmatprep.subr.bf16.mxu0 0
    %340 = vmatpush1.bf16.xpose.msra.mxu0 0
    %341 = vmatprep.subr.bf16.mxu0 0
    %342 = vmatpush1.bf16.xpose.msra.mxu0 0
    %343 = vmatprep.subr.bf16.mxu0 0
    %344 = vmatpush1.bf16.xpose.msra.mxu0 0
    %345 = vmatprep.subr.bf16.mxu0 0
    %346 = vmatpush1.bf16.xpose.msra.mxu0 0
    %347 = vmatprep.subr.bf16.mxu0 0
    %348 = vmatpush1.bf16.xpose.msra.mxu0 0
    %349 = vmatprep.subr.bf16.mxu0 0
    %350 = vmatpush1.bf16.xpose.msra.mxu0 0
    %351 = vmatprep.subr.bf16.mxu0 0
    %352 = vmatpush1.bf16.xpose.msra.mxu0 0
    %353 = vmatprep.subr.bf16.mxu0 0
    %354 = vmatpush1.bf16.xpose.msra.mxu0 0
    %355 = vmatprep.subr.bf16.mxu0 0
    %356 = vmatpush1.bf16.xpose.msra.mxu0 0
    %357 = vmatprep.subr.bf16.mxu0 0
    %358 = vmatpush1.bf16.xpose.msra.mxu0 0
    %359 = vmatprep.subr.bf16.mxu0 0
    %360 = vmatpush1.bf16.xpose.msra.mxu0 0
    %361 = vmatprep.subr.bf16.mxu0 0
    %362 = vmatpush1.bf16.xpose.msra.mxu0 0
    %363 = vmatprep.subr.bf16.mxu0 0
    %364 = vmatpush1.bf16.xpose.msra.mxu0 0
    %365 = vmatprep.subr.bf16.mxu0 0
    %366 = vmatpush1.bf16.xpose.msra.mxu0 0
    %367 = vmatprep.mubr.bf16.mxu0 0
    %368 = vmatmul.mubr.bf16.gmra.mrb[0].mxu0 %v327
    %v369 = vpop.f32.mrb[0].mxu0
    %v370 = vadd.f32 0.0, %v369
    %v371 = vpop.f32.mrb[0].mxu0
    %v372 = vpop.f32.mrb[0].mxu0
    %v373 = vadd.f32 0.0, %v372
    %v374 = vpop.f32.mrb[0].mxu0
    %375 = vdwg.mxu0
    %v376 = vadd.f32 %v309, %v370
    %v377 = vadd.f32 %v310, %v373
    %378 = vst.msk [vmem:[#allocation3] sm:$0xff] %vm107, %v376
    %379 = vst.msk [vmem:[#allocation3 + $0x8] sm:$0xff] %vm107, %v377
    // Predicated region
    $region42: #{transformer_block_forward.9} parent=1 // pred_check
      %p380 = pneg %p34
    $region43: #{transformer_block_forward.9} parent=1 // pred_check_branch
      %382 = sbr.rel (%p380) target = $region45
    $region44: #{transformer_block_forward.9} parent=1 // pred_region
      %v383 = vld [vmem:[%s8] sm:$0xff]
      %v384 = vld [vmem:[%s8 + $0x8] sm:$0xff]
      %v385 = vld [vmem:[#allocation3] sm:$0xff]
      %v386 = vld [vmem:[#allocation3 + $0x8] sm:$0xff]
      %v387 = vadd.f32 %v383, %v385
      %v388 = vadd.f32 %v384, %v386
      %v389 = vld [vmem:[%s7] sm:$0x1]
      %v391 = vlaneseq
      %v392 = vshrl.u32 %v391, 7
      %v393 = vsub.s32 0, %v392
      %v394 = vrot.slane %v389, %v393
      %v396 = vadd.f32 %v387, %v394
      %v397 = vadd.f32 %v388, %v394
      %398 = vst.msk [vmem:[#allocation4] sm:$0xff] %vm107, %v396
      %399 = vst.msk [vmem:[#allocation4 + $0x8] sm:$0xff] %vm107, %v397
    $region45: #{transformer_block_forward.9} parent=1 // pred_fallthru
      _
    // Predicated region
    $region46: #{transformer_block_forward.9} parent=1 // pred_check
      _
    $region47: #{transformer_block_forward.9} parent=1 // pred_check_branch
      %401 = sbr.rel (0) target = $region49
    $region48: #{transformer_block_forward.9} parent=1 // pred_region
      %s403 = ssub.s32 256, 256
      %404 = vsyncadd [#allocation5], %s403
      %s405 = sshll.u32 [#allocation4], 4
      %s406 = int_to_ptr.vmem [resolvable:$true] %s405
      %411 = dma.vmem_to_hbm [thread:$0]  %s406, 256, %s9, [#allocation5], 128, 128, 8
    $region49: #{transformer_block_forward.9} parent=1 // pred_fallthru
      _
    // Predicated region
    $region50: #{transformer_block_forward.9} parent=1 // pred_check
      _
    $region51: #{transformer_block_forward.9} parent=1 // pred_check_branch
      %413 = sbr.rel (0) target = $region53
    $region52: #{transformer_block_forward.9} parent=1 // pred_region
      %414 = dma.done [#allocation5], 256
    $region53: #{transformer_block_forward.9} parent=1 // pred_fallthru
      _
    %415 = vsyncpa [#allocation5], 1

// kernel: transformer_block_forward.7
$region0: #{transformer_block_forward.7}
  #allocation0 [shape = 'u32[]', space=smem, size = 0x4, offset = 0x4, fixed_abs, tag = 'smem constant byte address 0x4 - core index']
  #allocation1 [shape = 'u32[144,128]{1,0:T(1,128)}', space=vmem, size = 0x12000, scoped, tag = 'internal scratch']
  #allocation2 [shape = 'f32[8,4]{1,0:T(8,128)}', space=vmem, size = 0x1000, scoped, tag = 'scratch operand']
  #allocation3 [shape = 'f32[8,4]{1,0:T(8,128)}', space=vmem, size = 0x1000, scoped, tag = 'scratch operand']
  #allocation4 [shape = 'f32[8,32]{1,0:T(8,128)}', space=vmem, size = 0x1000, scoped, tag = 'scratch operand']
  %s0 = inlined_call_operand.vmem [shape: bf16[2,8,96], index: 0, kind: input, shape index: {}, may-alias: {0,1,2}]
  %s1 = inlined_call_operand.vmem [shape: bf16[2,8,96], index: 1, kind: input, shape index: {}, may-alias: {0,1,2}]
  %s2 = inlined_call_operand.vmem [shape: bf16[2,8,96], index: 2, kind: input, shape index: {}, may-alias: {0,1,2}]
  %s3 = inlined_call_operand.vmem [shape: bf16[2,4,64], index: 3, kind: input, shape index: {}, may-alias: {3,4}]
  %s4 = inlined_call_operand.vmem [shape: bf16[2,4,64], index: 4, kind: input, shape index: {}, may-alias: {3,4}]
  %s5 = inlined_call_operand.vmem [shape: f32[2,1,4], index: 5, kind: input, shape index: {}]
  %s6 = inlined_call_operand.vmem [shape: bf16[2,8,32], index: 6, kind: output, shape index: {}]
  %s7 = sld [smem:[#allocation0]]
  $region65: #{transformer_block_forward.7} parent=0
    _
  %s9 = ssub.s32 1, %s7
  %s10 = scalar_select 0, %s9, %s7
  loop: start=0, step=1, limit=4
  $region2: #{transformer_block_forward.7} parent=0 // loop_pre_header
    _
  $region3: #{transformer_block_forward.7} parent=0 // loop_header
    %s12 = sphi 0, %s16
    %p13 = scmp.ge.s32.totalorder %s12, 4
    %s19 = sphi 0, %s38
    %s20 = sphi 0, %s34
    %s21 = sphi 0, %s30
    %s22 = sphi 0, %s19
    %s23 = sphi 0, %s20
    %s24 = sphi 0, %s21
    %s25 = sphi 0, %s22
    %s26 = sphi 0, %s23
    %s27 = sphi 0, %s24
    %s43 = sphi 0, %s45
    %s46 = sphi 0, %s43
    %s47 = sphi 0, %s46
    %s63 = sphi 0, %s47
    %s71 = sphi 0, %s73
    %s74 = sphi 0, %s71
    %s75 = sphi 0, %s74
    %s91 = sphi 0, %s75
    %s99 = sphi 0, %s101
    %s102 = sphi 0, %s99
    %s103 = sphi 0, %s102
    %s119 = sphi 0, %s103
    %s125 = sphi 0, %s127
    %s128 = sphi 0, %s125
    %s129 = sphi 0, %s128
    %s145 = sphi 0, %s129
    %s151 = sphi 0, %s153
    %s154 = sphi 0, %s151
    %s155 = sphi 0, %s154
    %s171 = sphi 0, %s155
    %s177 = sphi 0, %s179
    %s180 = sphi 0, %s177
    %s181 = sphi 0, %s180
    %s197 = sphi 0, %s181
    %s205 = sphi 0, %s207
    %s208 = sphi 0, %s205
    %s209 = sphi 0, %s208
    %s225 = sphi 0, %s209
  $region4: #{transformer_block_forward.7} parent=0 // loop_header_branch
    %15 = sbr.rel (%p13) target = $region8
  $region5: #{transformer_block_forward.7} parent=0 // loop_body
    %s17 = ssub.s32 %s12, 1
    %s18 = ssub.s32 %s12, 2
    %s28 = sadd.s32 1, %s21
    %p29 = scmp.ge.s32.totalorder %s28, 1
    %s30 = scalar_select %p29, 0, %s28
    %s31 = sadd.s32 1, %s20
    %s32 = scalar_select %p29, %s31, %s20
    %p33 = scmp.ge.s32.totalorder %s32, 1
    %s34 = scalar_select %p33, 0, %s32
    %s35 = sadd.s32 1, %s19
    %s36 = scalar_select %p33, %s35, %s19
    %p37 = scmp.ge.s32.totalorder %s36, 2
    %s38 = scalar_select %p37, 0, %s36
    %s39 = ssub.s32 %s19, %s38
    %s40 = ssub.s32 %s20, %s34
    %s41 = sor.u32 %s39, %s40
    %p42 = scmp.eq.s32.totalorder %s41, 0
    %s44 = sadd.s32 %s43, 1
    %s45 = scalar_select %p42, %s43, %s44
    %p48 = pneg %p42
    %p49 = scmp.eq.s32.totalorder %s12, 1
    %p50 = por %p48, %p49
    %p51 = scmp.ne.s32.totalorder %s43, %s46
    %p52 = scmp.eq.s32.totalorder %s12, 0
    %p53 = por %p51, %p52
    %p54 = scmp.ne.s32.totalorder %s43, %s46
    %p55 = scmp.eq.s32.totalorder %s17, 1
    %p56 = por %p54, %p55
    %p57 = scmp.ne.s32.totalorder %s46, %s47
    %p58 = scmp.eq.s32.totalorder %s17, 0
    %p59 = por %p57, %p58
    %p60 = scmp.ne.s32.totalorder %s46, %s47
    %p61 = scmp.eq.s32.totalorder %s18, 1
    %p62 = por %p60, %p61
    %p64 = scmp.ne.s32.totalorder %s47, %s63
    %p65 = scmp.eq.s32.totalorder %s18, 0
    %p66 = por %p64, %p65
    %s67 = ssub.s32 %s19, %s38
    %s68 = ssub.s32 %s21, %s30
    %s69 = sor.u32 %s67, %s68
    %p70 = scmp.eq.s32.totalorder %s69, 0
    %s72 = sadd.s32 %s71, 1
    %s73 = scalar_select %p70, %s71, %s72
    %p76 = pneg %p70
    %p77 = scmp.eq.s32.totalorder %s12, 1
    %p78 = por %p76, %p77
    %p79 = scmp.ne.s32.totalorder %s71, %s74
    %p80 = scmp.eq.s32.totalorder %s12, 0
    %p81 = por %p79, %p80
    %p82 = scmp.ne.s32.totalorder %s71, %s74
    %p83 = scmp.eq.s32.totalorder %s17, 1
    %p84 = por %p82, %p83
    %p85 = scmp.ne.s32.totalorder %s74, %s75
    %p86 = scmp.eq.s32.totalorder %s17, 0
    %p87 = por %p85, %p86
    %p88 = scmp.ne.s32.totalorder %s74, %s75
    %p89 = scmp.eq.s32.totalorder %s18, 1
    %p90 = por %p88, %p89
    %p92 = scmp.ne.s32.totalorder %s75, %s91
    %p93 = scmp.eq.s32.totalorder %s18, 0
    %p94 = por %p92, %p93
    %s95 = ssub.s32 %s19, %s38
    %s96 = ssub.s32 %s21, %s30
    %s97 = sor.u32 %s95, %s96
    %p98 = scmp.eq.s32.totalorder %s97, 0
    %s100 = sadd.s32 %s99, 1
    %s101 = scalar_select %p98, %s99, %s100
    %p104 = pneg %p98
    %p105 = scmp.eq.s32.totalorder %s12, 1
    %p106 = por %p104, %p105
    %p107 = scmp.ne.s32.totalorder %s99, %s102
    %p108 = scmp.eq.s32.totalorder %s12, 0
    %p109 = por %p107, %p108
    %p110 = scmp.ne.s32.totalorder %s99, %s102
    %p111 = scmp.eq.s32.totalorder %s17, 1
    %p112 = por %p110, %p111
    %p113 = scmp.ne.s32.totalorder %s102, %s103
    %p114 = scmp.eq.s32.totalorder %s17, 0
    %p115 = por %p113, %p114
    %p116 = scmp.ne.s32.totalorder %s102, %s103
    %p117 = scmp.eq.s32.totalorder %s18, 1
    %p118 = por %p116, %p117
    %p120 = scmp.ne.s32.totalorder %s103, %s119
    %p121 = scmp.eq.s32.totalorder %s18, 0
    %p122 = por %p120, %p121
    %s123 = ssub.s32 %s19, %s38
    %p124 = scmp.eq.s32.totalorder %s123, 0
    %s126 = sadd.s32 %s125, 1
    %s127 = scalar_select %p124, %s125, %s126
    %p130 = pneg %p124
    %p131 = scmp.eq.s32.totalorder %s12, 1
    %p132 = por %p130, %p131
    %p133 = scmp.ne.s32.totalorder %s125, %s128
    %p134 = scmp.eq.s32.totalorder %s12, 0
    %p135 = por %p133, %p134
    %p136 = scmp.ne.s32.totalorder %s125, %s128
    %p137 = scmp.eq.s32.totalorder %s17, 1
    %p138 = por %p136, %p137
    %p139 = scmp.ne.s32.totalorder %s128, %s129
    %p140 = scmp.eq.s32.totalorder %s17, 0
    %p141 = por %p139, %p140
    %p142 = scmp.ne.s32.totalorder %s128, %s129
    %p143 = scmp.eq.s32.totalorder %s18, 1
    %p144 = por %p142, %p143
    %p146 = scmp.ne.s32.totalorder %s129, %s145
    %p147 = scmp.eq.s32.totalorder %s18, 0
    %p148 = por %p146, %p147
    %s149 = ssub.s32 %s19, %s38
    %p150 = scmp.eq.s32.totalorder %s149, 0
    %s152 = sadd.s32 %s151, 1
    %s153 = scalar_select %p150, %s151, %s152
    %p156 = pneg %p150
    %p157 = scmp.eq.s32.totalorder %s12, 1
    %p158 = por %p156, %p157
    %p159 = scmp.ne.s32.totalorder %s151, %s154
    %p160 = scmp.eq.s32.totalorder %s12, 0
    %p161 = por %p159, %p160
    %p162 = scmp.ne.s32.totalorder %s151, %s154
    %p163 = scmp.eq.s32.totalorder %s17, 1
    %p164 = por %p162, %p163
    %p165 = scmp.ne.s32.totalorder %s154, %s155
    %p166 = scmp.eq.s32.totalorder %s17, 0
    %p167 = por %p165, %p166
    %p168 = scmp.ne.s32.totalorder %s154, %s155
    %p169 = scmp.eq.s32.totalorder %s18, 1
    %p170 = por %p168, %p169
    %p172 = scmp.ne.s32.totalorder %s155, %s171
    %p173 = scmp.eq.s32.totalorder %s18, 0
    %p174 = por %p172, %p173
    %s175 = ssub.s32 %s19, %s38
    %p176 = scmp.eq.s32.totalorder %s175, 0
    %s178 = sadd.s32 %s177, 1
    %s179 = scalar_select %p176, %s177, %s178
    %p182 = pneg %p176
    %p183 = scmp.eq.s32.totalorder %s12, 1
    %p184 = por %p182, %p183
    %p185 = scmp.ne.s32.totalorder %s177, %s180
    %p186 = scmp.eq.s32.totalorder %s12, 0
    %p187 = por %p185, %p186
    %p188 = scmp.ne.s32.totalorder %s177, %s180
    %p189 = scmp.eq.s32.totalorder %s17, 1
    %p190 = por %p188, %p189
    %p191 = scmp.ne.s32.totalorder %s180, %s181
    %p192 = scmp.eq.s32.totalorder %s17, 0
    %p193 = por %p191, %p192
    %p194 = scmp.ne.s32.totalorder %s180, %s181
    %p195 = scmp.eq.s32.totalorder %s18, 1
    %p196 = por %p194, %p195
    %p198 = scmp.ne.s32.totalorder %s181, %s197
    %p199 = scmp.eq.s32.totalorder %s18, 0
    %p200 = por %p198, %p199
    %s201 = ssub.s32 %s19, %s38
    %s202 = ssub.s32 %s20, %s34
    %s203 = sor.u32 %s201, %s202
    %p204 = scmp.eq.s32.totalorder %s203, 0
    %s206 = sadd.s32 %s205, 1
    %s207 = scalar_select %p204, %s205, %s206
    %p210 = pneg %p204
    %p211 = scmp.eq.s32.totalorder %s12, 1
    %p212 = por %p210, %p211
    %p213 = scmp.ne.s32.totalorder %s205, %s208
    %p214 = scmp.eq.s32.totalorder %s12, 0
    %p215 = por %p213, %p214
    %p216 = scmp.ne.s32.totalorder %s205, %s208
    %p217 = scmp.eq.s32.totalorder %s17, 1
    %p218 = por %p216, %p217
    %p219 = scmp.ne.s32.totalorder %s208, %s209
    %p220 = scmp.eq.s32.totalorder %s17, 0
    %p221 = por %p219, %p220
    %p222 = scmp.ne.s32.totalorder %s208, %s209
    %p223 = scmp.eq.s32.totalorder %s18, 1
    %p224 = por %p222, %p223
    %p226 = scmp.ne.s32.totalorder %s209, %s225
    %p227 = scmp.eq.s32.totalorder %s18, 0
    %p228 = por %p226, %p227
    %p229 = scmp.le.s32.totalorder 1, %s12
    %p230 = scmp.lt.s32.totalorder %s12, 3
    %p231 = pnand %p229, %p230
    %p232 = pneg %p231
    // Predicated region
    $region9: #{transformer_block_forward.7} parent=5 // pred_check
      _
    $region10: #{transformer_block_forward.7} parent=5 // pred_check_branch
      %234 = sbr.rel (%p231) target = $region12
    $region11: #{transformer_block_forward.7} parent=5 // pred_region
      %s235 = ssub.s32 %s12, 1
    $region12: #{transformer_block_forward.7} parent=5 // pred_fallthru
      _
    %p236 = scmp.lt.s32.totalorder %s12, 2
    // Predicated region
    $region13: #{transformer_block_forward.7} parent=5 // pred_check
      %p237 = pneg %p236
    $region14: #{transformer_block_forward.7} parent=5 // pred_check_branch
      %239 = sbr.rel (%p237) target = $region16
    $region15: #{transformer_block_forward.7} parent=5 // pred_region
      // Predicated region
      $region17: #{transformer_block_forward.7} parent=15 // pred_check
        %p240 = pneg %p53
      $region18: #{transformer_block_forward.7} parent=15 // pred_check_branch
        %242 = sbr.rel (%p240) target = $region20
      $region19: #{transformer_block_forward.7} parent=15 // pred_region
        %p243 = scmp.lt.s32.totalorder %s19, 1
        %s244 = scalar_select %p243, %s19, 1
        %p245 = scmp.lt.s32.totalorder %s20, 0
        %s246 = scalar_select %p245, %s20, 0
        %s247 = sadd.s32 %s246, %s244
        %s248 = smul.addr %s247, 4
        %s249 = scalar_lea.vmem %s0, %s248
      $region20: #{transformer_block_forward.7} parent=15 // pred_fallthru
        _
      // Predicated region
      $region21: #{transformer_block_forward.7} parent=15 // pred_check
        %p250 = pneg %p81
      $region22: #{transformer_block_forward.7} parent=15 // pred_check_branch
        %252 = sbr.rel (%p250) target = $region24
      $region23: #{transformer_block_forward.7} parent=15 // pred_region
        %p253 = scmp.lt.s32.totalorder %s19, 1
        %s254 = scalar_select %p253, %s19, 1
        %p255 = scmp.lt.s32.totalorder %s21, 0
        %s256 = scalar_select %p255, %s21, 0
        %s257 = sadd.s32 %s256, %s254
        %s258 = smul.addr %s257, 4
        %s259 = scalar_lea.vmem %s1, %s258
      $region24: #{transformer_block_forward.7} parent=15 // pred_fallthru
        _
      // Predicated region
      $region25: #{transformer_block_forward.7} parent=15 // pred_check
        %p260 = pneg %p109
      $region26: #{transformer_block_forward.7} parent=15 // pred_check_branch
        %262 = sbr.rel (%p260) target = $region28
      $region27: #{transformer_block_forward.7} parent=15 // pred_region
        %p263 = scmp.lt.s32.totalorder %s19, 1
        %s264 = scalar_select %p263, %s19, 1
        %p265 = scmp.lt.s32.totalorder %s21, 0
        %s266 = scalar_select %p265, %s21, 0
        %s267 = sadd.s32 %s266, %s264
        %s268 = smul.addr %s267, 4
        %s269 = scalar_lea.vmem %s2, %s268
      $region28: #{transformer_block_forward.7} parent=15 // pred_fallthru
        _
      // Predicated region
      $region29: #{transformer_block_forward.7} parent=15 // pred_check
        %p270 = pneg %p135
      $region30: #{transformer_block_forward.7} parent=15 // pred_check_branch
        %272 = sbr.rel (%p270) target = $region32
      $region31: #{transformer_block_forward.7} parent=15 // pred_region
        %p273 = scmp.lt.s32.totalorder %s19, 1
        %s274 = scalar_select %p273, %s19, 1
        %s275 = smul.addr %s274, 2
        %s276 = scalar_lea.vmem %s3, %s275
      $region32: #{transformer_block_forward.7} parent=15 // pred_fallthru
        _
      // Predicated region
      $region33: #{transformer_block_forward.7} parent=15 // pred_check
        %p277 = pneg %p161
      $region34: #{transformer_block_forward.7} parent=15 // pred_check_branch
        %279 = sbr.rel (%p277) target = $region36
      $region35: #{transformer_block_forward.7} parent=15 // pred_region
        %p280 = scmp.lt.s32.totalorder %s19, 1
        %s281 = scalar_select %p280, %s19, 1
        %s282 = smul.addr %s281, 2
        %s283 = scalar_lea.vmem %s4, %s282
      $region36: #{transformer_block_forward.7} parent=15 // pred_fallthru
        _
      // Predicated region
      $region37: #{transformer_block_forward.7} parent=15 // pred_check
        %p284 = pneg %p187
      $region38: #{transformer_block_forward.7} parent=15 // pred_check_branch
        %286 = sbr.rel (%p284) target = $region40
      $region39: #{transformer_block_forward.7} parent=15 // pred_region
        %p287 = scmp.lt.s32.totalorder %s19, 1
        %s288 = scalar_select %p287, %s19, 1
        %s289 = scalar_lea.vmem %s5, %s288
      $region40: #{transformer_block_forward.7} parent=15 // pred_fallthru
        _
    $region16: #{transformer_block_forward.7} parent=5 // pred_fallthru
      _
    %p290 = scmp.le.s32.totalorder 1, %s12
    %p291 = scmp.lt.s32.totalorder %s12, 3
    %p292 = pnand %p290, %p291
    %p293 = pneg %p292
    // Predicated region
    $region41: #{transformer_block_forward.7} parent=5 // pred_check
      _
    $region42: #{transformer_block_forward.7} parent=5 // pred_check_branch
      %295 = sbr.rel (%p292) target = $region44
    $region43: #{transformer_block_forward.7} parent=5 // pred_region
      %s296 = ssub.s32 %s12, 1
      %p297 = scmp.lt.s32.totalorder %s22, 1
      %s298 = scalar_select %p297, %s22, 1
      %p299 = scmp.lt.s32.totalorder %s23, 0
      %s300 = scalar_select %p299, %s23, 0
      %s301 = sadd.s32 %s300, %s298
      %s302 = smul.addr %s301, 4
      %s303 = scalar_lea.vmem %s0, %s302
      %p304 = pneg %p59
      %p305 = pneg %p56
      %p306 = scmp.lt.s32.totalorder %s22, 1
      %s307 = scalar_select %p306, %s22, 1
      %p308 = scmp.lt.s32.totalorder %s24, 0
      %s309 = scalar_select %p308, %s24, 0
      %s310 = sadd.s32 %s309, %s307
      %s311 = smul.addr %s310, 4
      %s312 = scalar_lea.vmem %s1, %s311
      %p313 = pneg %p87
      %p314 = pneg %p84
      %p315 = scmp.lt.s32.totalorder %s22, 1
      %s316 = scalar_select %p315, %s22, 1
      %p317 = scmp.lt.s32.totalorder %s24, 0
      %s318 = scalar_select %p317, %s24, 0
      %s319 = sadd.s32 %s318, %s316
      %s320 = smul.addr %s319, 4
      %s321 = scalar_lea.vmem %s2, %s320
      %p322 = pneg %p115
      %p323 = pneg %p112
      %p324 = scmp.lt.s32.totalorder %s22, 1
      %s325 = scalar_select %p324, %s22, 1
      %s326 = smul.addr %s325, 2
      %s327 = scalar_lea.vmem %s3, %s326
      %p328 = pneg %p141
      %p329 = pneg %p138
      %p330 = scmp.lt.s32.totalorder %s22, 1
      %s331 = scalar_select %p330, %s22, 1
      %s332 = smul.addr %s331, 2
      %s333 = scalar_lea.vmem %s4, %s332
      %p334 = pneg %p167
      %p335 = pneg %p164
      %p336 = scmp.lt.s32.totalorder %s22, 1
      %s337 = scalar_select %p336, %s22, 1
      %s338 = scalar_lea.vmem %s5, %s337
      %p339 = pneg %p193
      %p340 = pneg %p190
      %p341 = pneg %p221
      %p342 = pneg %p218
      %p343 = scmp.lt.s32.totalorder %s22, 1
      %s344 = scalar_select %p343, %s22, 1
      %p345 = scmp.lt.s32.totalorder %s23, 0
      %s346 = scalar_select %p345, %s23, 0
      %s347 = sadd.s32 %s346, %s344
      %s348 = smul.addr %s347, 4
      %s349 = scalar_lea.vmem %s6, %s348
      %p350 = scmp.lt.s32.totalorder %s22, 1
      %s351 = scalar_select %p350, %s22, 1
      %p352 = scmp.lt.s32.totalorder %s23, 0
      %s353 = scalar_select %p352, %s23, 0
      %s354 = sadd.s32 %s353, %s351
      %s355 = smul.addr %s354, 4
      %s356 = scalar_lea.vmem %s0, %s355
      %p357 = scmp.lt.s32.totalorder %s22, 1
      %s358 = scalar_select %p357, %s22, 1
      %p359 = scmp.lt.s32.totalorder %s24, 0
      %s360 = scalar_select %p359, %s24, 0
      %s361 = sadd.s32 %s360, %s358
      %s362 = smul.addr %s361, 4
      %s363 = scalar_lea.vmem %s1, %s362
      %p364 = scmp.lt.s32.totalorder %s22, 1
      %s365 = scalar_select %p364, %s22, 1
      %p366 = scmp.lt.s32.totalorder %s24, 0
      %s367 = scalar_select %p366, %s24, 0
      %s368 = sadd.s32 %s367, %s365
      %s369 = smul.addr %s368, 4
      %s370 = scalar_lea.vmem %s2, %s369
      %p371 = scmp.lt.s32.totalorder %s22, 1
      %s372 = scalar_select %p371, %s22, 1
      %s373 = smul.addr %s372, 2
      %s374 = scalar_lea.vmem %s3, %s373
      %p375 = scmp.lt.s32.totalorder %s22, 1
      %s376 = scalar_select %p375, %s22, 1
      %s377 = smul.addr %s376, 2
      %s378 = scalar_lea.vmem %s4, %s377
      %p379 = scmp.lt.s32.totalorder %s22, 1
      %s380 = scalar_select %p379, %s22, 1
      %s381 = scalar_lea.vmem %s5, %s380
      %p382 = scmp.lt.s32.totalorder %s22, 1
      %s383 = scalar_select %p382, %s22, 1
      %p384 = scmp.lt.s32.totalorder %s23, 0
      %s385 = scalar_select %p384, %s23, 0
      %s386 = sadd.s32 %s385, %s383
      %s387 = smul.addr %s386, 4
      %s388 = scalar_lea.vmem %s6, %s387
      %p390 = scmp.eq.s32.totalorder %s24, 0
      // Predicated region
      $region45: #{transformer_block_forward.7} parent=43 // pred_check
        %p391 = pneg %p390
      $region46: #{transformer_block_forward.7} parent=43 // pred_check_branch
        %393 = sbr.rel (%p391) target = $region48
      $region47: #{transformer_block_forward.7} parent=43 // pred_region
        %vm394 = vcmask 31744
        %395 = vst.msk [vmem:[#allocation2] sm:$0xff] %vm394, -inf
        %396 = vst.msk [vmem:[#allocation3] sm:$0xff] %vm394, 0.0
        %vm397 = vcmask 261120
        %398 = vst.msk [vmem:[#allocation4] sm:$0xff] %vm397, 0.0
      $region48: #{transformer_block_forward.7} parent=43 // pred_fallthru
        _
      %v399 = vld [vmem:[%s356] sm:$0xf]
      %v400 = vld [vmem:[%s363] sm:$0xf]
      %v401 = vld [vmem:[%s370] sm:$0xf]
      %v402 = vld [vmem:[#allocation2] sm:$0xff]
      %v403 = vld [vmem:[#allocation3] sm:$0xff]
      %v404 = vld [vmem:[#allocation4] sm:$0xff]
      %v406 = vunpack.c.l.b16 %v400
      %v407 = vpack.c.b16 %v406, %v406
      %408 = vrot.lane.b32.xlu0 %v407, 96
      %v409 = vpop.permute.xlu0 %408
      %vm410 = vcmask 64512
      %v412 = vsel %vm410, %v399, 0
      %v415 = vsel %vm410, %v409, 0
      %417 = vmatprep.subr.bf16.mxu0 0
      %418 = vmatpush1.bf16.xpose.msra.mxu0 %v415
      %419 = vmatprep.subr.bf16.mxu0 0
      %420 = vmatpush1.bf16.xpose.msra.mxu0 0
      %421 = vmatprep.subr.bf16.mxu0 0
      %422 = vmatpush1.bf16.xpose.msra.mxu0 0
      %423 = vmatprep.subr.bf16.mxu0 0
      %424 = vmatpush1.bf16.xpose.msra.mxu0 0
      %425 = vmatprep.subr.bf16.mxu0 0
      %426 = vmatpush1.bf16.xpose.msra.mxu0 0
      %427 = vmatprep.subr.bf16.mxu0 0
      %428 = vmatpush1.bf16.xpose.msra.mxu0 0
      %429 = vmatprep.subr.bf16.mxu0 0
      %430 = vmatpush1.bf16.xpose.msra.mxu0 0
      %431 = vmatprep.subr.bf16.mxu0 0
      %432 = vmatpush1.bf16.xpose.msra.mxu0 0
      %433 = vmatprep.subr.bf16.mxu0 0
      %434 = vmatpush1.bf16.xpose.msra.mxu0 0
      %435 = vmatprep.subr.bf16.mxu0 0
      %436 = vmatpush1.bf16.xpose.msra.mxu0 0
      %437 = vmatprep.subr.bf16.mxu0 0
      %438 = vmatpush1.bf16.xpose.msra.mxu0 0
      %439 = vmatprep.subr.bf16.mxu0 0
      %440 = vmatpush1.bf16.xpose.msra.mxu0 0
      %441 = vmatprep.subr.bf16.mxu0 0
      %442 = vmatpush1.bf16.xpose.msra.mxu0 0
      %443 = vmatprep.subr.bf16.mxu0 0
      %444 = vmatpush1.bf16.xpose.msra.mxu0 0
      %445 = vmatprep.subr.bf16.mxu0 0
      %446 = vmatpush1.bf16.xpose.msra.mxu0 0
      %447 = vmatprep.subr.bf16.mxu0 0
      %448 = vmatpush1.bf16.xpose.msra.mxu0 0
      %449 = vmatprep.mubr.bf16.mxu0 0
      %450 = vmatmul.mubr.bf16.gmra.mrb[0].mxu0 %v412
      %v451 = vpop.f32.mrb[0].mxu0
      %v452 = vadd.f32 0.0, %v451
      %v453 = vpop.f32.mrb[0].mxu0
      %v454 = vpop.f32.mrb[0].mxu0
      %v455 = vpop.f32.mrb[0].mxu0
      %456 = vdwg.mxu0
      %v457 = vmul.f32 %v452, 0.35355338
      %v458 = vsel %vm410, %v457, -inf
      %459 = vmax.xlane.f32.xlu0 %v458
      %v460 = vpop.xlane.xlu0 %459
      %v461 = vmax.f32 %v402, %v460
      %v462 = vsub.f32 %v402, %v461
      %v463 = vmul.f32 %v462, 1.442695
      %v464 = vpow.pop %v463
      %466 = vset.pattern.permute.xlu0 0
      %467 = vperm.xlu0 %466, %v461
      %v468 = vpop.permute.xlu0 %467
      %v470 = vsub.f32 %v457, %v468
      %v471 = vmul.f32 %v470, 1.442695
      %v472 = vpow.pop %v471
      %v473 = vmul.f32 %v464, %v403
      %v474 = vsel %vm410, %v472, 0.0
      %475 = vadd.xlane.f32.xlu0 %v474
      %v476 = vpop.xlane.xlu0 %475
      %v477 = vadd.f32 %v473, %v476
      %479 = vset.pattern.permute.xlu0 0
      %480 = vperm.xlu0 %479, %v464
      %v481 = vpop.permute.xlu0 %480
      %v483 = vmul.f32 %v481, %v404
      %v484 = vpack.c.bf16 %v472, %v472
      %v486 = vunpack.c.l.b16 %v401
      %v487 = vpack.c.b16 %v486, %v486
      %488 = vrot.lane.b32.xlu0 %v487, 64
      %v489 = vpop.permute.xlu0 %488
      %v491 = vsel %vm410, %v484, 0
      %vm493 = vcmask 1043456
      %v495 = vsel %vm493, %v489, 0
      %497 = vmatprep.subr.bf16.mxu0 0
      %498 = vmatpush1.bf16.msra.mxu0 %v495
      %499 = vmatprep.subr.bf16.mxu0 0
      %500 = vmatpush1.bf16.msra.mxu0 0
      %501 = vmatprep.subr.bf16.mxu0 0
      %502 = vmatpush1.bf16.msra.mxu0 0
      %503 = vmatprep.subr.bf16.mxu0 0
      %504 = vmatpush1.bf16.msra.mxu0 0
      %505 = vmatprep.subr.bf16.mxu0 0
      %506 = vmatpush1.bf16.msra.mxu0 0
      %507 = vmatprep.subr.bf16.mxu0 0
      %508 = vmatpush1.bf16.msra.mxu0 0
      %509 = vmatprep.subr.bf16.mxu0 0
      %510 = vmatpush1.bf16.msra.mxu0 0
      %511 = vmatprep.subr.bf16.mxu0 0
      %512 = vmatpush1.bf16.msra.mxu0 0
      %513 = vmatprep.subr.bf16.mxu0 0
      %514 = vmatpush1.bf16.msra.mxu0 0
      %515 = vmatprep.subr.bf16.mxu0 0
      %516 = vmatpush1.bf16.msra.mxu0 0
      %517 = vmatprep.subr.bf16.mxu0 0
      %518 = vmatpush1.bf16.msra.mxu0 0
      %519 = vmatprep.subr.bf16.mxu0 0
      %520 = vmatpush1.bf16.msra.mxu0 0
      %521 = vmatprep.subr.bf16.mxu0 0
      %522 = vmatpush1.bf16.msra.mxu0 0
      %523 = vmatprep.subr.bf16.mxu0 0
      %524 = vmatpush1.bf16.msra.mxu0 0
      %525 = vmatprep.subr.bf16.mxu0 0
      %526 = vmatpush1.bf16.msra.mxu0 0
      %527 = vmatprep.subr.bf16.mxu0 0
      %528 = vmatpush1.bf16.msra.mxu0 0
      %529 = vmatprep.mubr.bf16.mxu0 0
      %530 = vmatmul.mubr.bf16.gmra.mrb[0].mxu0 %v491
      %v531 = vpop.f32.mrb[0].mxu0
      %v532 = vadd.f32 0.0, %v531
      %v533 = vpop.f32.mrb[0].mxu0
      %v534 = vpop.f32.mrb[0].mxu0
      %v535 = vpop.f32.mrb[0].mxu0
      %536 = vdwg.mxu0
      %v537 = vadd.f32 %v483, %v532
      %v539 = vunpack.c.l.b16 %v399
      %v540 = vpack.c.b16 %v539, %v539
      %541 = vrot.lane.b32.xlu0 %v540, 120
      %v542 = vpop.permute.xlu0 %541
      %543 = vrot.lane.b32.xlu0 %v407, 88
      %v544 = vpop.permute.xlu0 %543
      %v546 = vsel %vm410, %v542, 0
      %v549 = vsel %vm410, %v544, 0
      %551 = vmatprep.subr.bf16.mxu0 0
      %552 = vmatpush1.bf16.xpose.msra.mxu0 %v549
      %553 = vmatprep.subr.bf16.mxu0 0
      %554 = vmatpush1.bf16.xpose.msra.mxu0 0
      %555 = vmatprep.subr.bf16.mxu0 0
      %556 = vmatpush1.bf16.xpose.msra.mxu0 0
      %557 = vmatprep.subr.bf16.mxu0 0
      %558 = vmatpush1.bf16.xpose.msra.mxu0 0
      %559 = vmatprep.subr.bf16.mxu0 0
      %560 = vmatpush1.bf16.xpose.msra.mxu0 0
      %561 = vmatprep.subr.bf16.mxu0 0
      %562 = vmatpush1.bf16.xpose.msra.mxu0 0
      %563 = vmatprep.subr.bf16.mxu0 0
      %564 = vmatpush1.bf16.xpose.msra.mxu0 0
      %565 = vmatprep.subr.bf16.mxu0 0
      %566 = vmatpush1.bf16.xpose.msra.mxu0 0
      %567 = vmatprep.subr.bf16.mxu0 0
      %568 = vmatpush1.bf16.xpose.msra.mxu0 0
      %569 = vmatprep.subr.bf16.mxu0 0
      %570 = vmatpush1.bf16.xpose.msra.mxu0 0
      %571 = vmatprep.subr.bf16.mxu0 0
      %572 = vmatpush1.bf16.xpose.msra.mxu0 0
      %573 = vmatprep.subr.bf16.mxu0 0
      %574 = vmatpush1.bf16.xpose.msra.mxu0 0
      %575 = vmatprep.subr.bf16.mxu0 0
      %576 = vmatpush1.bf16.xpose.msra.mxu0 0
      %577 = vmatprep.subr.bf16.mxu0 0
      %578 = vmatpush1.bf16.xpose.msra.mxu0 0
      %579 = vmatprep.subr.bf16.mxu0 0
      %580 = vmatpush1.bf16.xpose.msra.mxu0 0
      %581 = vmatprep.subr.bf16.mxu0 0
      %582 = vmatpush1.bf16.xpose.msra.mxu0 0
      %583 = vmatprep.mubr.bf16.mxu0 0
      %584 = vmatmul.mubr.bf16.gmra.mrb[0].mxu0 %v546
      %v585 = vpop.f32.mrb[0].mxu0
      %v586 = vadd.f32 0.0, %v585
      %v587 = vpop.f32.mrb[0].mxu0
      %v588 = vpop.f32.mrb[0].mxu0
      %v589 = vpop.f32.mrb[0].mxu0
      %590 = vdwg.mxu0
      %v591 = vmul.f32 %v586, 0.35355338
      %v592 = vsel %vm410, %v591, -inf
      %593 = vmax.xlane.f32.xlu0 %v592
      %v594 = vpop.xlane.xlu0 %593
      %v595 = vmax.f32 %v402, %v594
      %v596 = vsub.f32 %v402, %v595
      %v597 = vmul.f32 %v596, 1.442695
      %v598 = vpow.pop %v597
      %600 = vset.pattern.permute.xlu0 1
      %601 = vperm.xlu0 %600, %v595
      %v602 = vpop.permute.xlu0 %601
      %v604 = vsub.f32 %v591, %v602
      %v605 = vmul.f32 %v604, 1.442695
      %v606 = vpow.pop %v605
      %v607 = vmul.f32 %v598, %v403
      %v608 = vsel %vm410, %v606, 0.0
      %609 = vadd.xlane.f32.xlu0 %v608
      %v610 = vpop.xlane.xlu0 %609
      %v611 = vadd.f32 %v607, %v610
      %613 = vset.pattern.permute.xlu0 1
      %614 = vperm.xlu0 %613, %v598
      %v615 = vpop.permute.xlu0 %614
      %v617 = vmul.f32 %v615, %v404
      %v618 = vpack.c.bf16 %v606, %v606
      %619 = vrot.lane.b32.xlu0 %v487, 56
      %v620 = vpop.permute.xlu0 %619
      %v622 = vsel %vm410, %v618, 0
      %v625 = vsel %vm493, %v620, 0
      %627 = vmatprep.subr.bf16.mxu0 0
      %628 = vmatpush1.bf16.msra.mxu0 %v625
      %629 = vmatprep.subr.bf16.mxu0 0
      %630 = vmatpush1.bf16.msra.mxu0 0
      %631 = vmatprep.subr.bf16.mxu0 0
      %632 = vmatpush1.bf16.msra.mxu0 0
      %633 = vmatprep.subr.bf16.mxu0 0
      %634 = vmatpush1.bf16.msra.mxu0 0
      %635 = vmatprep.subr.bf16.mxu0 0
      %636 = vmatpush1.bf16.msra.mxu0 0
      %637 = vmatprep.subr.bf16.mxu0 0
      %638 = vmatpush1.bf16.msra.mxu0 0
      %639 = vmatprep.subr.bf16.mxu0 0
      %640 = vmatpush1.bf16.msra.mxu0 0
      %641 = vmatprep.subr.bf16.mxu0 0
      %642 = vmatpush1.bf16.msra.mxu0 0
      %643 = vmatprep.subr.bf16.mxu0 0
      %644 = vmatpush1.bf16.msra.mxu0 0
      %645 = vmatprep.subr.bf16.mxu0 0
      %646 = vmatpush1.bf16.msra.mxu0 0
      %647 = vmatprep.subr.bf16.mxu0 0
      %648 = vmatpush1.bf16.msra.mxu0 0
      %649 = vmatprep.subr.bf16.mxu0 0
      %650 = vmatpush1.bf16.msra.mxu0 0
      %651 = vmatprep.subr.bf16.mxu0 0
      %652 = vmatpush1.bf16.msra.mxu0 0
      %653 = vmatprep.subr.bf16.mxu0 0
      %654 = vmatpush1.bf16.msra.mxu0 0
      %655 = vmatprep.subr.bf16.mxu0 0
      %656 = vmatpush1.bf16.msra.mxu0 0
      %657 = vmatprep.subr.bf16.mxu0 0
      %658 = vmatpush1.bf16.msra.mxu0 0
      %659 = vmatprep.mubr.bf16.mxu0 0
      %660 = vmatmul.mubr.bf16.gmra.mrb[0].mxu0 %v622
      %v661 = vpop.f32.mrb[0].mxu0
      %v662 = vadd.f32 0.0, %v661
      %v663 = vpop.f32.mrb[0].mxu0
      %v664 = vpop.f32.mrb[0].mxu0
      %v665 = vpop.f32.mrb[0].mxu0
      %666 = vdwg.mxu0
      %668 = vrot.lane.b32.xlu0 %v662, 8
      %v669 = vpop.permute.xlu0 %668
      %v671 = vadd.f32 %v617, %v669
      %672 = vrot.lane.b32.xlu0 %v540, 112
      %v673 = vpop.permute.xlu0 %672
      %674 = vrot.lane.b32.xlu0 %v407, 80
      %v675 = vpop.permute.xlu0 %674
      %v677 = vsel %vm410, %v673, 0
      %v680 = vsel %vm410, %v675, 0
      %682 = vmatprep.subr.bf16.mxu0 0
      %683 = vmatpush1.bf16.xpose.msra.mxu0 %v680
      %684 = vmatprep.subr.bf16.mxu0 0
      %685 = vmatpush1.bf16.xpose.msra.mxu0 0
      %686 = vmatprep.subr.bf16.mxu0 0
      %687 = vmatpush1.bf16.xpose.msra.mxu0 0
      %688 = vmatprep.subr.bf16.mxu0 0
      %689 = vmatpush1.bf16.xpose.msra.mxu0 0
      %690 = vmatprep.subr.bf16.mxu0 0
      %691 = vmatpush1.bf16.xpose.msra.mxu0 0
      %692 = vmatprep.subr.bf16.mxu0 0
      %693 = vmatpush1.bf16.xpose.msra.mxu0 0
      %694 = vmatprep.subr.bf16.mxu0 0
      %695 = vmatpush1.bf16.xpose.msra.mxu0 0
      %696 = vmatprep.subr.bf16.mxu0 0
      %697 = vmatpush1.bf16.xpose.msra.mxu0 0
      %698 = vmatprep.subr.bf16.mxu0 0
      %699 = vmatpush1.bf16.xpose.msra.mxu0 0
      %700 = vmatprep.subr.bf16.mxu0 0
      %701 = vmatpush1.bf16.xpose.msra.mxu0 0
      %702 = vmatprep.subr.bf16.mxu0 0
      %703 = vmatpush1.bf16.xpose.msra.mxu0 0
      %704 = vmatprep.subr.bf16.mxu0 0
      %705 = vmatpush1.bf16.xpose.msra.mxu0 0
      %706 = vmatprep.subr.bf16.mxu0 0
      %707 = vmatpush1.bf16.xpose.msra.mxu0 0
      %708 = vmatprep.subr.bf16.mxu0 0
      %709 = vmatpush1.bf16.xpose.msra.mxu0 0
      %710 = vmatprep.subr.bf16.mxu0 0
      %711 = vmatpush1.bf16.xpose.msra.mxu0 0
      %712 = vmatprep.subr.bf16.mxu0 0
      %713 = vmatpush1.bf16.xpose.msra.mxu0 0
      %714 = vmatprep.mubr.bf16.mxu0 0
      %715 = vmatmul.mubr.bf16.gmra.mrb[0].mxu0 %v677
      %v716 = vpop.f32.mrb[0].mxu0
      %v717 = vadd.f32 0.0, %v716
      %v718 = vpop.f32.mrb[0].mxu0
      %v719 = vpop.f32.mrb[0].mxu0
      %v720 = vpop.f32.mrb[0].mxu0
      %721 = vdwg.mxu0
      %v722 = vmul.f32 %v717, 0.35355338
      %v723 = vsel %vm410, %v722, -inf
      %724 = vmax.xlane.f32.xlu0 %v723
      %v725 = vpop.xlane.xlu0 %724
      %v726 = vmax.f32 %v402, %v725
      %v727 = vsub.f32 %v402, %v726
      %v728 = vmul.f32 %v727, 1.442695
      %v729 = vpow.pop %v728
      %731 = vset.pattern.permute.xlu0 2
      %732 = vperm.xlu0 %731, %v726
      %v733 = vpop.permute.xlu0 %732
      %v735 = vsub.f32 %v722, %v733
      %v736 = vmul.f32 %v735, 1.442695
      %v737 = vpow.pop %v736
      %v738 = vmul.f32 %v729, %v403
      %v739 = vsel %vm410, %v737, 0.0
      %740 = vadd.xlane.f32.xlu0 %v739
      %v741 = vpop.xlane.xlu0 %740
      %v742 = vadd.f32 %v738, %v741
      %744 = vset.pattern.permute.xlu0 2
      %745 = vperm.xlu0 %744, %v729
      %v746 = vpop.permute.xlu0 %745
      %v748 = vmul.f32 %v746, %v404
      %v749 = vpack.c.bf16 %v737, %v737
      %750 = vrot.lane.b32.xlu0 %v487, 48
      %v751 = vpop.permute.xlu0 %750
      %v753 = vsel %vm410, %v749, 0
      %v756 = vsel %vm493, %v751, 0
      %758 = vmatprep.subr.bf16.mxu0 0
      %759 = vmatpush1.bf16.msra.mxu0 %v756
      %760 = vmatprep.subr.bf16.mxu0 0
      %761 = vmatpush1.bf16.msra.mxu0 0
      %762 = vmatprep.subr.bf16.mxu0 0
      %763 = vmatpush1.bf16.msra.mxu0 0
      %764 = vmatprep.subr.bf16.mxu0 0
      %765 = vmatpush1.bf16.msra.mxu0 0
      %766 = vmatprep.subr.bf16.mxu0 0
      %767 = vmatpush1.bf16.msra.mxu0 0
      %768 = vmatprep.subr.bf16.mxu0 0
      %769 = vmatpush1.bf16.msra.mxu0 0
      %770 = vmatprep.subr.bf16.mxu0 0
      %771 = vmatpush1.bf16.msra.mxu0 0
      %772 = vmatprep.subr.bf16.mxu0 0
      %773 = vmatpush1.bf16.msra.mxu0 0
      %774 = vmatprep.subr.bf16.mxu0 0
      %775 = vmatpush1.bf16.msra.mxu0 0
      %776 = vmatprep.subr.bf16.mxu0 0
      %777 = vmatpush1.bf16.msra.mxu0 0
      %778 = vmatprep.subr.bf16.mxu0 0
      %779 = vmatpush1.bf16.msra.mxu0 0
      %780 = vmatprep.subr.bf16.mxu0 0
      %781 = vmatpush1.bf16.msra.mxu0 0
      %782 = vmatprep.subr.bf16.mxu0 0
      %783 = vmatpush1.bf16.msra.mxu0 0
      %784 = vmatprep.subr.bf16.mxu0 0
      %785 = vmatpush1.bf16.msra.mxu0 0
      %786 = vmatprep.subr.bf16.mxu0 0
      %787 = vmatpush1.bf16.msra.mxu0 0
      %788 = vmatprep.subr.bf16.mxu0 0
      %789 = vmatpush1.bf16.msra.mxu0 0
      %790 = vmatprep.mubr.bf16.mxu0 0
      %791 = vmatmul.mubr.bf16.gmra.mrb[0].mxu0 %v753
      %v792 = vpop.f32.mrb[0].mxu0
      %v793 = vadd.f32 0.0, %v792
      %v794 = vpop.f32.mrb[0].mxu0
      %v795 = vpop.f32.mrb[0].mxu0
      %v796 = vpop.f32.mrb[0].mxu0
      %797 = vdwg.mxu0
      %799 = vrot.lane.b32.xlu0 %v793, 16
      %v800 = vpop.permute.xlu0 %799
      %v802 = vadd.f32 %v748, %v800
      %803 = vrot.lane.b32.xlu0 %v540, 104
      %v804 = vpop.permute.xlu0 %803
      %805 = vrot.lane.b32.xlu0 %v407, 72
      %v806 = vpop.permute.xlu0 %805
      %v808 = vsel %vm410, %v804, 0
      %v811 = vsel %vm410, %v806, 0
      %813 = vmatprep.subr.bf16.mxu0 0
      %814 = vmatpush1.bf16.xpose.msra.mxu0 %v811
      %815 = vmatprep.subr.bf16.mxu0 0
      %816 = vmatpush1.bf16.xpose.msra.mxu0 0
      %817 = vmatprep.subr.bf16.mxu0 0
      %818 = vmatpush1.bf16.xpose.msra.mxu0 0
      %819 = vmatprep.subr.bf16.mxu0 0
      %820 = vmatpush1.bf16.xpose.msra.mxu0 0
      %821 = vmatprep.subr.bf16.mxu0 0
      %822 = vmatpush1.bf16.xpose.msra.mxu0 0
      %823 = vmatprep.subr.bf16.mxu0 0
      %824 = vmatpush1.bf16.xpose.msra.mxu0 0
      %825 = vmatprep.subr.bf16.mxu0 0
      %826 = vmatpush1.bf16.xpose.msra.mxu0 0
      %827 = vmatprep.subr.bf16.mxu0 0
      %828 = vmatpush1.bf16.xpose.msra.mxu0 0
      %829 = vmatprep.subr.bf16.mxu0 0
      %830 = vmatpush1.bf16.xpose.msra.mxu0 0
      %831 = vmatprep.subr.bf16.mxu0 0
      %832 = vmatpush1.bf16.xpose.msra.mxu0 0
      %833 = vmatprep.subr.bf16.mxu0 0
      %834 = vmatpush1.bf16.xpose.msra.mxu0 0
      %835 = vmatprep.subr.bf16.mxu0 0
      %836 = vmatpush1.bf16.xpose.msra.mxu0 0
      %837 = vmatprep.subr.bf16.mxu0 0
      %838 = vmatpush1.bf16.xpose.msra.mxu0 0
      %839 = vmatprep.subr.bf16.mxu0 0
      %840 = vmatpush1.bf16.xpose.msra.mxu0 0
      %841 = vmatprep.subr.bf16.mxu0 0
      %842 = vmatpush1.bf16.xpose.msra.mxu0 0
      %843 = vmatprep.subr.bf16.mxu0 0
      %844 = vmatpush1.bf16.xpose.msra.mxu0 0
      %845 = vmatprep.mubr.bf16.mxu0 0
      %846 = vmatmul.mubr.bf16.gmra.mrb[0].mxu0 %v808
      %v847 = vpop.f32.mrb[0].mxu0
      %v848 = vadd.f32 0.0, %v847
      %v849 = vpop.f32.mrb[0].mxu0
      %v850 = vpop.f32.mrb[0].mxu0
      %v851 = vpop.f32.mrb[0].mxu0
      %852 = vdwg.mxu0
      %v853 = vmul.f32 %v848, 0.35355338
      %v854 = vsel %vm410, %v853, -inf
      %855 = vmax.xlane.f32.xlu0 %v854
      %v856 = vpop.xlane.xlu0 %855
      %v857 = vmax.f32 %v402, %v856
      %v858 = vsub.f32 %v402, %v857
      %v859 = vmul.f32 %v858, 1.442695
      %v860 = vpow.pop %v859
      %862 = vset.pattern.permute.xlu0 3
      %863 = vperm.xlu0 %862, %v857
      %v864 = vpop.permute.xlu0 %863
      %v866 = vsub.f32 %v853, %v864
      %v867 = vmul.f32 %v866, 1.442695
      %v868 = vpow.pop %v867
      %v869 = vmul.f32 %v860, %v403
      %v870 = vsel %vm410, %v868, 0.0
      %871 = vadd.xlane.f32.xlu0 %v870
      %v872 = vpop.xlane.xlu0 %871
      %v873 = vadd.f32 %v869, %v872
      %875 = vset.pattern.permute.xlu0 3
      %876 = vperm.xlu0 %875, %v860
      %v877 = vpop.permute.xlu0 %876
      %v879 = vmul.f32 %v877, %v404
      %v880 = vpack.c.bf16 %v868, %v868
      %881 = vrot.lane.b32.xlu0 %v487, 40
      %v882 = vpop.permute.xlu0 %881
      %v884 = vsel %vm410, %v880, 0
      %v887 = vsel %vm493, %v882, 0
      %889 = vmatprep.subr.bf16.mxu0 0
      %890 = vmatpush1.bf16.msra.mxu0 %v887
      %891 = vmatprep.subr.bf16.mxu0 0
      %892 = vmatpush1.bf16.msra.mxu0 0
      %893 = vmatprep.subr.bf16.mxu0 0
      %894 = vmatpush1.bf16.msra.mxu0 0
      %895 = vmatprep.subr.bf16.mxu0 0
      %896 = vmatpush1.bf16.msra.mxu0 0
      %897 = vmatprep.subr.bf16.mxu0 0
      %898 = vmatpush1.bf16.msra.mxu0 0
      %899 = vmatprep.subr.bf16.mxu0 0
      %900 = vmatpush1.bf16.msra.mxu0 0
      %901 = vmatprep.subr.bf16.mxu0 0
      %902 = vmatpush1.bf16.msra.mxu0 0
      %903 = vmatprep.subr.bf16.mxu0 0
      %904 = vmatpush1.bf16.msra.mxu0 0
      %905 = vmatprep.subr.bf16.mxu0 0
      %906 = vmatpush1.bf16.msra.mxu0 0
      %907 = vmatprep.subr.bf16.mxu0 0
      %908 = vmatpush1.bf16.msra.mxu0 0
      %909 = vmatprep.subr.bf16.mxu0 0
      %910 = vmatpush1.bf16.msra.mxu0 0
      %911 = vmatprep.subr.bf16.mxu0 0
      %912 = vmatpush1.bf16.msra.mxu0 0
      %913 = vmatprep.subr.bf16.mxu0 0
      %914 = vmatpush1.bf16.msra.mxu0 0
      %915 = vmatprep.subr.bf16.mxu0 0
      %916 = vmatpush1.bf16.msra.mxu0 0
      %917 = vmatprep.subr.bf16.mxu0 0
      %918 = vmatpush1.bf16.msra.mxu0 0
      %919 = vmatprep.subr.bf16.mxu0 0
      %920 = vmatpush1.bf16.msra.mxu0 0
      %921 = vmatprep.mubr.bf16.mxu0 0
      %922 = vmatmul.mubr.bf16.gmra.mrb[0].mxu0 %v884
      %v923 = vpop.f32.mrb[0].mxu0
      %v924 = vadd.f32 0.0, %v923
      %v925 = vpop.f32.mrb[0].mxu0
      %v926 = vpop.f32.mrb[0].mxu0
      %v927 = vpop.f32.mrb[0].mxu0
      %928 = vdwg.mxu0
      %930 = vrot.lane.b32.xlu0 %v924, 24
      %v931 = vpop.permute.xlu0 %930
      %v933 = vadd.f32 %v879, %v931
      %vm934 = vcmask 7168
      %v935 = vsel %vm934, %v461, %v595
      %vm936 = vcmask 15360
      %v937 = vsel %vm936, %v935, %v726
      %vm938 = vcmask 23552
      %v939 = vsel %vm938, %v937, %v857
      %vm940 = vcmask 31744
      %941 = vst.msk [vmem:[#allocation2] sm:$0xff] %vm940, %v939
      %v942 = vsel %vm934, %v477, %v611
      %v943 = vsel %vm936, %v942, %v742
      %v944 = vsel %vm938, %v943, %v873
      %945 = vst.msk [vmem:[#allocation3] sm:$0xff] %vm940, %v944
      %v946 = vsel %vm410, %v537, %v671
      %vm947 = vcmask 130048
      %v948 = vsel %vm947, %v946, %v802
      %vm949 = vcmask 195584
      %v950 = vsel %vm949, %v948, %v933
      %vm951 = vcmask 261120
      %952 = vst.msk [vmem:[#allocation4] sm:$0xff] %vm951, %v950
      // Predicated region
      $region49: #{transformer_block_forward.7} parent=43 // pred_check
        %p953 = pneg %p390
      $region50: #{transformer_block_forward.7} parent=43 // pred_check_branch
        %955 = sbr.rel (%p953) target = $region52
      $region51: #{transformer_block_forward.7} parent=43 // pred_region
        %v956 = vld [vmem:[%s374] sm:$0x3]
        %v957 = vld [vmem:[%s378] sm:$0x3]
        %v958 = vld [vmem:[%s381] sm:$0x1]
        %vm959 = vcmp.gt.f32.partialorder %v958, -1e+29
        %v960 = vld [vmem:[#allocation2] sm:$0xff]
        %v961 = vld [vmem:[#allocation3] sm:$0xff]
        %v962 = vld [vmem:[#allocation4] sm:$0xff]
        %v964 = vsel %vm410, %v956, 0
        %966 = vmatprep.subr.bf16.mxu0 0
        %967 = vmatpush1.bf16.xpose.msra.mxu0 %v964
        %968 = vmatprep.subr.bf16.mxu0 0
        %969 = vmatpush1.bf16.xpose.msra.mxu0 0
        %970 = vmatprep.subr.bf16.mxu0 0
        %971 = vmatpush1.bf16.xpose.msra.mxu0 0
        %972 = vmatprep.subr.bf16.mxu0 0
        %973 = vmatpush1.bf16.xpose.msra.mxu0 0
        %974 = vmatprep.subr.bf16.mxu0 0
        %975 = vmatpush1.bf16.xpose.msra.mxu0 0
        %976 = vmatprep.subr.bf16.mxu0 0
        %977 = vmatpush1.bf16.xpose.msra.mxu0 0
        %978 = vmatprep.subr.bf16.mxu0 0
        %979 = vmatpush1.bf16.xpose.msra.mxu0 0
        %980 = vmatprep.subr.bf16.mxu0 0
        %981 = vmatpush1.bf16.xpose.msra.mxu0 0
        %982 = vmatprep.subr.bf16.mxu0 0
        %983 = vmatpush1.bf16.xpose.msra.mxu0 0
        %984 = vmatprep.subr.bf16.mxu0 0
        %985 = vmatpush1.bf16.xpose.msra.mxu0 0
        %986 = vmatprep.subr.bf16.mxu0 0
        %987 = vmatpush1.bf16.xpose.msra.mxu0 0
        %988 = vmatprep.subr.bf16.mxu0 0
        %989 = vmatpush1.bf16.xpose.msra.mxu0 0
        %990 = vmatprep.subr.bf16.mxu0 0
        %991 = vmatpush1.bf16.xpose.msra.mxu0 0
        %992 = vmatprep.subr.bf16.mxu0 0
        %993 = vmatpush1.bf16.xpose.msra.mxu0 0
        %994 = vmatprep.subr.bf16.mxu0 0
        %995 = vmatpush1.bf16.xpose.msra.mxu0 0
        %996 = vmatprep.subr.bf16.mxu0 0
        %997 = vmatpush1.bf16.xpose.msra.mxu0 0
        %998 = vmatprep.mubr.bf16.mxu0 0
        %999 = vmatmul.mubr.bf16.gmra.mrb[0].mxu0 %v412
        %v1000 = vpop.f32.mrb[0].mxu0
        %v1001 = vadd.f32 0.0, %v1000
        %v1002 = vpop.f32.mrb[0].mxu0
        %v1003 = vpop.f32.mrb[0].mxu0
        %v1004 = vpop.f32.mrb[0].mxu0
        %1005 = vdwg.mxu0
        %v1006 = vmul.f32 %v1001, 0.35355338
        %v1008 = vlaneseq
        %v1009 = vshrl.u32 %v1008, 7
        %v1010 = vsub.s32 0, %v1009
        %v1011 = vrot.slane %v958, %v1010
        %v1013 = vadd.f32 %v1006, %v1011
        %v1014 = vsel %vm940, %v1013, -inf
        %1015 = vmax.xlane.f32.xlu0 %v1014
        %v1016 = vpop.xlane.xlu0 %1015
        %v1017 = vmax.f32 %v960, %v1016
        %v1018 = vsub.f32 %v960, %v1017
        %v1019 = vmul.f32 %v1018, 1.442695
        %v1020 = vpow.pop %v1019
        %1022 = vset.pattern.permute.xlu0 0
        %1023 = vperm.xlu0 %1022, %v1017
        %v1024 = vpop.permute.xlu0 %1023
        %v1026 = vsub.f32 %v1013, %v1024
        %v1027 = vmul.f32 %v1026, 1.442695
        %v1028 = vpow.pop %v1027
        %v1029 = vsel %vm959, 1, 0
        %v1030 = vlaneseq
        %v1031 = vshrl.u32 %v1030, 7
        %v1032 = vsub.s32 0, %v1031
        %v1033 = vrot.slane %v1029, %v1032
        %vm1034 = vcmp.eq.s32.totalorder %v1033, 1
        %v1035 = vsel %vm1034, %v1028, 0.0
        %v1036 = vmul.f32 %v1020, %v961
        %v1037 = vsel %vm940, %v1035, 0.0
        %1038 = vadd.xlane.f32.xlu0 %v1037
        %v1039 = vpop.xlane.xlu0 %1038
        %v1040 = vadd.f32 %v1036, %v1039
        %1042 = vset.pattern.permute.xlu0 0
        %1043 = vperm.xlu0 %1042, %v1020
        %v1044 = vpop.permute.xlu0 %1043
        %v1046 = vmul.f32 %v1044, %v962
        %v1047 = vpack.c.bf16 %v1035, %v1035
        %v1050 = vunpack.c.l.s4 1983009808
        %v1051 = vunpack.c.0.s8 %v1050
        %v1052 = vlaneseq
        %v1053 = vshrl.u32 %v1052, 7
        %v1054 = vsub.s32 %v1051, %v1053
        %v1055 = vrot.slane %v957, %v1054
        %1056 = vrot.lane.b32.xlu0 %v1055, 96
        %v1057 = vpop.permute.xlu0 %1056
        %v1059 = vsel %vm940, %v1047, 0
        %vm1061 = vcmask 1041408
        %v1063 = vsel %vm1061, %v1057, 0
        %1065 = vmatprep.subr.bf16.mxu0 0
        %1066 = vmatpush1.bf16.msra.mxu0 %v1063
        %1067 = vmatprep.subr.bf16.mxu0 0
        %1068 = vmatpush1.bf16.msra.mxu0 0
        %1069 = vmatprep.subr.bf16.mxu0 0
        %1070 = vmatpush1.bf16.msra.mxu0 0
        %1071 = vmatprep.subr.bf16.mxu0 0
        %1072 = vmatpush1.bf16.msra.mxu0 0
        %1073 = vmatprep.subr.bf16.mxu0 0
        %1074 = vmatpush1.bf16.msra.mxu0 0
        %1075 = vmatprep.subr.bf16.mxu0 0
        %1076 = vmatpush1.bf16.msra.mxu0 0
        %1077 = vmatprep.subr.bf16.mxu0 0
        %1078 = vmatpush1.bf16.msra.mxu0 0
        %1079 = vmatprep.subr.bf16.mxu0 0
        %1080 = vmatpush1.bf16.msra.mxu0 0
        %1081 = vmatprep.subr.bf16.mxu0 0
        %1082 = vmatpush1.bf16.msra.mxu0 0
        %1083 = vmatprep.subr.bf16.mxu0 0
        %1084 = vmatpush1.bf16.msra.mxu0 0
        %1085 = vmatprep.subr.bf16.mxu0 0
        %1086 = vmatpush1.bf16.msra.mxu0 0
        %1087 = vmatprep.subr.bf16.mxu0 0
        %1088 = vmatpush1.bf16.msra.mxu0 0
        %1089 = vmatprep.subr.bf16.mxu0 0
        %1090 = vmatpush1.bf16.msra.mxu0 0
        %1091 = vmatprep.subr.bf16.mxu0 0
        %1092 = vmatpush1.bf16.msra.mxu0 0
        %1093 = vmatprep.subr.bf16.mxu0 0
        %1094 = vmatpush1.bf16.msra.mxu0 0
        %1095 = vmatprep.subr.bf16.mxu0 0
        %1096 = vmatpush1.bf16.msra.mxu0 0
        %1097 = vmatprep.mubr.bf16.mxu0 0
        %1098 = vmatmul.mubr.bf16.gmra.mrb[0].mxu0 %v1059
        %v1099 = vpop.f32.mrb[0].mxu0
        %v1100 = vadd.f32 0.0, %v1099
        %v1101 = vpop.f32.mrb[0].mxu0
        %v1102 = vpop.f32.mrb[0].mxu0
        %v1103 = vpop.f32.mrb[0].mxu0
        %1104 = vdwg.mxu0
        %v1105 = vadd.f32 %v1046, %v1100
        %v1106 = vrcp.pop %v1040
        %1108 = vset.pattern.permute.xlu0 0
        %1109 = vperm.xlu0 %1108, %v1106
        %v1110 = vpop.permute.xlu0 %1109
        %v1112 = vmul.f32 %v1105, %v1110
        %v1115 = vunpack.c.l.s4 1983009808
        %v1116 = vunpack.c.0.s8 %v1115
        %v1117 = vlaneseq
        %v1118 = vshrl.u32 %v1117, 7
        %v1119 = vsub.s32 %v1116, %v1118
        %v1120 = vrot.slane %v956, %v1119
        %1121 = vrot.lane.b32.xlu0 %v1120, 120
        %v1122 = vpop.permute.xlu0 %1121
        %v1124 = vsel %vm410, %v1122, 0
        %1126 = vmatprep.subr.bf16.mxu0 0
        %1127 = vmatpush1.bf16.xpose.msra.mxu0 %v1124
        %1128 = vmatprep.subr.bf16.mxu0 0
        %1129 = vmatpush1.bf16.xpose.msra.mxu0 0
        %1130 = vmatprep.subr.bf16.mxu0 0
        %1131 = vmatpush1.bf16.xpose.msra.mxu0 0
        %1132 = vmatprep.subr.bf16.mxu0 0
        %1133 = vmatpush1.bf16.xpose.msra.mxu0 0
        %1134 = vmatprep.subr.bf16.mxu0 0
        %1135 = vmatpush1.bf16.xpose.msra.mxu0 0
        %1136 = vmatprep.subr.bf16.mxu0 0
        %1137 = vmatpush1.bf16.xpose.msra.mxu0 0
        %1138 = vmatprep.subr.bf16.mxu0 0
        %1139 = vmatpush1.bf16.xpose.msra.mxu0 0
        %1140 = vmatprep.subr.bf16.mxu0 0
        %1141 = vmatpush1.bf16.xpose.msra.mxu0 0
        %1142 = vmatprep.subr.bf16.mxu0 0
        %1143 = vmatpush1.bf16.xpose.msra.mxu0 0
        %1144 = vmatprep.subr.bf16.mxu0 0
        %1145 = vmatpush1.bf16.xpose.msra.mxu0 0
        %1146 = vmatprep.subr.bf16.mxu0 0
        %1147 = vmatpush1.bf16.xpose.msra.mxu0 0
        %1148 = vmatprep.subr.bf16.mxu0 0
        %1149 = vmatpush1.bf16.xpose.msra.mxu0 0
        %1150 = vmatprep.subr.bf16.mxu0 0
        %1151 = vmatpush1.bf16.xpose.msra.mxu0 0
        %1152 = vmatprep.subr.bf16.mxu0 0
        %1153 = vmatpush1.bf16.xpose.msra.mxu0 0
        %1154 = vmatprep.subr.bf16.mxu0 0
        %1155 = vmatpush1.bf16.xpose.msra.mxu0 0
        %1156 = vmatprep.subr.bf16.mxu0 0
        %1157 = vmatpush1.bf16.xpose.msra.mxu0 0
        %1158 = vmatprep.mubr.bf16.mxu0 0
        %1159 = vmatmul.mubr.bf16.gmra.mrb[0].mxu0 %v546
        %v1160 = vpop.f32.mrb[0].mxu0
        %v1161 = vadd.f32 0.0, %v1160
        %v1162 = vpop.f32.mrb[0].mxu0
        %v1163 = vpop.f32.mrb[0].mxu0
        %v1164 = vpop.f32.mrb[0].mxu0
        %1165 = vdwg.mxu0
        %v1166 = vmul.f32 %v1161, 0.35355338
        %v1167 = vadd.f32 %v1166, %v1011
        %v1168 = vsel %vm940, %v1167, -inf
        %1169 = vmax.xlane.f32.xlu0 %v1168
        %v1170 = vpop.xlane.xlu0 %1169
        %v1171 = vmax.f32 %v960, %v1170
        %v1172 = vsub.f32 %v960, %v1171
        %v1173 = vmul.f32 %v1172, 1.442695
        %v1174 = vpow.pop %v1173
        %1176 = vset.pattern.permute.xlu0 1
        %1177 = vperm.xlu0 %1176, %v1171
        %v1178 = vpop.permute.xlu0 %1177
        %v1180 = vsub.f32 %v1167, %v1178
        %v1181 = vmul.f32 %v1180, 1.442695
        %v1182 = vpow.pop %v1181
        %v1183 = vsel %vm1034, %v1182, 0.0
        %v1184 = vmul.f32 %v1174, %v961
        %v1185 = vsel %vm940, %v1183, 0.0
        %1186 = vadd.xlane.f32.xlu0 %v1185
        %v1187 = vpop.xlane.xlu0 %1186
        %v1188 = vadd.f32 %v1184, %v1187
        %1190 = vset.pattern.permute.xlu0 1
        %1191 = vperm.xlu0 %1190, %v1174
        %v1192 = vpop.permute.xlu0 %1191
        %v1194 = vmul.f32 %v1192, %v962
        %v1195 = vpack.c.bf16 %v1183, %v1183
        %1196 = vrot.lane.b32.xlu0 %v1055, 88
        %v1197 = vpop.permute.xlu0 %1196
        %v1199 = vsel %vm940, %v1195, 0
        %v1202 = vsel %vm1061, %v1197, 0
        %1204 = vmatprep.subr.bf16.mxu0 0
        %1205 = vmatpush1.bf16.msra.mxu0 %v1202
        %1206 = vmatprep.subr.bf16.mxu0 0
        %1207 = vmatpush1.bf16.msra.mxu0 0
        %1208 = vmatprep.subr.bf16.mxu0 0
        %1209 = vmatpush1.bf16.msra.mxu0 0
        %1210 = vmatprep.subr.bf16.mxu0 0
        %1211 = vmatpush1.bf16.msra.mxu0 0
        %1212 = vmatprep.subr.bf16.mxu0 0
        %1213 = vmatpush1.bf16.msra.mxu0 0
        %1214 = vmatprep.subr.bf16.mxu0 0
        %1215 = vmatpush1.bf16.msra.mxu0 0
        %1216 = vmatprep.subr.bf16.mxu0 0
        %1217 = vmatpush1.bf16.msra.mxu0 0
        %1218 = vmatprep.subr.bf16.mxu0 0
        %1219 = vmatpush1.bf16.msra.mxu0 0
        %1220 = vmatprep.subr.bf16.mxu0 0
        %1221 = vmatpush1.bf16.msra.mxu0 0
        %1222 = vmatprep.subr.bf16.mxu0 0
        %1223 = vmatpush1.bf16.msra.mxu0 0
        %1224 = vmatprep.subr.bf16.mxu0 0
        %1225 = vmatpush1.bf16.msra.mxu0 0
        %1226 = vmatprep.subr.bf16.mxu0 0
        %1227 = vmatpush1.bf16.msra.mxu0 0
        %1228 = vmatprep.subr.bf16.mxu0 0
        %1229 = vmatpush1.bf16.msra.mxu0 0
        %1230 = vmatprep.subr.bf16.mxu0 0
        %1231 = vmatpush1.bf16.msra.mxu0 0
        %1232 = vmatprep.subr.bf16.mxu0 0
        %1233 = vmatpush1.bf16.msra.mxu0 0
        %1234 = vmatprep.subr.bf16.mxu0 0
        %1235 = vmatpush1.bf16.msra.mxu0 0
        %1236 = vmatprep.mubr.bf16.mxu0 0
        %1237 = vmatmul.mubr.bf16.gmra.mrb[0].mxu0 %v1199
        %v1238 = vpop.f32.mrb[0].mxu0
        %v1239 = vadd.f32 0.0, %v1238
        %v1240 = vpop.f32.mrb[0].mxu0
        %v1241 = vpop.f32.mrb[0].mxu0
        %v1242 = vpop.f32.mrb[0].mxu0
        %1243 = vdwg.mxu0
        %1245 = vrot.lane.b32.xlu0 %v1239, 8
        %v1246 = vpop.permute.xlu0 %1245
        %v1248 = vadd.f32 %v1194, %v1246
        %v1249 = vrcp.pop %v1188
        %1251 = vset.pattern.permute.xlu0 1
        %1252 = vperm.xlu0 %1251, %v1249
        %v1253 = vpop.permute.xlu0 %1252
        %v1255 = vmul.f32 %v1248, %v1253
        %1256 = vrot.lane.b32.xlu0 %v1120, 112
        %v1257 = vpop.permute.xlu0 %1256
        %v1259 = vsel %vm410, %v1257, 0
        %1261 = vmatprep.subr.bf16.mxu0 0
        %1262 = vmatpush1.bf16.xpose.msra.mxu0 %v1259
        %1263 = vmatprep.subr.bf16.mxu0 0
        %1264 = vmatpush1.bf16.xpose.msra.mxu0 0
        %1265 = vmatprep.subr.bf16.mxu0 0
        %1266 = vmatpush1.bf16.xpose.msra.mxu0 0
        %1267 = vmatprep.subr.bf16.mxu0 0
        %1268 = vmatpush1.bf16.xpose.msra.mxu0 0
        %1269 = vmatprep.subr.bf16.mxu0 0
        %1270 = vmatpush1.bf16.xpose.msra.mxu0 0
        %1271 = vmatprep.subr.bf16.mxu0 0
        %1272 = vmatpush1.bf16.xpose.msra.mxu0 0
        %1273 = vmatprep.subr.bf16.mxu0 0
        %1274 = vmatpush1.bf16.xpose.msra.mxu0 0
        %1275 = vmatprep.subr.bf16.mxu0 0
        %1276 = vmatpush1.bf16.xpose.msra.mxu0 0
        %1277 = vmatprep.subr.bf16.mxu0 0
        %1278 = vmatpush1.bf16.xpose.msra.mxu0 0
        %1279 = vmatprep.subr.bf16.mxu0 0
        %1280 = vmatpush1.bf16.xpose.msra.mxu0 0
        %1281 = vmatprep.subr.bf16.mxu0 0
        %1282 = vmatpush1.bf16.xpose.msra.mxu0 0
        %1283 = vmatprep.subr.bf16.mxu0 0
        %1284 = vmatpush1.bf16.xpose.msra.mxu0 0
        %1285 = vmatprep.subr.bf16.mxu0 0
        %1286 = vmatpush1.bf16.xpose.msra.mxu0 0
        %1287 = vmatprep.subr.bf16.mxu0 0
        %1288 = vmatpush1.bf16.xpose.msra.mxu0 0
        %1289 = vmatprep.subr.bf16.mxu0 0
        %1290 = vmatpush1.bf16.xpose.msra.mxu0 0
        %1291 = vmatprep.subr.bf16.mxu0 0
        %1292 = vmatpush1.bf16.xpose.msra.mxu0 0
        %1293 = vmatprep.mubr.bf16.mxu0 0
        %1294 = vmatmul.mubr.bf16.gmra.mrb[0].mxu0 %v677
        %v1295 = vpop.f32.mrb[0].mxu0
        %v1296 = vadd.f32 0.0, %v1295
        %v1297 = vpop.f32.mrb[0].mxu0
        %v1298 = vpop.f32.mrb[0].mxu0
        %v1299 = vpop.f32.mrb[0].mxu0
        %1300 = vdwg.mxu0
        %v1301 = vmul.f32 %v1296, 0.35355338
        %v1302 = vadd.f32 %v1301, %v1011
        %v1303 = vsel %vm940, %v1302, -inf
        %1304 = vmax.xlane.f32.xlu0 %v1303
        %v1305 = vpop.xlane.xlu0 %1304
        %v1306 = vmax.f32 %v960, %v1305
        %v1307 = vsub.f32 %v960, %v1306
        %v1308 = vmul.f32 %v1307, 1.442695
        %v1309 = vpow.pop %v1308
        %1311 = vset.pattern.permute.xlu0 2
        %1312 = vperm.xlu0 %1311, %v1306
        %v1313 = vpop.permute.xlu0 %1312
        %v1315 = vsub.f32 %v1302, %v1313
        %v1316 = vmul.f32 %v1315, 1.442695
        %v1317 = vpow.pop %v1316
        %v1318 = vsel %vm1034, %v1317, 0.0
        %v1319 = vmul.f32 %v1309, %v961
        %v1320 = vsel %vm940, %v1318, 0.0
        %1321 = vadd.xlane.f32.xlu0 %v1320
        %v1322 = vpop.xlane.xlu0 %1321
        %v1323 = vadd.f32 %v1319, %v1322
        %1325 = vset.pattern.permute.xlu0 2
        %1326 = vperm.xlu0 %1325, %v1309
        %v1327 = vpop.permute.xlu0 %1326
        %v1329 = vmul.f32 %v1327, %v962
        %v1330 = vpack.c.bf16 %v1318, %v1318
        %1331 = vrot.lane.b32.xlu0 %v1055, 80
        %v1332 = vpop.permute.xlu0 %1331
        %v1334 = vsel %vm940, %v1330, 0
        %v1337 = vsel %vm1061, %v1332, 0
        %1339 = vmatprep.subr.bf16.mxu0 0
        %1340 = vmatpush1.bf16.msra.mxu0 %v1337
        %1341 = vmatprep.subr.bf16.mxu0 0
        %1342 = vmatpush1.bf16.msra.mxu0 0
        %1343 = vmatprep.subr.bf16.mxu0 0
        %1344 = vmatpush1.bf16.msra.mxu0 0
        %1345 = vmatprep.subr.bf16.mxu0 0
        %1346 = vmatpush1.bf16.msra.mxu0 0
        %1347 = vmatprep.subr.bf16.mxu0 0
        %1348 = vmatpush1.bf16.msra.mxu0 0
        %1349 = vmatprep.subr.bf16.mxu0 0
        %1350 = vmatpush1.bf16.msra.mxu0 0
        %1351 = vmatprep.subr.bf16.mxu0 0
        %1352 = vmatpush1.bf16.msra.mxu0 0
        %1353 = vmatprep.subr.bf16.mxu0 0
        %1354 = vmatpush1.bf16.msra.mxu0 0
        %1355 = vmatprep.subr.bf16.mxu0 0
        %1356 = vmatpush1.bf16.msra.mxu0 0
        %1357 = vmatprep.subr.bf16.mxu0 0
        %1358 = vmatpush1.bf16.msra.mxu0 0
        %1359 = vmatprep.subr.bf16.mxu0 0
        %1360 = vmatpush1.bf16.msra.mxu0 0
        %1361 = vmatprep.subr.bf16.mxu0 0
        %1362 = vmatpush1.bf16.msra.mxu0 0
        %1363 = vmatprep.subr.bf16.mxu0 0
        %1364 = vmatpush1.bf16.msra.mxu0 0
        %1365 = vmatprep.subr.bf16.mxu0 0
        %1366 = vmatpush1.bf16.msra.mxu0 0
        %1367 = vmatprep.subr.bf16.mxu0 0
        %1368 = vmatpush1.bf16.msra.mxu0 0
        %1369 = vmatprep.subr.bf16.mxu0 0
        %1370 = vmatpush1.bf16.msra.mxu0 0
        %1371 = vmatprep.mubr.bf16.mxu0 0
        %1372 = vmatmul.mubr.bf16.gmra.mrb[0].mxu0 %v1334
        %v1373 = vpop.f32.mrb[0].mxu0
        %v1374 = vadd.f32 0.0, %v1373
        %v1375 = vpop.f32.mrb[0].mxu0
        %v1376 = vpop.f32.mrb[0].mxu0
        %v1377 = vpop.f32.mrb[0].mxu0
        %1378 = vdwg.mxu0
        %1380 = vrot.lane.b32.xlu0 %v1374, 16
        %v1381 = vpop.permute.xlu0 %1380
        %v1383 = vadd.f32 %v1329, %v1381
        %v1384 = vrcp.pop %v1323
        %1386 = vset.pattern.permute.xlu0 2
        %1387 = vperm.xlu0 %1386, %v1384
        %v1388 = vpop.permute.xlu0 %1387
        %v1390 = vmul.f32 %v1383, %v1388
        %1391 = vrot.lane.b32.xlu0 %v1120, 104
        %v1392 = vpop.permute.xlu0 %1391
        %v1394 = vsel %vm410, %v1392, 0
        %1396 = vmatprep.subr.bf16.mxu0 0
        %1397 = vmatpush1.bf16.xpose.msra.mxu0 %v1394
        %1398 = vmatprep.subr.bf16.mxu0 0
        %1399 = vmatpush1.bf16.xpose.msra.mxu0 0
        %1400 = vmatprep.subr.bf16.mxu0 0
        %1401 = vmatpush1.bf16.xpose.msra.mxu0 0
        %1402 = vmatprep.subr.bf16.mxu0 0
        %1403 = vmatpush1.bf16.xpose.msra.mxu0 0
        %1404 = vmatprep.subr.bf16.mxu0 0
        %1405 = vmatpush1.bf16.xpose.msra.mxu0 0
        %1406 = vmatprep.subr.bf16.mxu0 0
        %1407 = vmatpush1.bf16.xpose.msra.mxu0 0
        %1408 = vmatprep.subr.bf16.mxu0 0
        %1409 = vmatpush1.bf16.xpose.msra.mxu0 0
        %1410 = vmatprep.subr.bf16.mxu0 0
        %1411 = vmatpush1.bf16.xpose.msra.mxu0 0
        %1412 = vmatprep.subr.bf16.mxu0 0
        %1413 = vmatpush1.bf16.xpose.msra.mxu0 0
        %1414 = vmatprep.subr.bf16.mxu0 0
        %1415 = vmatpush1.bf16.xpose.msra.mxu0 0
        %1416 = vmatprep.subr.bf16.mxu0 0
        %1417 = vmatpush1.bf16.xpose.msra.mxu0 0
        %1418 = vmatprep.subr.bf16.mxu0 0
        %1419 = vmatpush1.bf16.xpose.msra.mxu0 0
        %1420 = vmatprep.subr.bf16.mxu0 0
        %1421 = vmatpush1.bf16.xpose.msra.mxu0 0
        %1422 = vmatprep.subr.bf16.mxu0 0
        %1423 = vmatpush1.bf16.xpose.msra.mxu0 0
        %1424 = vmatprep.subr.bf16.mxu0 0
        %1425 = vmatpush1.bf16.xpose.msra.mxu0 0
        %1426 = vmatprep.subr.bf16.mxu0 0
        %1427 = vmatpush1.bf16.xpose.msra.mxu0 0
        %1428 = vmatprep.mubr.bf16.mxu0 0
        %1429 = vmatmul.mubr.bf16.gmra.mrb[0].mxu0 %v808
        %v1430 = vpop.f32.mrb[0].mxu0
        %v1431 = vadd.f32 0.0, %v1430
        %v1432 = vpop.f32.mrb[0].mxu0
        %v1433 = vpop.f32.mrb[0].mxu0
        %v1434 = vpop.f32.mrb[0].mxu0
        %1435 = vdwg.mxu0
        %v1436 = vmul.f32 %v1431, 0.35355338
        %v1437 = vadd.f32 %v1436, %v1011
        %v1438 = vsel %vm940, %v1437, -inf
        %1439 = vmax.xlane.f32.xlu0 %v1438
        %v1440 = vpop.xlane.xlu0 %1439
        %v1441 = vmax.f32 %v960, %v1440
        %v1442 = vsub.f32 %v960, %v1441
        %v1443 = vmul.f32 %v1442, 1.442695
        %v1444 = vpow.pop %v1443
        %1446 = vset.pattern.permute.xlu0 3
        %1447 = vperm.xlu0 %1446, %v1441
        %v1448 = vpop.permute.xlu0 %1447
        %v1450 = vsub.f32 %v1437, %v1448
        %v1451 = vmul.f32 %v1450, 1.442695
        %v1452 = vpow.pop %v1451
        %v1453 = vsel %vm1034, %v1452, 0.0
        %v1454 = vmul.f32 %v1444, %v961
        %v1455 = vsel %vm940, %v1453, 0.0
        %1456 = vadd.xlane.f32.xlu0 %v1455
        %v1457 = vpop.xlane.xlu0 %1456
        %v1458 = vadd.f32 %v1454, %v1457
        %1460 = vset.pattern.permute.xlu0 3
        %1461 = vperm.xlu0 %1460, %v1444
        %v1462 = vpop.permute.xlu0 %1461
        %v1464 = vmul.f32 %v1462, %v962
        %v1465 = vpack.c.bf16 %v1453, %v1453
        %1466 = vrot.lane.b32.xlu0 %v1055, 72
        %v1467 = vpop.permute.xlu0 %1466
        %v1469 = vsel %vm940, %v1465, 0
        %v1472 = vsel %vm1061, %v1467, 0
        %1474 = vmatprep.subr.bf16.mxu0 0
        %1475 = vmatpush1.bf16.msra.mxu0 %v1472
        %1476 = vmatprep.subr.bf16.mxu0 0
        %1477 = vmatpush1.bf16.msra.mxu0 0
        %1478 = vmatprep.subr.bf16.mxu0 0
        %1479 = vmatpush1.bf16.msra.mxu0 0
        %1480 = vmatprep.subr.bf16.mxu0 0
        %1481 = vmatpush1.bf16.msra.mxu0 0
        %1482 = vmatprep.subr.bf16.mxu0 0
        %1483 = vmatpush1.bf16.msra.mxu0 0
        %1484 = vmatprep.subr.bf16.mxu0 0
        %1485 = vmatpush1.bf16.msra.mxu0 0
        %1486 = vmatprep.subr.bf16.mxu0 0
        %1487 = vmatpush1.bf16.msra.mxu0 0
        %1488 = vmatprep.subr.bf16.mxu0 0
        %1489 = vmatpush1.bf16.msra.mxu0 0
        %1490 = vmatprep.subr.bf16.mxu0 0
        %1491 = vmatpush1.bf16.msra.mxu0 0
        %1492 = vmatprep.subr.bf16.mxu0 0
        %1493 = vmatpush1.bf16.msra.mxu0 0
        %1494 = vmatprep.subr.bf16.mxu0 0
        %1495 = vmatpush1.bf16.msra.mxu0 0
        %1496 = vmatprep.subr.bf16.mxu0 0
        %1497 = vmatpush1.bf16.msra.mxu0 0
        %1498 = vmatprep.subr.bf16.mxu0 0
        %1499 = vmatpush1.bf16.msra.mxu0 0
        %1500 = vmatprep.subr.bf16.mxu0 0
        %1501 = vmatpush1.bf16.msra.mxu0 0
        %1502 = vmatprep.subr.bf16.mxu0 0
        %1503 = vmatpush1.bf16.msra.mxu0 0
        %1504 = vmatprep.subr.bf16.mxu0 0
        %1505 = vmatpush1.bf16.msra.mxu0 0
        %1506 = vmatprep.mubr.bf16.mxu0 0
        %1507 = vmatmul.mubr.bf16.gmra.mrb[0].mxu0 %v1469
        %v1508 = vpop.f32.mrb[0].mxu0
        %v1509 = vadd.f32 0.0, %v1508
        %v1510 = vpop.f32.mrb[0].mxu0
        %v1511 = vpop.f32.mrb[0].mxu0
        %v1512 = vpop.f32.mrb[0].mxu0
        %1513 = vdwg.mxu0
        %1515 = vrot.lane.b32.xlu0 %v1509, 24
        %v1516 = vpop.permute.xlu0 %1515
        %v1518 = vadd.f32 %v1464, %v1516
        %v1519 = vrcp.pop %v1458
        %1521 = vset.pattern.permute.xlu0 3
        %1522 = vperm.xlu0 %1521, %v1519
        %v1523 = vpop.permute.xlu0 %1522
        %v1525 = vmul.f32 %v1518, %v1523
        %v1526 = vsel %vm410, %v1112, %v1255
        %v1527 = vsel %vm947, %v1526, %v1390
        %v1528 = vsel %vm949, %v1527, %v1525
        %v1529 = vpack.c.bf16 %v1528, %v1528
        %vm1530 = vcmask 257024
        %1531 = vst.msk [vmem:[%s388] sm:$0xf] %vm1530, %v1529
      $region52: #{transformer_block_forward.7} parent=43 // pred_fallthru
        _
      %p1532 = scmp.lt.s32.totalorder %s22, 1
      %s1533 = scalar_select %p1532, %s22, 1
      %p1534 = scmp.lt.s32.totalorder %s23, 0
      %s1535 = scalar_select %p1534, %s23, 0
      %s1536 = sadd.s32 %s1535, %s1533
      %s1537 = smul.addr %s1536, 4
      %s1538 = scalar_lea.vmem %s6, %s1537
      // Predicated region
      $region53: #{transformer_block_forward.7} parent=43 // pred_check
        %p1539 = pneg %p218
      $region54: #{transformer_block_forward.7} parent=43 // pred_check_branch
        %1541 = sbr.rel (%p1539) target = $region56
      $region55: #{transformer_block_forward.7} parent=43 // pred_region
        _
      $region56: #{transformer_block_forward.7} parent=43 // pred_fallthru
        _
    $region44: #{transformer_block_forward.7} parent=5 // pred_fallthru
      _
    %p1542 = scmp.le.s32.totalorder 2, %s12
    // Predicated region
    $region57: #{transformer_block_forward.7} parent=5 // pred_check
      %p1543 = pneg %p1542
    $region58: #{transformer_block_forward.7} parent=5 // pred_check_branch
      %1545 = sbr.rel (%p1543) target = $region60
    $region59: #{transformer_block_forward.7} parent=5 // pred_region
      %s1546 = ssub.s32 %s12, 2
      // Predicated region
      $region61: #{transformer_block_forward.7} parent=59 // pred_check
        %p1547 = pneg %p224
      $region62: #{transformer_block_forward.7} parent=59 // pred_check_branch
        %1549 = sbr.rel (%p1547) target = $region64
      $region63: #{transformer_block_forward.7} parent=59 // pred_region
        %p1550 = scmp.lt.s32.totalorder %s25, 1
        %s1551 = scalar_select %p1550, %s25, 1
        %p1552 = scmp.lt.s32.totalorder %s26, 0
        %s1553 = scalar_select %p1552, %s26, 0
        %s1554 = sadd.s32 %s1553, %s1551
        %s1555 = smul.addr %s1554, 4
        %s1556 = scalar_lea.vmem %s6, %s1555
      $region64: #{transformer_block_forward.7} parent=59 // pred_fallthru
        _
    $region60: #{transformer_block_forward.7} parent=5 // pred_fallthru
      _
  $region6: #{transformer_block_forward.7} parent=0 // loop_footer
    %s16 = sadd.s32 1, %s12
  $region7: #{transformer_block_forward.7} parent=0 // loop_footer_branch
    %11 = sbr.rel target = $region3
  $region8: #{transformer_block_forward.7} parent=0 // loop_exit
    _

</llo_original>
